<compile_context>
chip_gen: v5e
topology: v5e:2x2
jax: 0.10.0
libtpu: 0.0.40
codegen_flags: <defaults>
</compile_context>

<pallas_src>
import jax
import jax.numpy as jnp
from jax.experimental import pallas as pl
from jax.experimental.pallas import tpu as pltpu

LN_EPS = 1e-5            # torch.nn.LayerNorm default
HIDDEN = (256, 256, 128)
OUT_PAD = 128            # lane-dense output width (action_dim=4 padded to 128)
VEC_W = 256              # packed bias/LN slab width


# ---------------------------------------------------------------------------
# Pallas kernel: whole MLP fused for one batch tile.
#   vec_ref rows: 0..2  -> b1, g1, be1   (width 256)
#                 3..5  -> b2, g2, be2   (width 256)
#                 6..8  -> b3, g3, be3   (first 128 cols valid)
#                 9     -> bp            (first 128 cols valid, zero-padded)
# ---------------------------------------------------------------------------
def _policy_mlp_kernel(x_ref, w1_ref, w2_ref, w3_ref, wp_ref, vec_ref, o_ref):
    def ln_relu(h, g, b):
        # One-pass LayerNorm, all elementwise math in f32 (VPU), rsqrt on EUP.
        mu = jnp.mean(h, axis=-1, keepdims=True)
        msq = jnp.mean(h * h, axis=-1, keepdims=True)
        var = msq - mu * mu
        hn = (h - mu) * jax.lax.rsqrt(var + LN_EPS)
        return jnp.maximum(hn * g + b, 0.0)  # ReLU; Dropout is identity in eval.

    x = x_ref[...].astype(jnp.bfloat16)

    # Layer 1: 64 -> 256
    h = jnp.dot(x, w1_ref[...], preferred_element_type=jnp.float32)
    h = ln_relu(h + vec_ref[0:1, :], vec_ref[1:2, :], vec_ref[2:3, :])

    # Layer 2: 256 -> 256
    h = jnp.dot(h.astype(jnp.bfloat16), w2_ref[...],
                preferred_element_type=jnp.float32)
    h = ln_relu(h + vec_ref[3:4, :], vec_ref[4:5, :], vec_ref[5:6, :])

    # Layer 3: 256 -> 128
    h = jnp.dot(h.astype(jnp.bfloat16), w3_ref[...],
                preferred_element_type=jnp.float32)
    h = ln_relu(h + vec_ref[6:7, :128], vec_ref[7:8, :128], vec_ref[8:9, :128])

    # Policy head: 128 -> 128 (padded; tiny, kept in f32 for accuracy).
    logits = jnp.dot(h, wp_ref[...], preferred_element_type=jnp.float32)
    o_ref[...] = (logits + vec_ref[9:10, :128]).astype(o_ref.dtype)


# ---------------------------------------------------------------------------
# Parameter packing for the kernel.
# ---------------------------------------------------------------------------
def _pad_row(v, width=VEC_W):
    v = jnp.ravel(v).astype(jnp.float32)
    return jnp.pad(v, (0, width - v.shape[0]))


def pack_params(params):
    rows = []
    for i in (1, 2, 3):
        rows += [_pad_row(params[f"b{i}"]),
                 _pad_row(params[f"g{i}"]),
                 _pad_row(params[f"be{i}"])]
    rows.append(_pad_row(params["bp"]))
    vec = jnp.stack(rows, axis=0)                                   # (10, 256) f32

    wp = params["wp"].astype(jnp.float32)                           # (128, action_dim)
    wp_pad = jnp.pad(wp, ((0, 0), (0, OUT_PAD - wp.shape[1])))      # (128, 128)

    return dict(
        w1=params["w1"].astype(jnp.bfloat16),
        w2=params["w2"].astype(jnp.bfloat16),
        w3=params["w3"].astype(jnp.bfloat16),
        wp=wp_pad,
        vec=vec,
        action_dim=int(params["wp"].shape[1]),
    )


# ---------------------------------------------------------------------------
# Wrapper: batch-tiled pallas_call.
# ---------------------------------------------------------------------------
def discrete_policy_forward(state, params, tile_b=256):
    """state: [B, state_dim] float32 -> logits [B, action_dim] float32."""
    packed = pack_params(params)
    batch, state_dim = state.shape
    action_dim = packed["action_dim"]

    # Pad batch to a multiple of the tile (padded rows are discarded afterwards).
    n_tiles = pl.cdiv(batch, tile_b)
    padded_b = n_tiles * tile_b
    if padded_b != batch:
        state = jnp.pad(state, ((0, padded_b - batch), (0, 0)))

    const = lambda i: (0, 0)  # weight blocks stay resident across the grid
    out_padded = pl.pallas_call(
        _policy_mlp_kernel,
        out_shape=jax.ShapeDtypeStruct((padded_b, OUT_PAD), jnp.float32),
        grid=(n_tiles,),
        in_specs=[
            pl.BlockSpec((tile_b, state_dim), lambda i: (i, 0)),
            pl.BlockSpec(packed["w1"].shape, const),
            pl.BlockSpec(packed["w2"].shape, const),
            pl.BlockSpec(packed["w3"].shape, const),
            pl.BlockSpec(packed["wp"].shape, const),
            pl.BlockSpec(packed["vec"].shape, const),
        ],
        out_specs=pl.BlockSpec((tile_b, OUT_PAD), lambda i: (i, 0)),
        compiler_params=pltpu.CompilerParams(
            dimension_semantics=("parallel",),
            vmem_limit_bytes=32 * 1024 * 1024,  # safe on v5e/v6e/v7x (64 MiB/TC)
        ),
    )(state, packed["w1"], packed["w2"], packed["w3"],
      packed["wp"], packed["vec"])

    return out_padded[:batch, :action_dim]


# ---------------------------------------------------------------------------
# Deterministic parameter init (mirrors DiscretePolicyNetwork._initialize_parameters):
# orthogonal weights (gain=1.0 hidden, gain=0.01 policy head), zero biases,
# LayerNorm gamma=1 / beta=0.
# ---------------------------------------------------------------------------
def _orthogonal(key, out_dim, in_dim, gain=1.0):
    n = max(out_dim, in_dim)
    a = jax.random.normal(key, (n, n), dtype=jnp.float32)
    q, r = jnp.linalg.qr(a)
    q = q * jnp.sign(jnp.diagonal(r))[None, :]
    w_torch = gain * q[:out_dim, :in_dim]      # torch layout: [out, in]
    return w_torch.T.astype(jnp.float32)       # kernel layout: [in, out]


def make_params(key, state_dim=64, hidden_dims=HIDDEN, action_dim=4):
    keys = jax.random.split(key, 4)
    dims = [state_dim, *hidden_dims]
    params = {}
    for i, (din, dout) in enumerate(zip(dims[:-1], dims[1:]), start=1):
        params[f"w{i}"] = _orthogonal(keys[i - 1], dout, din, gain=1.0)
        params[f"b{i}"] = jnp.zeros((dout,), jnp.float32)
        params[f"g{i}"] = jnp.ones((dout,), jnp.float32)    # LayerNorm weight
        params[f"be{i}"] = jnp.zeros((dout,), jnp.float32)  # LayerNorm bias
    params["wp"] = _orthogonal(keys[3], action_dim, dims[-1], gain=0.01)
    params["bp"] = jnp.zeros((action_dim,), jnp.float32)
    return params


# Pure-JAX reference with identical casting (bf16 hidden matmuls, f32 LN/head).
def _reference_forward(state, params):
    def ln_relu(h, g, b):
        mu = jnp.mean(h, axis=-1, keepdims=True)
        var = jnp.mean(h * h, axis=-1, keepdims=True) - mu * mu
        return jnp.maximum((h - mu) * jax.lax.rsqrt(var + LN_EPS) * g + b, 0.0)

    h = state
    for i in (1, 2, 3):
        w = params[f"w{i}"].astype(jnp.bfloat16)
        h = jnp.dot(h.astype(jnp.bfloat16), w,
                    preferred_element_type=jnp.float32) + params[f"b{i}"]
        h = ln_relu(h, params[f"g{i}"], params[f"be{i}"])
    return jnp.dot(h, params["wp"],
                   preferred_element_type=jnp.float32) + params["bp"]


if __name__ == "__main__":
    key = jax.random.PRNGKey(0)
    k_param, k_state = jax.random.split(key)

    STATE_DIM, HIDDEN_DIMS, ACTION_DIM, BATCH = 64, HIDDEN, 4, 2

    params = make_params(k_param, STATE_DIM, HIDDEN_DIMS, ACTION_DIM)
    state = jax.random.normal(k_state, (BATCH, STATE_DIM), dtype=jnp.float32)

    logits = discrete_policy_forward(state, params)
    jax.block_until_ready(logits)

    ref = _reference_forward(state, params)
    assert logits.shape == (BATCH, ACTION_DIM)
    assert jnp.allclose(logits, ref, atol=2e-3, rtol=2e-3), "mismatch vs reference"

    print("KERNEL_OK")
</pallas_src>

<mosaic_0001>
module attributes {stable_mosaic.version = 11 : i64} {
  func.func @_policy_mlp_kernel(%arg0: i32, %arg1: memref<256x64xf32, #tpu.memory_space<vmem>>, %arg2: memref<64x256xbf16, #tpu.memory_space<vmem>>, %arg3: memref<256x256xbf16, #tpu.memory_space<vmem>>, %arg4: memref<256x128xbf16, #tpu.memory_space<vmem>>, %arg5: memref<128x128xf32, #tpu.memory_space<vmem>>, %arg6: memref<10x256xf32, #tpu.memory_space<vmem>>, %arg7: memref<256x128xf32, #tpu.memory_space<vmem>>) attributes {dimension_semantics = [#tpu.dimension_semantics<parallel>], iteration_bounds = array<i64: 1>, scalar_prefetch = 0 : i64, scratch_operands = 0 : i64, tpu.core_type = #tpu.core_type<tc>, window_params = [{transform_indices = @transform_0, window_bounds = array<i64: 256, 64>}, {pipeline_mode = #tpu.pipeline_mode<synchronous>, transform_indices = @transform_1, window_bounds = array<i64: 64, 256>}, {pipeline_mode = #tpu.pipeline_mode<synchronous>, transform_indices = @transform_2, window_bounds = array<i64: 256, 256>}, {pipeline_mode = #tpu.pipeline_mode<synchronous>, transform_indices = @transform_3, window_bounds = array<i64: 256, 128>}, {pipeline_mode = #tpu.pipeline_mode<synchronous>, transform_indices = @transform_4, window_bounds = array<i64: 128, 128>}, {pipeline_mode = #tpu.pipeline_mode<synchronous>, transform_indices = @transform_5, window_bounds = array<i64: 10, 256>}, {transform_indices = @transform_6, window_bounds = array<i64: 256, 128>}]} {
    %c0 = arith.constant 0 : index
    %c0_0 = arith.constant 0 : index
    %0 = vector.load %arg1[%c0, %c0_0] : memref<256x64xf32, #tpu.memory_space<vmem>>, vector<256x64xf32>
    %1 = arith.truncf %0 : vector<256x64xf32> to vector<256x64xbf16>
    %c0_1 = arith.constant 0 : index
    %c0_2 = arith.constant 0 : index
    %2 = vector.load %arg2[%c0_1, %c0_2] : memref<64x256xbf16, #tpu.memory_space<vmem>>, vector<64x256xbf16>
    %cst = arith.constant dense<0.000000e+00> : vector<256x256xf32>
    %3 = tpu.matmul %1, %2, %cst {dimension_numbers = #tpu.dot_dimension_numbers<[1], [0], [0], [1], [0, 0, 1, 1], [], []>} : vector<256x64xbf16>, vector<64x256xbf16>, vector<256x256xf32> -> vector<256x256xf32>
    %c0_3 = arith.constant 0 : index
    %c0_4 = arith.constant 0 : index
    %4 = vector.load %arg6[%c0_3, %c0_4] : memref<10x256xf32, #tpu.memory_space<vmem>>, vector<1x256xf32>
    %5 = vector.broadcast %4 : vector<1x256xf32> to vector<256x256xf32>
    %6 = arith.addf %3, %5 : vector<256x256xf32>
    %c1 = arith.constant 1 : index
    %c0_5 = arith.constant 0 : index
    %7 = vector.load %arg6[%c1, %c0_5] : memref<10x256xf32, #tpu.memory_space<vmem>>, vector<1x256xf32>
    %c2 = arith.constant 2 : index
    %c0_6 = arith.constant 0 : index
    %8 = vector.load %arg6[%c2, %c0_6] : memref<10x256xf32, #tpu.memory_space<vmem>>, vector<1x256xf32>
    %cst_7 = arith.constant dense<0.000000e+00> : vector<256xf32>
    %9 = vector.multi_reduction <add>, %6, %cst_7 [1] : vector<256x256xf32> to vector<256xf32>
    %10 = vector.shape_cast %9 : vector<256xf32> to vector<256x1xf32>
    %cst_8 = arith.constant 2.560000e+02 : f32
    %11 = vector.broadcast %cst_8 : f32 to vector<256x1xf32>
    %12 = arith.divf %10, %11 : vector<256x1xf32>
    %13 = arith.mulf %6, %6 : vector<256x256xf32>
    %cst_9 = arith.constant dense<0.000000e+00> : vector<256xf32>
    %14 = vector.multi_reduction <add>, %13, %cst_9 [1] : vector<256x256xf32> to vector<256xf32>
    %15 = vector.shape_cast %14 : vector<256xf32> to vector<256x1xf32>
    %cst_10 = arith.constant 2.560000e+02 : f32
    %16 = vector.broadcast %cst_10 : f32 to vector<256x1xf32>
    %17 = arith.divf %15, %16 : vector<256x1xf32>
    %18 = arith.mulf %12, %12 : vector<256x1xf32>
    %19 = arith.subf %17, %18 : vector<256x1xf32>
    %20 = vector.broadcast %12 : vector<256x1xf32> to vector<256x256xf32>
    %21 = arith.subf %6, %20 : vector<256x256xf32>
    %cst_11 = arith.constant 9.99999974E-6 : f32
    %22 = vector.broadcast %cst_11 : f32 to vector<256x1xf32>
    %23 = arith.addf %19, %22 : vector<256x1xf32>
    %24 = math.rsqrt %23 : vector<256x1xf32>
    %25 = vector.broadcast %24 : vector<256x1xf32> to vector<256x256xf32>
    %26 = arith.mulf %21, %25 : vector<256x256xf32>
    %27 = vector.broadcast %7 : vector<1x256xf32> to vector<256x256xf32>
    %28 = arith.mulf %26, %27 : vector<256x256xf32>
    %29 = vector.broadcast %8 : vector<1x256xf32> to vector<256x256xf32>
    %30 = arith.addf %28, %29 : vector<256x256xf32>
    %cst_12 = arith.constant 0.000000e+00 : f32
    %31 = vector.broadcast %cst_12 : f32 to vector<256x256xf32>
    %32 = arith.maximumf %30, %31 : vector<256x256xf32>
    %33 = arith.truncf %32 : vector<256x256xf32> to vector<256x256xbf16>
    %c0_13 = arith.constant 0 : index
    %c0_14 = arith.constant 0 : index
    %34 = vector.load %arg3[%c0_13, %c0_14] : memref<256x256xbf16, #tpu.memory_space<vmem>>, vector<256x256xbf16>
    %cst_15 = arith.constant dense<0.000000e+00> : vector<256x256xf32>
    %35 = tpu.matmul %33, %34, %cst_15 {dimension_numbers = #tpu.dot_dimension_numbers<[1], [0], [0], [1], [0, 0, 1, 1], [], []>} : vector<256x256xbf16>, vector<256x256xbf16>, vector<256x256xf32> -> vector<256x256xf32>
    %c3 = arith.constant 3 : index
    %c0_16 = arith.constant 0 : index
    %36 = vector.load %arg6[%c3, %c0_16] : memref<10x256xf32, #tpu.memory_space<vmem>>, vector<1x256xf32>
    %37 = vector.broadcast %36 : vector<1x256xf32> to vector<256x256xf32>
    %38 = arith.addf %35, %37 : vector<256x256xf32>
    %c4 = arith.constant 4 : index
    %c0_17 = arith.constant 0 : index
    %39 = vector.load %arg6[%c4, %c0_17] : memref<10x256xf32, #tpu.memory_space<vmem>>, vector<1x256xf32>
    %c5 = arith.constant 5 : index
    %c0_18 = arith.constant 0 : index
    %40 = vector.load %arg6[%c5, %c0_18] : memref<10x256xf32, #tpu.memory_space<vmem>>, vector<1x256xf32>
    %cst_19 = arith.constant dense<0.000000e+00> : vector<256xf32>
    %41 = vector.multi_reduction <add>, %38, %cst_19 [1] : vector<256x256xf32> to vector<256xf32>
    %42 = vector.shape_cast %41 : vector<256xf32> to vector<256x1xf32>
    %cst_20 = arith.constant 2.560000e+02 : f32
    %43 = vector.broadcast %cst_20 : f32 to vector<256x1xf32>
    %44 = arith.divf %42, %43 : vector<256x1xf32>
    %45 = arith.mulf %38, %38 : vector<256x256xf32>
    %cst_21 = arith.constant dense<0.000000e+00> : vector<256xf32>
    %46 = vector.multi_reduction <add>, %45, %cst_21 [1] : vector<256x256xf32> to vector<256xf32>
    %47 = vector.shape_cast %46 : vector<256xf32> to vector<256x1xf32>
    %cst_22 = arith.constant 2.560000e+02 : f32
    %48 = vector.broadcast %cst_22 : f32 to vector<256x1xf32>
    %49 = arith.divf %47, %48 : vector<256x1xf32>
    %50 = arith.mulf %44, %44 : vector<256x1xf32>
    %51 = arith.subf %49, %50 : vector<256x1xf32>
    %52 = vector.broadcast %44 : vector<256x1xf32> to vector<256x256xf32>
    %53 = arith.subf %38, %52 : vector<256x256xf32>
    %cst_23 = arith.constant 9.99999974E-6 : f32
    %54 = vector.broadcast %cst_23 : f32 to vector<256x1xf32>
    %55 = arith.addf %51, %54 : vector<256x1xf32>
    %56 = math.rsqrt %55 : vector<256x1xf32>
    %57 = vector.broadcast %56 : vector<256x1xf32> to vector<256x256xf32>
    %58 = arith.mulf %53, %57 : vector<256x256xf32>
    %59 = vector.broadcast %39 : vector<1x256xf32> to vector<256x256xf32>
    %60 = arith.mulf %58, %59 : vector<256x256xf32>
    %61 = vector.broadcast %40 : vector<1x256xf32> to vector<256x256xf32>
    %62 = arith.addf %60, %61 : vector<256x256xf32>
    %cst_24 = arith.constant 0.000000e+00 : f32
    %63 = vector.broadcast %cst_24 : f32 to vector<256x256xf32>
    %64 = arith.maximumf %62, %63 : vector<256x256xf32>
    %65 = arith.truncf %64 : vector<256x256xf32> to vector<256x256xbf16>
    %c0_25 = arith.constant 0 : index
    %c0_26 = arith.constant 0 : index
    %66 = vector.load %arg4[%c0_25, %c0_26] : memref<256x128xbf16, #tpu.memory_space<vmem>>, vector<256x128xbf16>
    %cst_27 = arith.constant dense<0.000000e+00> : vector<256x128xf32>
    %67 = tpu.matmul %65, %66, %cst_27 {dimension_numbers = #tpu.dot_dimension_numbers<[1], [0], [0], [1], [0, 0, 1, 1], [], []>} : vector<256x256xbf16>, vector<256x128xbf16>, vector<256x128xf32> -> vector<256x128xf32>
    %c6 = arith.constant 6 : index
    %c0_28 = arith.constant 0 : index
    %68 = vector.load %arg6[%c6, %c0_28] : memref<10x256xf32, #tpu.memory_space<vmem>>, vector<1x128xf32>
    %69 = vector.broadcast %68 : vector<1x128xf32> to vector<256x128xf32>
    %70 = arith.addf %67, %69 : vector<256x128xf32>
    %c7 = arith.constant 7 : index
    %c0_29 = arith.constant 0 : index
    %71 = vector.load %arg6[%c7, %c0_29] : memref<10x256xf32, #tpu.memory_space<vmem>>, vector<1x128xf32>
    %c8 = arith.constant 8 : index
    %c0_30 = arith.constant 0 : index
    %72 = vector.load %arg6[%c8, %c0_30] : memref<10x256xf32, #tpu.memory_space<vmem>>, vector<1x128xf32>
    %cst_31 = arith.constant dense<0.000000e+00> : vector<256xf32>
    %73 = vector.multi_reduction <add>, %70, %cst_31 [1] : vector<256x128xf32> to vector<256xf32>
    %74 = vector.shape_cast %73 : vector<256xf32> to vector<256x1xf32>
    %cst_32 = arith.constant 1.280000e+02 : f32
    %75 = vector.broadcast %cst_32 : f32 to vector<256x1xf32>
    %76 = arith.divf %74, %75 : vector<256x1xf32>
    %77 = arith.mulf %70, %70 : vector<256x128xf32>
    %cst_33 = arith.constant dense<0.000000e+00> : vector<256xf32>
    %78 = vector.multi_reduction <add>, %77, %cst_33 [1] : vector<256x128xf32> to vector<256xf32>
    %79 = vector.shape_cast %78 : vector<256xf32> to vector<256x1xf32>
    %cst_34 = arith.constant 1.280000e+02 : f32
    %80 = vector.broadcast %cst_34 : f32 to vector<256x1xf32>
    %81 = arith.divf %79, %80 : vector<256x1xf32>
    %82 = arith.mulf %76, %76 : vector<256x1xf32>
    %83 = arith.subf %81, %82 : vector<256x1xf32>
    %84 = vector.broadcast %76 : vector<256x1xf32> to vector<256x128xf32>
    %85 = arith.subf %70, %84 : vector<256x128xf32>
    %cst_35 = arith.constant 9.99999974E-6 : f32
    %86 = vector.broadcast %cst_35 : f32 to vector<256x1xf32>
    %87 = arith.addf %83, %86 : vector<256x1xf32>
    %88 = math.rsqrt %87 : vector<256x1xf32>
    %89 = vector.broadcast %88 : vector<256x1xf32> to vector<256x128xf32>
    %90 = arith.mulf %85, %89 : vector<256x128xf32>
    %91 = vector.broadcast %71 : vector<1x128xf32> to vector<256x128xf32>
    %92 = arith.mulf %90, %91 : vector<256x128xf32>
    %93 = vector.broadcast %72 : vector<1x128xf32> to vector<256x128xf32>
    %94 = arith.addf %92, %93 : vector<256x128xf32>
    %cst_36 = arith.constant 0.000000e+00 : f32
    %95 = vector.broadcast %cst_36 : f32 to vector<256x128xf32>
    %96 = arith.maximumf %94, %95 : vector<256x128xf32>
    %c0_37 = arith.constant 0 : index
    %c0_38 = arith.constant 0 : index
    %97 = vector.load %arg5[%c0_37, %c0_38] : memref<128x128xf32, #tpu.memory_space<vmem>>, vector<128x128xf32>
    %cst_39 = arith.constant dense<0.000000e+00> : vector<256x128xf32>
    %98 = tpu.matmul %96, %97, %cst_39 {dimension_numbers = #tpu.dot_dimension_numbers<[1], [0], [0], [1], [0, 0, 1, 1], [], []>} : vector<256x128xf32>, vector<128x128xf32>, vector<256x128xf32> -> vector<256x128xf32>
    %c9 = arith.constant 9 : index
    %c0_40 = arith.constant 0 : index
    %99 = vector.load %arg6[%c9, %c0_40] : memref<10x256xf32, #tpu.memory_space<vmem>>, vector<1x128xf32>
    %100 = vector.broadcast %99 : vector<1x128xf32> to vector<256x128xf32>
    %101 = arith.addf %98, %100 : vector<256x128xf32>
    %c0_41 = arith.constant 0 : index
    %c0_42 = arith.constant 0 : index
    %102 = vector.load %arg7[%c0_41, %c0_42] : memref<256x128xf32, #tpu.memory_space<vmem>>, vector<256x128xf32>
    tpu.vector_store %arg7[%c0_41, %c0_42], %101 {strides = array<i32>} : memref<256x128xf32, #tpu.memory_space<vmem>>, vector<256x128xf32>,
    return
  }
  func.func @transform_0(%arg0: i32) -> (i32, i32) {
    %c0_i32 = arith.constant 0 : i32
    %c0_i32_0 = arith.constant 0 : i32
    return %arg0, %c0_i32 : i32, i32
  }
  func.func @transform_1(%arg0: i32) -> (i32, i32) {
    %c0_i32 = arith.constant 0 : i32
    %c0_i32_0 = arith.constant 0 : i32
    %c0_i32_1 = arith.constant 0 : i32
    return %c0_i32, %c0_i32_0 : i32, i32
  }
  func.func @transform_2(%arg0: i32) -> (i32, i32) {
    %c0_i32 = arith.constant 0 : i32
    %c0_i32_0 = arith.constant 0 : i32
    %c0_i32_1 = arith.constant 0 : i32
    return %c0_i32, %c0_i32_0 : i32, i32
  }
  func.func @transform_3(%arg0: i32) -> (i32, i32) {
    %c0_i32 = arith.constant 0 : i32
    %c0_i32_0 = arith.constant 0 : i32
    %c0_i32_1 = arith.constant 0 : i32
    return %c0_i32, %c0_i32_0 : i32, i32
  }
  func.func @transform_4(%arg0: i32) -> (i32, i32) {
    %c0_i32 = arith.constant 0 : i32
    %c0_i32_0 = arith.constant 0 : i32
    %c0_i32_1 = arith.constant 0 : i32
    return %c0_i32, %c0_i32_0 : i32, i32
  }
  func.func @transform_5(%arg0: i32) -> (i32, i32) {
    %c0_i32 = arith.constant 0 : i32
    %c0_i32_0 = arith.constant 0 : i32
    %c0_i32_1 = arith.constant 0 : i32
    return %c0_i32, %c0_i32_0 : i32, i32
  }
  func.func @transform_6(%arg0: i32) -> (i32, i32) {
    %c0_i32 = arith.constant 0 : i32
    %c0_i32_0 = arith.constant 0 : i32
    return %arg0, %c0_i32 : i32, i32
  }
}

</mosaic_0001>

<llo_original>
// kernel: tpu_custom_call.1
$region0: #{tpu_custom_call.1}
  #allocation0 [shape = 'u32[]', space=smem, size = 0x4, offset = 0x4, fixed_abs, tag = 'smem constant byte address 0x4 - core index']
  #allocation1 [shape = 'u32[72,128]{1,0:T(1,128)}', space=vmem, size = 0x9000, scoped, tag = 'internal scratch']
  %s0 = inlined_call_operand.vmem [shape: f32[256,64], index: 0, kind: input, shape index: {}]
  %s1 = inlined_call_operand.hbm [shape: bf16[64,256], index: 1, kind: input, shape index: {}]
  %s2 = inlined_call_operand.vmem [shape: bf16[256,256], index: 2, kind: input, shape index: {}]
  %s3 = inlined_call_operand.vmem [shape: bf16[256,128], index: 3, kind: input, shape index: {}]
  %s4 = inlined_call_operand.hbm [shape: f32[128,128], index: 4, kind: input, shape index: {}]
  %s5 = inlined_call_operand.hbm [shape: f32[10,256], index: 5, kind: input, shape index: {}]
  %s6 = inlined_call_operand.hbm [shape: f32[256,128], index: 6, kind: output, shape index: {}]
  %s7 = sld [smem:[#allocation0]]
  $region46: #{tpu_custom_call.1} parent=0
    _
  %s9 = ssub.s32 1, %s7
  %s10 = scalar_select 0, %s9, %s7
  $region1: #{tpu_custom_call.1} parent=0
    #allocation2 [shape = 'u8[32768]{0}', space=vmem, size = 0x8000, scoped, tag = 'input window, operand 1, single buffered']
    #allocation3 [shape = 's32[1]{0}', space=sflag, size = 0x4, scoped, tag = 'scoped memory for tpu_custom_call.1']
    #allocation4 [shape = 's32[1]{0}', space=sflag, size = 0x4, scoped, tag = 'scoped memory for tpu_custom_call.1']
    #allocation5 [shape = 'u8[65536]{0}', space=vmem, size = 0x10000, scoped, tag = 'input window, operand 4, single buffered']
    #allocation6 [shape = 's32[1]{0}', space=sflag, size = 0x4, scoped, tag = 'scoped memory for tpu_custom_call.1']
    #allocation7 [shape = 'u8[16384]{0}', space=vmem, size = 0x4000, scoped, tag = 'input window, operand 5, single buffered']
    #allocation8 [shape = 'u8[131072]{0}', space=vmem, size = 0x20000, scoped, tag = 'output window, operand 0, single buffered']
    %11 = vsyncpa [#allocation3], 0
    %12 = vsyncpa [#allocation6], 0
    %13 = vsyncpa [#allocation4], 0
    // Predicated region
    $region2: #{tpu_custom_call.1} parent=1 // pred_check
      _
    $region3: #{tpu_custom_call.1} parent=1 // pred_check_branch
      %15 = sbr.rel (0) target = $region5
    $region4: #{tpu_custom_call.1} parent=1 // pred_region
      _
    $region5: #{tpu_custom_call.1} parent=1 // pred_fallthru
      _
    // Predicated region
    $region6: #{tpu_custom_call.1} parent=1 // pred_check
      _
    $region7: #{tpu_custom_call.1} parent=1 // pred_check_branch
      %17 = sbr.rel (0) target = $region9
    $region8: #{tpu_custom_call.1} parent=1 // pred_region
      %19 = vsyncadd [#allocation3], 0
      %s20 = sshll.u32 %s1, 4
      %s21 = int_to_ptr.hbm [resolvable:$true] %s20
      %s22 = sshll.u32 [#allocation2], 4
      %s23 = int_to_ptr.vmem [resolvable:$true] %s22
      %28 = dma.hbm_to_vmem [thread:$0]  %s21, 1024, %s23, [#allocation3], 128, 128, 8
    $region9: #{tpu_custom_call.1} parent=1 // pred_fallthru
      _
    // Predicated region
    $region10: #{tpu_custom_call.1} parent=1 // pred_check
      _
    $region11: #{tpu_custom_call.1} parent=1 // pred_check_branch
      %30 = sbr.rel (0) target = $region13
    $region12: #{tpu_custom_call.1} parent=1 // pred_region
      _
    $region13: #{tpu_custom_call.1} parent=1 // pred_fallthru
      _
    // Predicated region
    $region14: #{tpu_custom_call.1} parent=1 // pred_check
      _
    $region15: #{tpu_custom_call.1} parent=1 // pred_check_branch
      %32 = sbr.rel (0) target = $region17
    $region16: #{tpu_custom_call.1} parent=1 // pred_region
      _
    $region17: #{tpu_custom_call.1} parent=1 // pred_fallthru
      _
    // Predicated region
    $region18: #{tpu_custom_call.1} parent=1 // pred_check
      _
    $region19: #{tpu_custom_call.1} parent=1 // pred_check_branch
      %34 = sbr.rel (0) target = $region21
    $region20: #{tpu_custom_call.1} parent=1 // pred_region
      %36 = vsyncadd [#allocation6], 0
      %s37 = sshll.u32 %s4, 4
      %s38 = int_to_ptr.hbm [resolvable:$true] %s37
      %s39 = sshll.u32 [#allocation5], 4
      %s40 = int_to_ptr.vmem [resolvable:$true] %s39
      %45 = dma.hbm_to_vmem [thread:$0]  %s38, 2048, %s40, [#allocation6], 128, 128, 8
    $region21: #{tpu_custom_call.1} parent=1 // pred_fallthru
      _
    // Predicated region
    $region22: #{tpu_custom_call.1} parent=1 // pred_check
      _
    $region23: #{tpu_custom_call.1} parent=1 // pred_check_branch
      %47 = sbr.rel (0) target = $region25
    $region24: #{tpu_custom_call.1} parent=1 // pred_region
      %49 = vsyncadd [#allocation6], 0
      %s50 = sshll.u32 %s5, 4
      %s51 = int_to_ptr.hbm [resolvable:$true] %s50
      %s52 = sshll.u32 [#allocation7], 4
      %s53 = int_to_ptr.vmem [resolvable:$true] %s52
      %58 = dma.hbm_to_vmem [thread:$0]  %s51, 512, %s53, [#allocation6], 256, 256, 16
    $region25: #{tpu_custom_call.1} parent=1 // pred_fallthru
      _
    // Predicated region
    $region26: #{tpu_custom_call.1} parent=1 // pred_check
      _
    $region27: #{tpu_custom_call.1} parent=1 // pred_check_branch
      %60 = sbr.rel (0) target = $region29
    $region28: #{tpu_custom_call.1} parent=1 // pred_region
      %62 = dma.done [#allocation3], 1024
    $region29: #{tpu_custom_call.1} parent=1 // pred_fallthru
      _
    // Predicated region
    $region30: #{tpu_custom_call.1} parent=1 // pred_check
      _
    $region31: #{tpu_custom_call.1} parent=1 // pred_check_branch
      %64 = sbr.rel (0) target = $region33
    $region32: #{tpu_custom_call.1} parent=1 // pred_region
      %66 = dma.done [#allocation6], 2048
    $region33: #{tpu_custom_call.1} parent=1 // pred_fallthru
      _
    // Predicated region
    $region34: #{tpu_custom_call.1} parent=1 // pred_check
      _
    $region35: #{tpu_custom_call.1} parent=1 // pred_check_branch
      %68 = sbr.rel (0) target = $region37
    $region36: #{tpu_custom_call.1} parent=1 // pred_region
      %70 = dma.done [#allocation6], 512
    $region37: #{tpu_custom_call.1} parent=1 // pred_fallthru
      _
    %v72 = vld [vmem:[%s0] sm:$0xff]
    %v73 = vld [vmem:[%s0 + $0x8] sm:$0xff]
    %v74 = vld [vmem:[%s0 + $0x10] sm:$0xff]
    %v75 = vld [vmem:[%s0 + $0x18] sm:$0xff]
    %v76 = vld [vmem:[%s0 + $0x20] sm:$0xff]
    %v77 = vld [vmem:[%s0 + $0x28] sm:$0xff]
    %v78 = vld [vmem:[%s0 + $0x30] sm:$0xff]
    %v79 = vld [vmem:[%s0 + $0x38] sm:$0xff]
    %v80 = vld [vmem:[%s0 + $0x40] sm:$0xff]
    %v81 = vld [vmem:[%s0 + $0x48] sm:$0xff]
    %v82 = vld [vmem:[%s0 + $0x50] sm:$0xff]
    %v83 = vld [vmem:[%s0 + $0x58] sm:$0xff]
    %v84 = vld [vmem:[%s0 + $0x60] sm:$0xff]
    %v85 = vld [vmem:[%s0 + $0x68] sm:$0xff]
    %v86 = vld [vmem:[%s0 + $0x70] sm:$0xff]
    %v87 = vld [vmem:[%s0 + $0x78] sm:$0xff]
    %v88 = vld [vmem:[%s0 + $0x80] sm:$0xff]
    %v89 = vld [vmem:[%s0 + $0x88] sm:$0xff]
    %v90 = vld [vmem:[%s0 + $0x90] sm:$0xff]
    %v91 = vld [vmem:[%s0 + $0x98] sm:$0xff]
    %v92 = vld [vmem:[%s0 + $0xa0] sm:$0xff]
    %v93 = vld [vmem:[%s0 + $0xa8] sm:$0xff]
    %v94 = vld [vmem:[%s0 + $0xb0] sm:$0xff]
    %v95 = vld [vmem:[%s0 + $0xb8] sm:$0xff]
    %v96 = vld [vmem:[%s0 + $0xc0] sm:$0xff]
    %v97 = vld [vmem:[%s0 + $0xc8] sm:$0xff]
    %v98 = vld [vmem:[%s0 + $0xd0] sm:$0xff]
    %v99 = vld [vmem:[%s0 + $0xd8] sm:$0xff]
    %v100 = vld [vmem:[%s0 + $0xe0] sm:$0xff]
    %v101 = vld [vmem:[%s0 + $0xe8] sm:$0xff]
    %v102 = vld [vmem:[%s0 + $0xf0] sm:$0xff]
    %v103 = vld [vmem:[%s0 + $0xf8] sm:$0xff]
    %v104 = vpack.c.bf16 %v73, %v72
    %v105 = vpack.c.bf16 %v75, %v74
    %v106 = vpack.c.bf16 %v77, %v76
    %v107 = vpack.c.bf16 %v79, %v78
    %v108 = vpack.c.bf16 %v81, %v80
    %v109 = vpack.c.bf16 %v83, %v82
    %v110 = vpack.c.bf16 %v85, %v84
    %v111 = vpack.c.bf16 %v87, %v86
    %v112 = vpack.c.bf16 %v89, %v88
    %v113 = vpack.c.bf16 %v91, %v90
    %v114 = vpack.c.bf16 %v93, %v92
    %v115 = vpack.c.bf16 %v95, %v94
    %v116 = vpack.c.bf16 %v97, %v96
    %v117 = vpack.c.bf16 %v99, %v98
    %v118 = vpack.c.bf16 %v101, %v100
    %v119 = vpack.c.bf16 %v103, %v102
    %v120 = vld [vmem:[#allocation2] sm:$0xff]
    %v121 = vld [vmem:[#allocation2 + $0x8] sm:$0xff]
    %v122 = vld [vmem:[#allocation2 + $0x10] sm:$0xff]
    %v123 = vld [vmem:[#allocation2 + $0x18] sm:$0xff]
    %v124 = vld [vmem:[#allocation2 + $0x20] sm:$0xff]
    %v125 = vld [vmem:[#allocation2 + $0x28] sm:$0xff]
    %v126 = vld [vmem:[#allocation2 + $0x30] sm:$0xff]
    %v127 = vld [vmem:[#allocation2 + $0x38] sm:$0xff]
    %v128 = vld [vmem:[#allocation7] ss:$8 sm:$0x3]
    %v130 = vperm.slane %v128, 0
    %v131 = vperm.slane %v128, 1
    %v142 = vunpack.c.l.b16 %v120
    %v143 = vunpack.c.h.b16 %v120
    %v144 = vunpack.c.l.b16 %v121
    %v145 = vunpack.c.h.b16 %v121
    %v146 = vunpack.c.l.b16 %v122
    %v147 = vunpack.c.h.b16 %v122
    %v148 = vunpack.c.l.b16 %v123
    %v149 = vunpack.c.h.b16 %v123
    %v150 = vunpack.c.l.b16 %v124
    %v151 = vunpack.c.h.b16 %v124
    %v152 = vunpack.c.l.b16 %v125
    %v153 = vunpack.c.h.b16 %v125
    %v154 = vunpack.c.l.b16 %v126
    %v155 = vunpack.c.h.b16 %v126
    %v156 = vunpack.c.l.b16 %v127
    %v157 = vunpack.c.h.b16 %v127
    %v158 = vpack.c.b16 %v144, %v142
    %v159 = vpack.c.b16 %v145, %v143
    %v160 = vpack.c.b16 %v148, %v146
    %v161 = vpack.c.b16 %v149, %v147
    %v162 = vpack.c.b16 %v152, %v150
    %v163 = vpack.c.b16 %v153, %v151
    %v164 = vpack.c.b16 %v156, %v154
    %v165 = vpack.c.b16 %v157, %v155
    %vm174 = vcmask 523264
    %v176 = vsel %vm174, %v104, 0
    %v179 = vsel %vm174, %v105, 0
    %v182 = vsel %vm174, %v106, 0
    %v185 = vsel %vm174, %v107, 0
    %v188 = vsel %vm174, %v108, 0
    %v191 = vsel %vm174, %v109, 0
    %v194 = vsel %vm174, %v110, 0
    %v197 = vsel %vm174, %v111, 0
    %v200 = vsel %vm174, %v112, 0
    %v203 = vsel %vm174, %v113, 0
    %v206 = vsel %vm174, %v114, 0
    %v209 = vsel %vm174, %v115, 0
    %v212 = vsel %vm174, %v116, 0
    %v215 = vsel %vm174, %v117, 0
    %v218 = vsel %vm174, %v118, 0
    %v221 = vsel %vm174, %v119, 0
    %223 = vmatpush.bf16.msra.mxu0 0
    %224 = vmatpush.bf16.msra.mxu0 0
    %225 = vmatpush.bf16.msra.mxu0 0
    %226 = vmatpush.bf16.msra.mxu0 0
    %227 = vmatpush.bf16.msra.mxu0 %v164
    %228 = vmatpush.bf16.msra.mxu0 %v162
    %229 = vmatpush.bf16.msra.mxu0 %v160
    %230 = vmatpush.bf16.msra.mxu0 %v158
    %231 = vmatmul.bf16.gmra.mxu0 %v176
    %v232 = vpop.f32.mrf.mxu0
    %v233 = vadd.f32 %v130, %v232
    %v234 = vpop.f32.mrf.mxu0
    %v235 = vadd.f32 %v130, %v234
    %236 = vmatmul.bf16.gmra.mxu0 %v179
    %v237 = vpop.f32.mrf.mxu0
    %v238 = vadd.f32 %v130, %v237
    %v239 = vpop.f32.mrf.mxu0
    %v240 = vadd.f32 %v130, %v239
    %241 = vmatmul.bf16.gmra.mxu0 %v182
    %v242 = vpop.f32.mrf.mxu0
    %v243 = vadd.f32 %v130, %v242
    %v244 = vpop.f32.mrf.mxu0
    %v245 = vadd.f32 %v130, %v244
    %246 = vmatmul.bf16.gmra.mxu0 %v185
    %v247 = vpop.f32.mrf.mxu0
    %v248 = vadd.f32 %v130, %v247
    %v249 = vpop.f32.mrf.mxu0
    %v250 = vadd.f32 %v130, %v249
    %251 = vmatmul.bf16.gmra.mxu0 %v188
    %v252 = vpop.f32.mrf.mxu0
    %v253 = vadd.f32 %v130, %v252
    %v254 = vpop.f32.mrf.mxu0
    %v255 = vadd.f32 %v130, %v254
    %256 = vmatmul.bf16.gmra.mxu0 %v191
    %v257 = vpop.f32.mrf.mxu0
    %v258 = vadd.f32 %v130, %v257
    %v259 = vpop.f32.mrf.mxu0
    %v260 = vadd.f32 %v130, %v259
    %261 = vmatmul.bf16.gmra.mxu0 %v194
    %v262 = vpop.f32.mrf.mxu0
    %v263 = vadd.f32 %v130, %v262
    %v264 = vpop.f32.mrf.mxu0
    %v265 = vadd.f32 %v130, %v264
    %266 = vmatmul.bf16.gmra.mxu0 %v197
    %v267 = vpop.f32.mrf.mxu0
    %v268 = vadd.f32 %v130, %v267
    %v269 = vpop.f32.mrf.mxu0
    %v270 = vadd.f32 %v130, %v269
    %271 = vmatmul.bf16.gmra.mxu0 %v200
    %v272 = vpop.f32.mrf.mxu0
    %v273 = vadd.f32 %v130, %v272
    %v274 = vpop.f32.mrf.mxu0
    %v275 = vadd.f32 %v130, %v274
    %276 = vmatmul.bf16.gmra.mxu0 %v203
    %v277 = vpop.f32.mrf.mxu0
    %v278 = vadd.f32 %v130, %v277
    %v279 = vpop.f32.mrf.mxu0
    %v280 = vadd.f32 %v130, %v279
    %281 = vmatmul.bf16.gmra.mxu0 %v206
    %v282 = vpop.f32.mrf.mxu0
    %v283 = vadd.f32 %v130, %v282
    %v284 = vpop.f32.mrf.mxu0
    %v285 = vadd.f32 %v130, %v284
    %286 = vmatmul.bf16.gmra.mxu0 %v209
    %v287 = vpop.f32.mrf.mxu0
    %v288 = vadd.f32 %v130, %v287
    %v289 = vpop.f32.mrf.mxu0
    %v290 = vadd.f32 %v130, %v289
    %291 = vmatmul.bf16.gmra.mxu0 %v212
    %v292 = vpop.f32.mrf.mxu0
    %v293 = vadd.f32 %v130, %v292
    %v294 = vpop.f32.mrf.mxu0
    %v295 = vadd.f32 %v130, %v294
    %296 = vmatmul.bf16.gmra.mxu0 %v215
    %v297 = vpop.f32.mrf.mxu0
    %v298 = vadd.f32 %v130, %v297
    %v299 = vpop.f32.mrf.mxu0
    %v300 = vadd.f32 %v130, %v299
    %301 = vmatmul.bf16.gmra.mxu0 %v218
    %v302 = vpop.f32.mrf.mxu0
    %v303 = vadd.f32 %v130, %v302
    %v304 = vpop.f32.mrf.mxu0
    %v305 = vadd.f32 %v130, %v304
    %306 = vmatmul.bf16.gmra.mxu0 %v221
    %v307 = vpop.f32.mrf.mxu0
    %v308 = vadd.f32 %v130, %v307
    %v309 = vpop.f32.mrf.mxu0
    %v310 = vadd.f32 %v130, %v309
    %311 = vdwg.mxu0
    %312 = vmatpush.bf16.msra.mxu0 0
    %313 = vmatpush.bf16.msra.mxu0 0
    %314 = vmatpush.bf16.msra.mxu0 0
    %315 = vmatpush.bf16.msra.mxu0 0
    %316 = vmatpush.bf16.msra.mxu0 %v165
    %317 = vmatpush.bf16.msra.mxu0 %v163
    %318 = vmatpush.bf16.msra.mxu0 %v161
    %319 = vmatpush.bf16.msra.mxu0 %v159
    %320 = vmatmul.bf16.gmra.mxu0 %v176
    %v321 = vpop.f32.mrf.mxu0
    %v322 = vadd.f32 %v131, %v321
    %v323 = vpop.f32.mrf.mxu0
    %v324 = vadd.f32 %v131, %v323
    %325 = vmatmul.bf16.gmra.mxu0 %v179
    %v326 = vpop.f32.mrf.mxu0
    %v327 = vadd.f32 %v131, %v326
    %v328 = vpop.f32.mrf.mxu0
    %v329 = vadd.f32 %v131, %v328
    %330 = vmatmul.bf16.gmra.mxu0 %v182
    %v331 = vpop.f32.mrf.mxu0
    %v332 = vadd.f32 %v131, %v331
    %v333 = vpop.f32.mrf.mxu0
    %v334 = vadd.f32 %v131, %v333
    %335 = vmatmul.bf16.gmra.mxu0 %v185
    %v336 = vpop.f32.mrf.mxu0
    %v337 = vadd.f32 %v131, %v336
    %v338 = vpop.f32.mrf.mxu0
    %v339 = vadd.f32 %v131, %v338
    %340 = vmatmul.bf16.gmra.mxu0 %v188
    %v341 = vpop.f32.mrf.mxu0
    %v342 = vadd.f32 %v131, %v341
    %v343 = vpop.f32.mrf.mxu0
    %v344 = vadd.f32 %v131, %v343
    %345 = vmatmul.bf16.gmra.mxu0 %v191
    %v346 = vpop.f32.mrf.mxu0
    %v347 = vadd.f32 %v131, %v346
    %v348 = vpop.f32.mrf.mxu0
    %v349 = vadd.f32 %v131, %v348
    %350 = vmatmul.bf16.gmra.mxu0 %v194
    %v351 = vpop.f32.mrf.mxu0
    %v352 = vadd.f32 %v131, %v351
    %v353 = vpop.f32.mrf.mxu0
    %v354 = vadd.f32 %v131, %v353
    %355 = vmatmul.bf16.gmra.mxu0 %v197
    %v356 = vpop.f32.mrf.mxu0
    %v357 = vadd.f32 %v131, %v356
    %v358 = vpop.f32.mrf.mxu0
    %v359 = vadd.f32 %v131, %v358
    %360 = vmatmul.bf16.gmra.mxu0 %v200
    %v361 = vpop.f32.mrf.mxu0
    %v362 = vadd.f32 %v131, %v361
    %v363 = vpop.f32.mrf.mxu0
    %v364 = vadd.f32 %v131, %v363
    %365 = vmatmul.bf16.gmra.mxu0 %v203
    %v366 = vpop.f32.mrf.mxu0
    %v367 = vadd.f32 %v131, %v366
    %v368 = vpop.f32.mrf.mxu0
    %v369 = vadd.f32 %v131, %v368
    %370 = vmatmul.bf16.gmra.mxu0 %v206
    %v371 = vpop.f32.mrf.mxu0
    %v372 = vadd.f32 %v131, %v371
    %v373 = vpop.f32.mrf.mxu0
    %v374 = vadd.f32 %v131, %v373
    %375 = vmatmul.bf16.gmra.mxu0 %v209
    %v376 = vpop.f32.mrf.mxu0
    %v377 = vadd.f32 %v131, %v376
    %v378 = vpop.f32.mrf.mxu0
    %v379 = vadd.f32 %v131, %v378
    %380 = vmatmul.bf16.gmra.mxu0 %v212
    %v381 = vpop.f32.mrf.mxu0
    %v382 = vadd.f32 %v131, %v381
    %v383 = vpop.f32.mrf.mxu0
    %v384 = vadd.f32 %v131, %v383
    %385 = vmatmul.bf16.gmra.mxu0 %v215
    %v386 = vpop.f32.mrf.mxu0
    %v387 = vadd.f32 %v131, %v386
    %v388 = vpop.f32.mrf.mxu0
    %v389 = vadd.f32 %v131, %v388
    %390 = vmatmul.bf16.gmra.mxu0 %v218
    %v391 = vpop.f32.mrf.mxu0
    %v392 = vadd.f32 %v131, %v391
    %v393 = vpop.f32.mrf.mxu0
    %v394 = vadd.f32 %v131, %v393
    %395 = vmatmul.bf16.gmra.mxu0 %v221
    %v396 = vpop.f32.mrf.mxu0
    %v397 = vadd.f32 %v131, %v396
    %v398 = vpop.f32.mrf.mxu0
    %v399 = vadd.f32 %v131, %v398
    %400 = vdwg.mxu0
    %s401 = scalar_lea.vmem [#allocation7], 1
    %v402 = vld [vmem:[%s401] ss:$8 sm:$0x3]
    %s403 = scalar_lea.vmem [#allocation7], 2
    %v404 = vld [vmem:[%s403] ss:$8 sm:$0x3]
    %v405 = vadd.f32 %v233, %v322
    %406 = vadd.xlane.f32.xlu0 %v405
    %v407 = vpop.xlane.xlu0 %406
    %v408 = vadd.f32 %v235, %v324
    %409 = vadd.xlane.f32.xlu0 %v408
    %v410 = vpop.xlane.xlu0 %409
    %v411 = vadd.f32 %v238, %v327
    %412 = vadd.xlane.f32.xlu0 %v411
    %v413 = vpop.xlane.xlu0 %412
    %v414 = vadd.f32 %v240, %v329
    %415 = vadd.xlane.f32.xlu0 %v414
    %v416 = vpop.xlane.xlu0 %415
    %v417 = vadd.f32 %v243, %v332
    %418 = vadd.xlane.f32.xlu0 %v417
    %v419 = vpop.xlane.xlu0 %418
    %v420 = vadd.f32 %v245, %v334
    %421 = vadd.xlane.f32.xlu0 %v420
    %v422 = vpop.xlane.xlu0 %421
    %v423 = vadd.f32 %v248, %v337
    %424 = vadd.xlane.f32.xlu0 %v423
    %v425 = vpop.xlane.xlu0 %424
    %v426 = vadd.f32 %v250, %v339
    %427 = vadd.xlane.f32.xlu0 %v426
    %v428 = vpop.xlane.xlu0 %427
    %v429 = vadd.f32 %v253, %v342
    %430 = vadd.xlane.f32.xlu0 %v429
    %v431 = vpop.xlane.xlu0 %430
    %v432 = vadd.f32 %v255, %v344
    %433 = vadd.xlane.f32.xlu0 %v432
    %v434 = vpop.xlane.xlu0 %433
    %v435 = vadd.f32 %v258, %v347
    %436 = vadd.xlane.f32.xlu0 %v435
    %v437 = vpop.xlane.xlu0 %436
    %v438 = vadd.f32 %v260, %v349
    %439 = vadd.xlane.f32.xlu0 %v438
    %v440 = vpop.xlane.xlu0 %439
    %v441 = vadd.f32 %v263, %v352
    %442 = vadd.xlane.f32.xlu0 %v441
    %v443 = vpop.xlane.xlu0 %442
    %v444 = vadd.f32 %v265, %v354
    %445 = vadd.xlane.f32.xlu0 %v444
    %v446 = vpop.xlane.xlu0 %445
    %v447 = vadd.f32 %v268, %v357
    %448 = vadd.xlane.f32.xlu0 %v447
    %v449 = vpop.xlane.xlu0 %448
    %v450 = vadd.f32 %v270, %v359
    %451 = vadd.xlane.f32.xlu0 %v450
    %v452 = vpop.xlane.xlu0 %451
    %v453 = vadd.f32 %v273, %v362
    %454 = vadd.xlane.f32.xlu0 %v453
    %v455 = vpop.xlane.xlu0 %454
    %v456 = vadd.f32 %v275, %v364
    %457 = vadd.xlane.f32.xlu0 %v456
    %v458 = vpop.xlane.xlu0 %457
    %v459 = vadd.f32 %v278, %v367
    %460 = vadd.xlane.f32.xlu0 %v459
    %v461 = vpop.xlane.xlu0 %460
    %v462 = vadd.f32 %v280, %v369
    %463 = vadd.xlane.f32.xlu0 %v462
    %v464 = vpop.xlane.xlu0 %463
    %v465 = vadd.f32 %v283, %v372
    %466 = vadd.xlane.f32.xlu0 %v465
    %v467 = vpop.xlane.xlu0 %466
    %v468 = vadd.f32 %v285, %v374
    %469 = vadd.xlane.f32.xlu0 %v468
    %v470 = vpop.xlane.xlu0 %469
    %v471 = vadd.f32 %v288, %v377
    %472 = vadd.xlane.f32.xlu0 %v471
    %v473 = vpop.xlane.xlu0 %472
    %v474 = vadd.f32 %v290, %v379
    %475 = vadd.xlane.f32.xlu0 %v474
    %v476 = vpop.xlane.xlu0 %475
    %v477 = vadd.f32 %v293, %v382
    %478 = vadd.xlane.f32.xlu0 %v477
    %v479 = vpop.xlane.xlu0 %478
    %v480 = vadd.f32 %v295, %v384
    %481 = vadd.xlane.f32.xlu0 %v480
    %v482 = vpop.xlane.xlu0 %481
    %v483 = vadd.f32 %v298, %v387
    %484 = vadd.xlane.f32.xlu0 %v483
    %v485 = vpop.xlane.xlu0 %484
    %v486 = vadd.f32 %v300, %v389
    %487 = vadd.xlane.f32.xlu0 %v486
    %v488 = vpop.xlane.xlu0 %487
    %v489 = vadd.f32 %v303, %v392
    %490 = vadd.xlane.f32.xlu0 %v489
    %v491 = vpop.xlane.xlu0 %490
    %v492 = vadd.f32 %v305, %v394
    %493 = vadd.xlane.f32.xlu0 %v492
    %v494 = vpop.xlane.xlu0 %493
    %v495 = vadd.f32 %v308, %v397
    %496 = vadd.xlane.f32.xlu0 %v495
    %v497 = vpop.xlane.xlu0 %496
    %v498 = vadd.f32 %v310, %v399
    %499 = vadd.xlane.f32.xlu0 %v498
    %v500 = vpop.xlane.xlu0 %499
    %v501 = vrcp.pop 256.0
    %v502 = vmul.f32 256.0, %v501
    %v503 = vsub.f32 1.0, %v502
    %v504 = vmul.f32 %v501, %v503
    %v505 = vadd.f32 %v501, %v504
    %vm506 = vweird.f32 %v501
    %v507 = vsel %vm506, %v501, %v505
    %v508 = vmul.f32 %v407, %v507
    %v509 = vmul.f32 %v410, %v507
    %v510 = vmul.f32 %v413, %v507
    %v511 = vmul.f32 %v416, %v507
    %v512 = vmul.f32 %v419, %v507
    %v513 = vmul.f32 %v422, %v507
    %v514 = vmul.f32 %v425, %v507
    %v515 = vmul.f32 %v428, %v507
    %v516 = vmul.f32 %v431, %v507
    %v517 = vmul.f32 %v434, %v507
    %v518 = vmul.f32 %v437, %v507
    %v519 = vmul.f32 %v440, %v507
    %v520 = vmul.f32 %v443, %v507
    %v521 = vmul.f32 %v446, %v507
    %v522 = vmul.f32 %v449, %v507
    %v523 = vmul.f32 %v452, %v507
    %v524 = vmul.f32 %v455, %v507
    %v525 = vmul.f32 %v458, %v507
    %v526 = vmul.f32 %v461, %v507
    %v527 = vmul.f32 %v464, %v507
    %v528 = vmul.f32 %v467, %v507
    %v529 = vmul.f32 %v470, %v507
    %v530 = vmul.f32 %v473, %v507
    %v531 = vmul.f32 %v476, %v507
    %v532 = vmul.f32 %v479, %v507
    %v533 = vmul.f32 %v482, %v507
    %v534 = vmul.f32 %v485, %v507
    %v535 = vmul.f32 %v488, %v507
    %v536 = vmul.f32 %v491, %v507
    %v537 = vmul.f32 %v494, %v507
    %v538 = vmul.f32 %v497, %v507
    %v539 = vmul.f32 %v500, %v507
    %v540 = vmul.f32 %v233, %v233
    %v541 = vmul.f32 %v322, %v322
    %v542 = vmul.f32 %v235, %v235
    %v543 = vmul.f32 %v324, %v324
    %v544 = vmul.f32 %v238, %v238
    %v545 = vmul.f32 %v327, %v327
    %v546 = vmul.f32 %v240, %v240
    %v547 = vmul.f32 %v329, %v329
    %v548 = vmul.f32 %v243, %v243
    %v549 = vmul.f32 %v332, %v332
    %v550 = vmul.f32 %v245, %v245
    %v551 = vmul.f32 %v334, %v334
    %v552 = vmul.f32 %v248, %v248
    %v553 = vmul.f32 %v337, %v337
    %v554 = vmul.f32 %v250, %v250
    %v555 = vmul.f32 %v339, %v339
    %v556 = vmul.f32 %v253, %v253
    %v557 = vmul.f32 %v342, %v342
    %v558 = vmul.f32 %v255, %v255
    %v559 = vmul.f32 %v344, %v344
    %v560 = vmul.f32 %v258, %v258
    %v561 = vmul.f32 %v347, %v347
    %v562 = vmul.f32 %v260, %v260
    %v563 = vmul.f32 %v349, %v349
    %v564 = vmul.f32 %v263, %v263
    %v565 = vmul.f32 %v352, %v352
    %v566 = vmul.f32 %v265, %v265
    %v567 = vmul.f32 %v354, %v354
    %v568 = vmul.f32 %v268, %v268
    %v569 = vmul.f32 %v357, %v357
    %v570 = vmul.f32 %v270, %v270
    %v571 = vmul.f32 %v359, %v359
    %v572 = vmul.f32 %v273, %v273
    %v573 = vmul.f32 %v362, %v362
    %v574 = vmul.f32 %v275, %v275
    %v575 = vmul.f32 %v364, %v364
    %v576 = vmul.f32 %v278, %v278
    %v577 = vmul.f32 %v367, %v367
    %v578 = vmul.f32 %v280, %v280
    %v579 = vmul.f32 %v369, %v369
    %v580 = vmul.f32 %v283, %v283
    %v581 = vmul.f32 %v372, %v372
    %v582 = vmul.f32 %v285, %v285
    %v583 = vmul.f32 %v374, %v374
    %v584 = vmul.f32 %v288, %v288
    %v585 = vmul.f32 %v377, %v377
    %v586 = vmul.f32 %v290, %v290
    %v587 = vmul.f32 %v379, %v379
    %v588 = vmul.f32 %v293, %v293
    %v589 = vmul.f32 %v382, %v382
    %v590 = vmul.f32 %v295, %v295
    %v591 = vmul.f32 %v384, %v384
    %v592 = vmul.f32 %v298, %v298
    %v593 = vmul.f32 %v387, %v387
    %v594 = vmul.f32 %v300, %v300
    %v595 = vmul.f32 %v389, %v389
    %v596 = vmul.f32 %v303, %v303
    %v597 = vmul.f32 %v392, %v392
    %v598 = vmul.f32 %v305, %v305
    %v599 = vmul.f32 %v394, %v394
    %v600 = vmul.f32 %v308, %v308
    %v601 = vmul.f32 %v397, %v397
    %v602 = vmul.f32 %v310, %v310
    %v603 = vmul.f32 %v399, %v399
    %v604 = vadd.f32 %v540, %v541
    %605 = vadd.xlane.f32.xlu0 %v604
    %v606 = vpop.xlane.xlu0 %605
    %v607 = vadd.f32 %v542, %v543
    %608 = vadd.xlane.f32.xlu0 %v607
    %v609 = vpop.xlane.xlu0 %608
    %v610 = vadd.f32 %v544, %v545
    %611 = vadd.xlane.f32.xlu0 %v610
    %v612 = vpop.xlane.xlu0 %611
    %v613 = vadd.f32 %v546, %v547
    %614 = vadd.xlane.f32.xlu0 %v613
    %v615 = vpop.xlane.xlu0 %614
    %v616 = vadd.f32 %v548, %v549
    %617 = vadd.xlane.f32.xlu0 %v616
    %v618 = vpop.xlane.xlu0 %617
    %v619 = vadd.f32 %v550, %v551
    %620 = vadd.xlane.f32.xlu0 %v619
    %v621 = vpop.xlane.xlu0 %620
    %v622 = vadd.f32 %v552, %v553
    %623 = vadd.xlane.f32.xlu0 %v622
    %v624 = vpop.xlane.xlu0 %623
    %v625 = vadd.f32 %v554, %v555
    %626 = vadd.xlane.f32.xlu0 %v625
    %v627 = vpop.xlane.xlu0 %626
    %v628 = vadd.f32 %v556, %v557
    %629 = vadd.xlane.f32.xlu0 %v628
    %v630 = vpop.xlane.xlu0 %629
    %v631 = vadd.f32 %v558, %v559
    %632 = vadd.xlane.f32.xlu0 %v631
    %v633 = vpop.xlane.xlu0 %632
    %v634 = vadd.f32 %v560, %v561
    %635 = vadd.xlane.f32.xlu0 %v634
    %v636 = vpop.xlane.xlu0 %635
    %v637 = vadd.f32 %v562, %v563
    %638 = vadd.xlane.f32.xlu0 %v637
    %v639 = vpop.xlane.xlu0 %638
    %v640 = vadd.f32 %v564, %v565
    %641 = vadd.xlane.f32.xlu0 %v640
    %v642 = vpop.xlane.xlu0 %641
    %v643 = vadd.f32 %v566, %v567
    %644 = vadd.xlane.f32.xlu0 %v643
    %v645 = vpop.xlane.xlu0 %644
    %v646 = vadd.f32 %v568, %v569
    %647 = vadd.xlane.f32.xlu0 %v646
    %v648 = vpop.xlane.xlu0 %647
    %v649 = vadd.f32 %v570, %v571
    %650 = vadd.xlane.f32.xlu0 %v649
    %v651 = vpop.xlane.xlu0 %650
    %v652 = vadd.f32 %v572, %v573
    %653 = vadd.xlane.f32.xlu0 %v652
    %v654 = vpop.xlane.xlu0 %653
    %v655 = vadd.f32 %v574, %v575
    %656 = vadd.xlane.f32.xlu0 %v655
    %v657 = vpop.xlane.xlu0 %656
    %v658 = vadd.f32 %v576, %v577
    %659 = vadd.xlane.f32.xlu0 %v658
    %v660 = vpop.xlane.xlu0 %659
    %v661 = vadd.f32 %v578, %v579
    %662 = vadd.xlane.f32.xlu0 %v661
    %v663 = vpop.xlane.xlu0 %662
    %v664 = vadd.f32 %v580, %v581
    %665 = vadd.xlane.f32.xlu0 %v664
    %v666 = vpop.xlane.xlu0 %665
    %v667 = vadd.f32 %v582, %v583
    %668 = vadd.xlane.f32.xlu0 %v667
    %v669 = vpop.xlane.xlu0 %668
    %v670 = vadd.f32 %v584, %v585
    %671 = vadd.xlane.f32.xlu0 %v670
    %v672 = vpop.xlane.xlu0 %671
    %v673 = vadd.f32 %v586, %v587
    %674 = vadd.xlane.f32.xlu0 %v673
    %v675 = vpop.xlane.xlu0 %674
    %v676 = vadd.f32 %v588, %v589
    %677 = vadd.xlane.f32.xlu0 %v676
    %v678 = vpop.xlane.xlu0 %677
    %v679 = vadd.f32 %v590, %v591
    %680 = vadd.xlane.f32.xlu0 %v679
    %v681 = vpop.xlane.xlu0 %680
    %v682 = vadd.f32 %v592, %v593
    %683 = vadd.xlane.f32.xlu0 %v682
    %v684 = vpop.xlane.xlu0 %683
    %v685 = vadd.f32 %v594, %v595
    %686 = vadd.xlane.f32.xlu0 %v685
    %v687 = vpop.xlane.xlu0 %686
    %v688 = vadd.f32 %v596, %v597
    %689 = vadd.xlane.f32.xlu0 %v688
    %v690 = vpop.xlane.xlu0 %689
    %v691 = vadd.f32 %v598, %v599
    %692 = vadd.xlane.f32.xlu0 %v691
    %v693 = vpop.xlane.xlu0 %692
    %v694 = vadd.f32 %v600, %v601
    %695 = vadd.xlane.f32.xlu0 %v694
    %v696 = vpop.xlane.xlu0 %695
    %v697 = vadd.f32 %v602, %v603
    %698 = vadd.xlane.f32.xlu0 %v697
    %v699 = vpop.xlane.xlu0 %698
    %v700 = vmul.f32 %v606, %v507
    %v701 = vmul.f32 %v609, %v507
    %v702 = vmul.f32 %v612, %v507
    %v703 = vmul.f32 %v615, %v507
    %v704 = vmul.f32 %v618, %v507
    %v705 = vmul.f32 %v621, %v507
    %v706 = vmul.f32 %v624, %v507
    %v707 = vmul.f32 %v627, %v507
    %v708 = vmul.f32 %v630, %v507
    %v709 = vmul.f32 %v633, %v507
    %v710 = vmul.f32 %v636, %v507
    %v711 = vmul.f32 %v639, %v507
    %v712 = vmul.f32 %v642, %v507
    %v713 = vmul.f32 %v645, %v507
    %v714 = vmul.f32 %v648, %v507
    %v715 = vmul.f32 %v651, %v507
    %v716 = vmul.f32 %v654, %v507
    %v717 = vmul.f32 %v657, %v507
    %v718 = vmul.f32 %v660, %v507
    %v719 = vmul.f32 %v663, %v507
    %v720 = vmul.f32 %v666, %v507
    %v721 = vmul.f32 %v669, %v507
    %v722 = vmul.f32 %v672, %v507
    %v723 = vmul.f32 %v675, %v507
    %v724 = vmul.f32 %v678, %v507
    %v725 = vmul.f32 %v681, %v507
    %v726 = vmul.f32 %v684, %v507
    %v727 = vmul.f32 %v687, %v507
    %v728 = vmul.f32 %v690, %v507
    %v729 = vmul.f32 %v693, %v507
    %v730 = vmul.f32 %v696, %v507
    %v731 = vmul.f32 %v699, %v507
    %v732 = vmul.f32 %v508, %v508
    %v733 = vmul.f32 %v509, %v509
    %v734 = vmul.f32 %v510, %v510
    %v735 = vmul.f32 %v511, %v511
    %v736 = vmul.f32 %v512, %v512
    %v737 = vmul.f32 %v513, %v513
    %v738 = vmul.f32 %v514, %v514
    %v739 = vmul.f32 %v515, %v515
    %v740 = vmul.f32 %v516, %v516
    %v741 = vmul.f32 %v517, %v517
    %v742 = vmul.f32 %v518, %v518
    %v743 = vmul.f32 %v519, %v519
    %v744 = vmul.f32 %v520, %v520
    %v745 = vmul.f32 %v521, %v521
    %v746 = vmul.f32 %v522, %v522
    %v747 = vmul.f32 %v523, %v523
    %v748 = vmul.f32 %v524, %v524
    %v749 = vmul.f32 %v525, %v525
    %v750 = vmul.f32 %v526, %v526
    %v751 = vmul.f32 %v527, %v527
    %v752 = vmul.f32 %v528, %v528
    %v753 = vmul.f32 %v529, %v529
    %v754 = vmul.f32 %v530, %v530
    %v755 = vmul.f32 %v531, %v531
    %v756 = vmul.f32 %v532, %v532
    %v757 = vmul.f32 %v533, %v533
    %v758 = vmul.f32 %v534, %v534
    %v759 = vmul.f32 %v535, %v535
    %v760 = vmul.f32 %v536, %v536
    %v761 = vmul.f32 %v537, %v537
    %v762 = vmul.f32 %v538, %v538
    %v763 = vmul.f32 %v539, %v539
    %v764 = vsub.f32 %v700, %v732
    %v765 = vsub.f32 %v701, %v733
    %v766 = vsub.f32 %v702, %v734
    %v767 = vsub.f32 %v703, %v735
    %v768 = vsub.f32 %v704, %v736
    %v769 = vsub.f32 %v705, %v737
    %v770 = vsub.f32 %v706, %v738
    %v771 = vsub.f32 %v707, %v739
    %v772 = vsub.f32 %v708, %v740
    %v773 = vsub.f32 %v709, %v741
    %v774 = vsub.f32 %v710, %v742
    %v775 = vsub.f32 %v711, %v743
    %v776 = vsub.f32 %v712, %v744
    %v777 = vsub.f32 %v713, %v745
    %v778 = vsub.f32 %v714, %v746
    %v779 = vsub.f32 %v715, %v747
    %v780 = vsub.f32 %v716, %v748
    %v781 = vsub.f32 %v717, %v749
    %v782 = vsub.f32 %v718, %v750
    %v783 = vsub.f32 %v719, %v751
    %v784 = vsub.f32 %v720, %v752
    %v785 = vsub.f32 %v721, %v753
    %v786 = vsub.f32 %v722, %v754
    %v787 = vsub.f32 %v723, %v755
    %v788 = vsub.f32 %v724, %v756
    %v789 = vsub.f32 %v725, %v757
    %v790 = vsub.f32 %v726, %v758
    %v791 = vsub.f32 %v727, %v759
    %v792 = vsub.f32 %v728, %v760
    %v793 = vsub.f32 %v729, %v761
    %v794 = vsub.f32 %v730, %v762
    %v795 = vsub.f32 %v731, %v763
    %v796 = vsub.f32 %v233, %v508
    %v797 = vsub.f32 %v322, %v508
    %v798 = vsub.f32 %v235, %v509
    %v799 = vsub.f32 %v324, %v509
    %v800 = vsub.f32 %v238, %v510
    %v801 = vsub.f32 %v327, %v510
    %v802 = vsub.f32 %v240, %v511
    %v803 = vsub.f32 %v329, %v511
    %v804 = vsub.f32 %v243, %v512
    %v805 = vsub.f32 %v332, %v512
    %v806 = vsub.f32 %v245, %v513
    %v807 = vsub.f32 %v334, %v513
    %v808 = vsub.f32 %v248, %v514
    %v809 = vsub.f32 %v337, %v514
    %v810 = vsub.f32 %v250, %v515
    %v811 = vsub.f32 %v339, %v515
    %v812 = vsub.f32 %v253, %v516
    %v813 = vsub.f32 %v342, %v516
    %v814 = vsub.f32 %v255, %v517
    %v815 = vsub.f32 %v344, %v517
    %v816 = vsub.f32 %v258, %v518
    %v817 = vsub.f32 %v347, %v518
    %v818 = vsub.f32 %v260, %v519
    %v819 = vsub.f32 %v349, %v519
    %v820 = vsub.f32 %v263, %v520
    %v821 = vsub.f32 %v352, %v520
    %v822 = vsub.f32 %v265, %v521
    %v823 = vsub.f32 %v354, %v521
    %v824 = vsub.f32 %v268, %v522
    %v825 = vsub.f32 %v357, %v522
    %v826 = vsub.f32 %v270, %v523
    %v827 = vsub.f32 %v359, %v523
    %v828 = vsub.f32 %v273, %v524
    %v829 = vsub.f32 %v362, %v524
    %v830 = vsub.f32 %v275, %v525
    %v831 = vsub.f32 %v364, %v525
    %v832 = vsub.f32 %v278, %v526
    %v833 = vsub.f32 %v367, %v526
    %v834 = vsub.f32 %v280, %v527
    %v835 = vsub.f32 %v369, %v527
    %v836 = vsub.f32 %v283, %v528
    %v837 = vsub.f32 %v372, %v528
    %v838 = vsub.f32 %v285, %v529
    %v839 = vsub.f32 %v374, %v529
    %v840 = vsub.f32 %v288, %v530
    %v841 = vsub.f32 %v377, %v530
    %v842 = vsub.f32 %v290, %v531
    %v843 = vsub.f32 %v379, %v531
    %v844 = vsub.f32 %v293, %v532
    %v845 = vsub.f32 %v382, %v532
    %v846 = vsub.f32 %v295, %v533
    %v847 = vsub.f32 %v384, %v533
    %v848 = vsub.f32 %v298, %v534
    %v849 = vsub.f32 %v387, %v534
    %v850 = vsub.f32 %v300, %v535
    %v851 = vsub.f32 %v389, %v535
    %v852 = vsub.f32 %v303, %v536
    %v853 = vsub.f32 %v392, %v536
    %v854 = vsub.f32 %v305, %v537
    %v855 = vsub.f32 %v394, %v537
    %v856 = vsub.f32 %v308, %v538
    %v857 = vsub.f32 %v397, %v538
    %v858 = vsub.f32 %v310, %v539
    %v859 = vsub.f32 %v399, %v539
    %v860 = vadd.f32 %v764, 1e-05
    %v861 = vadd.f32 %v765, 1e-05
    %v862 = vadd.f32 %v766, 1e-05
    %v863 = vadd.f32 %v767, 1e-05
    %v864 = vadd.f32 %v768, 1e-05
    %v865 = vadd.f32 %v769, 1e-05
    %v866 = vadd.f32 %v770, 1e-05
    %v867 = vadd.f32 %v771, 1e-05
    %v868 = vadd.f32 %v772, 1e-05
    %v869 = vadd.f32 %v773, 1e-05
    %v870 = vadd.f32 %v774, 1e-05
    %v871 = vadd.f32 %v775, 1e-05
    %v872 = vadd.f32 %v776, 1e-05
    %v873 = vadd.f32 %v777, 1e-05
    %v874 = vadd.f32 %v778, 1e-05
    %v875 = vadd.f32 %v779, 1e-05
    %v876 = vadd.f32 %v780, 1e-05
    %v877 = vadd.f32 %v781, 1e-05
    %v878 = vadd.f32 %v782, 1e-05
    %v879 = vadd.f32 %v783, 1e-05
    %v880 = vadd.f32 %v784, 1e-05
    %v881 = vadd.f32 %v785, 1e-05
    %v882 = vadd.f32 %v786, 1e-05
    %v883 = vadd.f32 %v787, 1e-05
    %v884 = vadd.f32 %v788, 1e-05
    %v885 = vadd.f32 %v789, 1e-05
    %v886 = vadd.f32 %v790, 1e-05
    %v887 = vadd.f32 %v791, 1e-05
    %v888 = vadd.f32 %v792, 1e-05
    %v889 = vadd.f32 %v793, 1e-05
    %v890 = vadd.f32 %v794, 1e-05
    %v891 = vadd.f32 %v795, 1e-05
    %v892 = vrsqrt.pop %v860
    %v893 = vmul.f32 %v892, %v860
    %v894 = vmul.f32 %v893, %v892
    %v895 = vmul.f32 0.5, %v894
    %v896 = vsub.f32 1.5, %v895
    %v897 = vmul.f32 %v892, %v896
    %vm898 = vweird.f32 %v860
    %vm899 = vweird.f32 %v892
    %vm900 = vmor %vm898, %vm899
    %v901 = vsel %vm900, %v892, %v897
    %v902 = vrsqrt.pop %v861
    %v903 = vmul.f32 %v902, %v861
    %v904 = vmul.f32 %v903, %v902
    %v905 = vmul.f32 0.5, %v904
    %v906 = vsub.f32 1.5, %v905
    %v907 = vmul.f32 %v902, %v906
    %vm908 = vweird.f32 %v861
    %vm909 = vweird.f32 %v902
    %vm910 = vmor %vm908, %vm909
    %v911 = vsel %vm910, %v902, %v907
    %v912 = vrsqrt.pop %v862
    %v913 = vmul.f32 %v912, %v862
    %v914 = vmul.f32 %v913, %v912
    %v915 = vmul.f32 0.5, %v914
    %v916 = vsub.f32 1.5, %v915
    %v917 = vmul.f32 %v912, %v916
    %vm918 = vweird.f32 %v862
    %vm919 = vweird.f32 %v912
    %vm920 = vmor %vm918, %vm919
    %v921 = vsel %vm920, %v912, %v917
    %v922 = vrsqrt.pop %v863
    %v923 = vmul.f32 %v922, %v863
    %v924 = vmul.f32 %v923, %v922
    %v925 = vmul.f32 0.5, %v924
    %v926 = vsub.f32 1.5, %v925
    %v927 = vmul.f32 %v922, %v926
    %vm928 = vweird.f32 %v863
    %vm929 = vweird.f32 %v922
    %vm930 = vmor %vm928, %vm929
    %v931 = vsel %vm930, %v922, %v927
    %v932 = vrsqrt.pop %v864
    %v933 = vmul.f32 %v932, %v864
    %v934 = vmul.f32 %v933, %v932
    %v935 = vmul.f32 0.5, %v934
    %v936 = vsub.f32 1.5, %v935
    %v937 = vmul.f32 %v932, %v936
    %vm938 = vweird.f32 %v864
    %vm939 = vweird.f32 %v932
    %vm940 = vmor %vm938, %vm939
    %v941 = vsel %vm940, %v932, %v937
    %v942 = vrsqrt.pop %v865
    %v943 = vmul.f32 %v942, %v865
    %v944 = vmul.f32 %v943, %v942
    %v945 = vmul.f32 0.5, %v944
    %v946 = vsub.f32 1.5, %v945
    %v947 = vmul.f32 %v942, %v946
    %vm948 = vweird.f32 %v865
    %vm949 = vweird.f32 %v942
    %vm950 = vmor %vm948, %vm949
    %v951 = vsel %vm950, %v942, %v947
    %v952 = vrsqrt.pop %v866
    %v953 = vmul.f32 %v952, %v866
    %v954 = vmul.f32 %v953, %v952
    %v955 = vmul.f32 0.5, %v954
    %v956 = vsub.f32 1.5, %v955
    %v957 = vmul.f32 %v952, %v956
    %vm958 = vweird.f32 %v866
    %vm959 = vweird.f32 %v952
    %vm960 = vmor %vm958, %vm959
    %v961 = vsel %vm960, %v952, %v957
    %v962 = vrsqrt.pop %v867
    %v963 = vmul.f32 %v962, %v867
    %v964 = vmul.f32 %v963, %v962
    %v965 = vmul.f32 0.5, %v964
    %v966 = vsub.f32 1.5, %v965
    %v967 = vmul.f32 %v962, %v966
    %vm968 = vweird.f32 %v867
    %vm969 = vweird.f32 %v962
    %vm970 = vmor %vm968, %vm969
    %v971 = vsel %vm970, %v962, %v967
    %v972 = vrsqrt.pop %v868
    %v973 = vmul.f32 %v972, %v868
    %v974 = vmul.f32 %v973, %v972
    %v975 = vmul.f32 0.5, %v974
    %v976 = vsub.f32 1.5, %v975
    %v977 = vmul.f32 %v972, %v976
    %vm978 = vweird.f32 %v868
    %vm979 = vweird.f32 %v972
    %vm980 = vmor %vm978, %vm979
    %v981 = vsel %vm980, %v972, %v977
    %v982 = vrsqrt.pop %v869
    %v983 = vmul.f32 %v982, %v869
    %v984 = vmul.f32 %v983, %v982
    %v985 = vmul.f32 0.5, %v984
    %v986 = vsub.f32 1.5, %v985
    %v987 = vmul.f32 %v982, %v986
    %vm988 = vweird.f32 %v869
    %vm989 = vweird.f32 %v982
    %vm990 = vmor %vm988, %vm989
    %v991 = vsel %vm990, %v982, %v987
    %v992 = vrsqrt.pop %v870
    %v993 = vmul.f32 %v992, %v870
    %v994 = vmul.f32 %v993, %v992
    %v995 = vmul.f32 0.5, %v994
    %v996 = vsub.f32 1.5, %v995
    %v997 = vmul.f32 %v992, %v996
    %vm998 = vweird.f32 %v870
    %vm999 = vweird.f32 %v992
    %vm1000 = vmor %vm998, %vm999
    %v1001 = vsel %vm1000, %v992, %v997
    %v1002 = vrsqrt.pop %v871
    %v1003 = vmul.f32 %v1002, %v871
    %v1004 = vmul.f32 %v1003, %v1002
    %v1005 = vmul.f32 0.5, %v1004
    %v1006 = vsub.f32 1.5, %v1005
    %v1007 = vmul.f32 %v1002, %v1006
    %vm1008 = vweird.f32 %v871
    %vm1009 = vweird.f32 %v1002
    %vm1010 = vmor %vm1008, %vm1009
    %v1011 = vsel %vm1010, %v1002, %v1007
    %v1012 = vrsqrt.pop %v872
    %v1013 = vmul.f32 %v1012, %v872
    %v1014 = vmul.f32 %v1013, %v1012
    %v1015 = vmul.f32 0.5, %v1014
    %v1016 = vsub.f32 1.5, %v1015
    %v1017 = vmul.f32 %v1012, %v1016
    %vm1018 = vweird.f32 %v872
    %vm1019 = vweird.f32 %v1012
    %vm1020 = vmor %vm1018, %vm1019
    %v1021 = vsel %vm1020, %v1012, %v1017
    %v1022 = vrsqrt.pop %v873
    %v1023 = vmul.f32 %v1022, %v873
    %v1024 = vmul.f32 %v1023, %v1022
    %v1025 = vmul.f32 0.5, %v1024
    %v1026 = vsub.f32 1.5, %v1025
    %v1027 = vmul.f32 %v1022, %v1026
    %vm1028 = vweird.f32 %v873
    %vm1029 = vweird.f32 %v1022
    %vm1030 = vmor %vm1028, %vm1029
    %v1031 = vsel %vm1030, %v1022, %v1027
    %v1032 = vrsqrt.pop %v874
    %v1033 = vmul.f32 %v1032, %v874
    %v1034 = vmul.f32 %v1033, %v1032
    %v1035 = vmul.f32 0.5, %v1034
    %v1036 = vsub.f32 1.5, %v1035
    %v1037 = vmul.f32 %v1032, %v1036
    %vm1038 = vweird.f32 %v874
    %vm1039 = vweird.f32 %v1032
    %vm1040 = vmor %vm1038, %vm1039
    %v1041 = vsel %vm1040, %v1032, %v1037
    %v1042 = vrsqrt.pop %v875
    %v1043 = vmul.f32 %v1042, %v875
    %v1044 = vmul.f32 %v1043, %v1042
    %v1045 = vmul.f32 0.5, %v1044
    %v1046 = vsub.f32 1.5, %v1045
    %v1047 = vmul.f32 %v1042, %v1046
    %vm1048 = vweird.f32 %v875
    %vm1049 = vweird.f32 %v1042
    %vm1050 = vmor %vm1048, %vm1049
    %v1051 = vsel %vm1050, %v1042, %v1047
    %v1052 = vrsqrt.pop %v876
    %v1053 = vmul.f32 %v1052, %v876
    %v1054 = vmul.f32 %v1053, %v1052
    %v1055 = vmul.f32 0.5, %v1054
    %v1056 = vsub.f32 1.5, %v1055
    %v1057 = vmul.f32 %v1052, %v1056
    %vm1058 = vweird.f32 %v876
    %vm1059 = vweird.f32 %v1052
    %vm1060 = vmor %vm1058, %vm1059
    %v1061 = vsel %vm1060, %v1052, %v1057
    %v1062 = vrsqrt.pop %v877
    %v1063 = vmul.f32 %v1062, %v877
    %v1064 = vmul.f32 %v1063, %v1062
    %v1065 = vmul.f32 0.5, %v1064
    %v1066 = vsub.f32 1.5, %v1065
    %v1067 = vmul.f32 %v1062, %v1066
    %vm1068 = vweird.f32 %v877
    %vm1069 = vweird.f32 %v1062
    %vm1070 = vmor %vm1068, %vm1069
    %v1071 = vsel %vm1070, %v1062, %v1067
    %v1072 = vrsqrt.pop %v878
    %v1073 = vmul.f32 %v1072, %v878
    %v1074 = vmul.f32 %v1073, %v1072
    %v1075 = vmul.f32 0.5, %v1074
    %v1076 = vsub.f32 1.5, %v1075
    %v1077 = vmul.f32 %v1072, %v1076
    %vm1078 = vweird.f32 %v878
    %vm1079 = vweird.f32 %v1072
    %vm1080 = vmor %vm1078, %vm1079
    %v1081 = vsel %vm1080, %v1072, %v1077
    %v1082 = vrsqrt.pop %v879
    %v1083 = vmul.f32 %v1082, %v879
    %v1084 = vmul.f32 %v1083, %v1082
    %v1085 = vmul.f32 0.5, %v1084
    %v1086 = vsub.f32 1.5, %v1085
    %v1087 = vmul.f32 %v1082, %v1086
    %vm1088 = vweird.f32 %v879
    %vm1089 = vweird.f32 %v1082
    %vm1090 = vmor %vm1088, %vm1089
    %v1091 = vsel %vm1090, %v1082, %v1087
    %v1092 = vrsqrt.pop %v880
    %v1093 = vmul.f32 %v1092, %v880
    %v1094 = vmul.f32 %v1093, %v1092
    %v1095 = vmul.f32 0.5, %v1094
    %v1096 = vsub.f32 1.5, %v1095
    %v1097 = vmul.f32 %v1092, %v1096
    %vm1098 = vweird.f32 %v880
    %vm1099 = vweird.f32 %v1092
    %vm1100 = vmor %vm1098, %vm1099
    %v1101 = vsel %vm1100, %v1092, %v1097
    %v1102 = vrsqrt.pop %v881
    %v1103 = vmul.f32 %v1102, %v881
    %v1104 = vmul.f32 %v1103, %v1102
    %v1105 = vmul.f32 0.5, %v1104
    %v1106 = vsub.f32 1.5, %v1105
    %v1107 = vmul.f32 %v1102, %v1106
    %vm1108 = vweird.f32 %v881
    %vm1109 = vweird.f32 %v1102
    %vm1110 = vmor %vm1108, %vm1109
    %v1111 = vsel %vm1110, %v1102, %v1107
    %v1112 = vrsqrt.pop %v882
    %v1113 = vmul.f32 %v1112, %v882
    %v1114 = vmul.f32 %v1113, %v1112
    %v1115 = vmul.f32 0.5, %v1114
    %v1116 = vsub.f32 1.5, %v1115
    %v1117 = vmul.f32 %v1112, %v1116
    %vm1118 = vweird.f32 %v882
    %vm1119 = vweird.f32 %v1112
    %vm1120 = vmor %vm1118, %vm1119
    %v1121 = vsel %vm1120, %v1112, %v1117
    %v1122 = vrsqrt.pop %v883
    %v1123 = vmul.f32 %v1122, %v883
    %v1124 = vmul.f32 %v1123, %v1122
    %v1125 = vmul.f32 0.5, %v1124
    %v1126 = vsub.f32 1.5, %v1125
    %v1127 = vmul.f32 %v1122, %v1126
    %vm1128 = vweird.f32 %v883
    %vm1129 = vweird.f32 %v1122
    %vm1130 = vmor %vm1128, %vm1129
    %v1131 = vsel %vm1130, %v1122, %v1127
    %v1132 = vrsqrt.pop %v884
    %v1133 = vmul.f32 %v1132, %v884
    %v1134 = vmul.f32 %v1133, %v1132
    %v1135 = vmul.f32 0.5, %v1134
    %v1136 = vsub.f32 1.5, %v1135
    %v1137 = vmul.f32 %v1132, %v1136
    %vm1138 = vweird.f32 %v884
    %vm1139 = vweird.f32 %v1132
    %vm1140 = vmor %vm1138, %vm1139
    %v1141 = vsel %vm1140, %v1132, %v1137
    %v1142 = vrsqrt.pop %v885
    %v1143 = vmul.f32 %v1142, %v885
    %v1144 = vmul.f32 %v1143, %v1142
    %v1145 = vmul.f32 0.5, %v1144
    %v1146 = vsub.f32 1.5, %v1145
    %v1147 = vmul.f32 %v1142, %v1146
    %vm1148 = vweird.f32 %v885
    %vm1149 = vweird.f32 %v1142
    %vm1150 = vmor %vm1148, %vm1149
    %v1151 = vsel %vm1150, %v1142, %v1147
    %v1152 = vrsqrt.pop %v886
    %v1153 = vmul.f32 %v1152, %v886
    %v1154 = vmul.f32 %v1153, %v1152
    %v1155 = vmul.f32 0.5, %v1154
    %v1156 = vsub.f32 1.5, %v1155
    %v1157 = vmul.f32 %v1152, %v1156
    %vm1158 = vweird.f32 %v886
    %vm1159 = vweird.f32 %v1152
    %vm1160 = vmor %vm1158, %vm1159
    %v1161 = vsel %vm1160, %v1152, %v1157
    %v1162 = vrsqrt.pop %v887
    %v1163 = vmul.f32 %v1162, %v887
    %v1164 = vmul.f32 %v1163, %v1162
    %v1165 = vmul.f32 0.5, %v1164
    %v1166 = vsub.f32 1.5, %v1165
    %v1167 = vmul.f32 %v1162, %v1166
    %vm1168 = vweird.f32 %v887
    %vm1169 = vweird.f32 %v1162
    %vm1170 = vmor %vm1168, %vm1169
    %v1171 = vsel %vm1170, %v1162, %v1167
    %v1172 = vrsqrt.pop %v888
    %v1173 = vmul.f32 %v1172, %v888
    %v1174 = vmul.f32 %v1173, %v1172
    %v1175 = vmul.f32 0.5, %v1174
    %v1176 = vsub.f32 1.5, %v1175
    %v1177 = vmul.f32 %v1172, %v1176
    %vm1178 = vweird.f32 %v888
    %vm1179 = vweird.f32 %v1172
    %vm1180 = vmor %vm1178, %vm1179
    %v1181 = vsel %vm1180, %v1172, %v1177
    %v1182 = vrsqrt.pop %v889
    %v1183 = vmul.f32 %v1182, %v889
    %v1184 = vmul.f32 %v1183, %v1182
    %v1185 = vmul.f32 0.5, %v1184
    %v1186 = vsub.f32 1.5, %v1185
    %v1187 = vmul.f32 %v1182, %v1186
    %vm1188 = vweird.f32 %v889
    %vm1189 = vweird.f32 %v1182
    %vm1190 = vmor %vm1188, %vm1189
    %v1191 = vsel %vm1190, %v1182, %v1187
    %v1192 = vrsqrt.pop %v890
    %v1193 = vmul.f32 %v1192, %v890
    %v1194 = vmul.f32 %v1193, %v1192
    %v1195 = vmul.f32 0.5, %v1194
    %v1196 = vsub.f32 1.5, %v1195
    %v1197 = vmul.f32 %v1192, %v1196
    %vm1198 = vweird.f32 %v890
    %vm1199 = vweird.f32 %v1192
    %vm1200 = vmor %vm1198, %vm1199
    %v1201 = vsel %vm1200, %v1192, %v1197
    %v1202 = vrsqrt.pop %v891
    %v1203 = vmul.f32 %v1202, %v891
    %v1204 = vmul.f32 %v1203, %v1202
    %v1205 = vmul.f32 0.5, %v1204
    %v1206 = vsub.f32 1.5, %v1205
    %v1207 = vmul.f32 %v1202, %v1206
    %vm1208 = vweird.f32 %v891
    %vm1209 = vweird.f32 %v1202
    %vm1210 = vmor %vm1208, %vm1209
    %v1211 = vsel %vm1210, %v1202, %v1207
    %v1212 = vmul.f32 %v796, %v901
    %v1213 = vmul.f32 %v797, %v901
    %v1214 = vmul.f32 %v798, %v911
    %v1215 = vmul.f32 %v799, %v911
    %v1216 = vmul.f32 %v800, %v921
    %v1217 = vmul.f32 %v801, %v921
    %v1218 = vmul.f32 %v802, %v931
    %v1219 = vmul.f32 %v803, %v931
    %v1220 = vmul.f32 %v804, %v941
    %v1221 = vmul.f32 %v805, %v941
    %v1222 = vmul.f32 %v806, %v951
    %v1223 = vmul.f32 %v807, %v951
    %v1224 = vmul.f32 %v808, %v961
    %v1225 = vmul.f32 %v809, %v961
    %v1226 = vmul.f32 %v810, %v971
    %v1227 = vmul.f32 %v811, %v971
    %v1228 = vmul.f32 %v812, %v981
    %v1229 = vmul.f32 %v813, %v981
    %v1230 = vmul.f32 %v814, %v991
    %v1231 = vmul.f32 %v815, %v991
    %v1232 = vmul.f32 %v816, %v1001
    %v1233 = vmul.f32 %v817, %v1001
    %v1234 = vmul.f32 %v818, %v1011
    %v1235 = vmul.f32 %v819, %v1011
    %v1236 = vmul.f32 %v820, %v1021
    %v1237 = vmul.f32 %v821, %v1021
    %v1238 = vmul.f32 %v822, %v1031
    %v1239 = vmul.f32 %v823, %v1031
    %v1240 = vmul.f32 %v824, %v1041
    %v1241 = vmul.f32 %v825, %v1041
    %v1242 = vmul.f32 %v826, %v1051
    %v1243 = vmul.f32 %v827, %v1051
    %v1244 = vmul.f32 %v828, %v1061
    %v1245 = vmul.f32 %v829, %v1061
    %v1246 = vmul.f32 %v830, %v1071
    %v1247 = vmul.f32 %v831, %v1071
    %v1248 = vmul.f32 %v832, %v1081
    %v1249 = vmul.f32 %v833, %v1081
    %v1250 = vmul.f32 %v834, %v1091
    %v1251 = vmul.f32 %v835, %v1091
    %v1252 = vmul.f32 %v836, %v1101
    %v1253 = vmul.f32 %v837, %v1101
    %v1254 = vmul.f32 %v838, %v1111
    %v1255 = vmul.f32 %v839, %v1111
    %v1256 = vmul.f32 %v840, %v1121
    %v1257 = vmul.f32 %v841, %v1121
    %v1258 = vmul.f32 %v842, %v1131
    %v1259 = vmul.f32 %v843, %v1131
    %v1260 = vmul.f32 %v844, %v1141
    %v1261 = vmul.f32 %v845, %v1141
    %v1262 = vmul.f32 %v846, %v1151
    %v1263 = vmul.f32 %v847, %v1151
    %v1264 = vmul.f32 %v848, %v1161
    %v1265 = vmul.f32 %v849, %v1161
    %v1266 = vmul.f32 %v850, %v1171
    %v1267 = vmul.f32 %v851, %v1171
    %v1268 = vmul.f32 %v852, %v1181
    %v1269 = vmul.f32 %v853, %v1181
    %v1270 = vmul.f32 %v854, %v1191
    %v1271 = vmul.f32 %v855, %v1191
    %v1272 = vmul.f32 %v856, %v1201
    %v1273 = vmul.f32 %v857, %v1201
    %v1274 = vmul.f32 %v858, %v1211
    %v1275 = vmul.f32 %v859, %v1211
    %v1277 = vperm.slane %v402, 0
    %v1278 = vperm.slane %v402, 1
    %v1281 = vmul.f32 %v1212, %v1277
    %v1282 = vmul.f32 %v1213, %v1278
    %v1283 = vmul.f32 %v1214, %v1277
    %v1284 = vmul.f32 %v1215, %v1278
    %v1285 = vmul.f32 %v1216, %v1277
    %v1286 = vmul.f32 %v1217, %v1278
    %v1287 = vmul.f32 %v1218, %v1277
    %v1288 = vmul.f32 %v1219, %v1278
    %v1289 = vmul.f32 %v1220, %v1277
    %v1290 = vmul.f32 %v1221, %v1278
    %v1291 = vmul.f32 %v1222, %v1277
    %v1292 = vmul.f32 %v1223, %v1278
    %v1293 = vmul.f32 %v1224, %v1277
    %v1294 = vmul.f32 %v1225, %v1278
    %v1295 = vmul.f32 %v1226, %v1277
    %v1296 = vmul.f32 %v1227, %v1278
    %v1297 = vmul.f32 %v1228, %v1277
    %v1298 = vmul.f32 %v1229, %v1278
    %v1299 = vmul.f32 %v1230, %v1277
    %v1300 = vmul.f32 %v1231, %v1278
    %v1301 = vmul.f32 %v1232, %v1277
    %v1302 = vmul.f32 %v1233, %v1278
    %v1303 = vmul.f32 %v1234, %v1277
    %v1304 = vmul.f32 %v1235, %v1278
    %v1305 = vmul.f32 %v1236, %v1277
    %v1306 = vmul.f32 %v1237, %v1278
    %v1307 = vmul.f32 %v1238, %v1277
    %v1308 = vmul.f32 %v1239, %v1278
    %v1309 = vmul.f32 %v1240, %v1277
    %v1310 = vmul.f32 %v1241, %v1278
    %v1311 = vmul.f32 %v1242, %v1277
    %v1312 = vmul.f32 %v1243, %v1278
    %v1313 = vmul.f32 %v1244, %v1277
    %v1314 = vmul.f32 %v1245, %v1278
    %v1315 = vmul.f32 %v1246, %v1277
    %v1316 = vmul.f32 %v1247, %v1278
    %v1317 = vmul.f32 %v1248, %v1277
    %v1318 = vmul.f32 %v1249, %v1278
    %v1319 = vmul.f32 %v1250, %v1277
    %v1320 = vmul.f32 %v1251, %v1278
    %v1321 = vmul.f32 %v1252, %v1277
    %v1322 = vmul.f32 %v1253, %v1278
    %v1323 = vmul.f32 %v1254, %v1277
    %v1324 = vmul.f32 %v1255, %v1278
    %v1325 = vmul.f32 %v1256, %v1277
    %v1326 = vmul.f32 %v1257, %v1278
    %v1327 = vmul.f32 %v1258, %v1277
    %v1328 = vmul.f32 %v1259, %v1278
    %v1329 = vmul.f32 %v1260, %v1277
    %v1330 = vmul.f32 %v1261, %v1278
    %v1331 = vmul.f32 %v1262, %v1277
    %v1332 = vmul.f32 %v1263, %v1278
    %v1333 = vmul.f32 %v1264, %v1277
    %v1334 = vmul.f32 %v1265, %v1278
    %v1335 = vmul.f32 %v1266, %v1277
    %v1336 = vmul.f32 %v1267, %v1278
    %v1337 = vmul.f32 %v1268, %v1277
    %v1338 = vmul.f32 %v1269, %v1278
    %v1339 = vmul.f32 %v1270, %v1277
    %v1340 = vmul.f32 %v1271, %v1278
    %v1341 = vmul.f32 %v1272, %v1277
    %v1342 = vmul.f32 %v1273, %v1278
    %v1343 = vmul.f32 %v1274, %v1277
    %v1344 = vmul.f32 %v1275, %v1278
    %v1346 = vperm.slane %v404, 0
    %v1347 = vperm.slane %v404, 1
    %v1350 = vadd.f32 %v1281, %v1346
    %v1351 = vadd.f32 %v1282, %v1347
    %v1352 = vadd.f32 %v1283, %v1346
    %v1353 = vadd.f32 %v1284, %v1347
    %v1354 = vadd.f32 %v1285, %v1346
    %v1355 = vadd.f32 %v1286, %v1347
    %v1356 = vadd.f32 %v1287, %v1346
    %v1357 = vadd.f32 %v1288, %v1347
    %v1358 = vadd.f32 %v1289, %v1346
    %v1359 = vadd.f32 %v1290, %v1347
    %v1360 = vadd.f32 %v1291, %v1346
    %v1361 = vadd.f32 %v1292, %v1347
    %v1362 = vadd.f32 %v1293, %v1346
    %v1363 = vadd.f32 %v1294, %v1347
    %v1364 = vadd.f32 %v1295, %v1346
    %v1365 = vadd.f32 %v1296, %v1347
    %v1366 = vadd.f32 %v1297, %v1346
    %v1367 = vadd.f32 %v1298, %v1347
    %v1368 = vadd.f32 %v1299, %v1346
    %v1369 = vadd.f32 %v1300, %v1347
    %v1370 = vadd.f32 %v1301, %v1346
    %v1371 = vadd.f32 %v1302, %v1347
    %v1372 = vadd.f32 %v1303, %v1346
    %v1373 = vadd.f32 %v1304, %v1347
    %v1374 = vadd.f32 %v1305, %v1346
    %v1375 = vadd.f32 %v1306, %v1347
    %v1376 = vadd.f32 %v1307, %v1346
    %v1377 = vadd.f32 %v1308, %v1347
    %v1378 = vadd.f32 %v1309, %v1346
    %v1379 = vadd.f32 %v1310, %v1347
    %v1380 = vadd.f32 %v1311, %v1346
    %v1381 = vadd.f32 %v1312, %v1347
    %v1382 = vadd.f32 %v1313, %v1346
    %v1383 = vadd.f32 %v1314, %v1347
    %v1384 = vadd.f32 %v1315, %v1346
    %v1385 = vadd.f32 %v1316, %v1347
    %v1386 = vadd.f32 %v1317, %v1346
    %v1387 = vadd.f32 %v1318, %v1347
    %v1388 = vadd.f32 %v1319, %v1346
    %v1389 = vadd.f32 %v1320, %v1347
    %v1390 = vadd.f32 %v1321, %v1346
    %v1391 = vadd.f32 %v1322, %v1347
    %v1392 = vadd.f32 %v1323, %v1346
    %v1393 = vadd.f32 %v1324, %v1347
    %v1394 = vadd.f32 %v1325, %v1346
    %v1395 = vadd.f32 %v1326, %v1347
    %v1396 = vadd.f32 %v1327, %v1346
    %v1397 = vadd.f32 %v1328, %v1347
    %v1398 = vadd.f32 %v1329, %v1346
    %v1399 = vadd.f32 %v1330, %v1347
    %v1400 = vadd.f32 %v1331, %v1346
    %v1401 = vadd.f32 %v1332, %v1347
    %v1402 = vadd.f32 %v1333, %v1346
    %v1403 = vadd.f32 %v1334, %v1347
    %v1404 = vadd.f32 %v1335, %v1346
    %v1405 = vadd.f32 %v1336, %v1347
    %v1406 = vadd.f32 %v1337, %v1346
    %v1407 = vadd.f32 %v1338, %v1347
    %v1408 = vadd.f32 %v1339, %v1346
    %v1409 = vadd.f32 %v1340, %v1347
    %v1410 = vadd.f32 %v1341, %v1346
    %v1411 = vadd.f32 %v1342, %v1347
    %v1412 = vadd.f32 %v1343, %v1346
    %v1413 = vadd.f32 %v1344, %v1347
    %v1414 = vmax.f32 %v1350, 0.0
    %v1415 = vmax.f32 %v1351, 0.0
    %v1416 = vmax.f32 %v1352, 0.0
    %v1417 = vmax.f32 %v1353, 0.0
    %v1418 = vmax.f32 %v1354, 0.0
    %v1419 = vmax.f32 %v1355, 0.0
    %v1420 = vmax.f32 %v1356, 0.0
    %v1421 = vmax.f32 %v1357, 0.0
    %v1422 = vmax.f32 %v1358, 0.0
    %v1423 = vmax.f32 %v1359, 0.0
    %v1424 = vmax.f32 %v1360, 0.0
    %v1425 = vmax.f32 %v1361, 0.0
    %v1426 = vmax.f32 %v1362, 0.0
    %v1427 = vmax.f32 %v1363, 0.0
    %v1428 = vmax.f32 %v1364, 0.0
    %v1429 = vmax.f32 %v1365, 0.0
    %v1430 = vmax.f32 %v1366, 0.0
    %v1431 = vmax.f32 %v1367, 0.0
    %v1432 = vmax.f32 %v1368, 0.0
    %v1433 = vmax.f32 %v1369, 0.0
    %v1434 = vmax.f32 %v1370, 0.0
    %v1435 = vmax.f32 %v1371, 0.0
    %v1436 = vmax.f32 %v1372, 0.0
    %v1437 = vmax.f32 %v1373, 0.0
    %v1438 = vmax.f32 %v1374, 0.0
    %v1439 = vmax.f32 %v1375, 0.0
    %v1440 = vmax.f32 %v1376, 0.0
    %v1441 = vmax.f32 %v1377, 0.0
    %v1442 = vmax.f32 %v1378, 0.0
    %v1443 = vmax.f32 %v1379, 0.0
    %v1444 = vmax.f32 %v1380, 0.0
    %v1445 = vmax.f32 %v1381, 0.0
    %v1446 = vmax.f32 %v1382, 0.0
    %v1447 = vmax.f32 %v1383, 0.0
    %v1448 = vmax.f32 %v1384, 0.0
    %v1449 = vmax.f32 %v1385, 0.0
    %v1450 = vmax.f32 %v1386, 0.0
    %v1451 = vmax.f32 %v1387, 0.0
    %v1452 = vmax.f32 %v1388, 0.0
    %v1453 = vmax.f32 %v1389, 0.0
    %v1454 = vmax.f32 %v1390, 0.0
    %v1455 = vmax.f32 %v1391, 0.0
    %v1456 = vmax.f32 %v1392, 0.0
    %v1457 = vmax.f32 %v1393, 0.0
    %v1458 = vmax.f32 %v1394, 0.0
    %v1459 = vmax.f32 %v1395, 0.0
    %v1460 = vmax.f32 %v1396, 0.0
    %v1461 = vmax.f32 %v1397, 0.0
    %v1462 = vmax.f32 %v1398, 0.0
    %v1463 = vmax.f32 %v1399, 0.0
    %v1464 = vmax.f32 %v1400, 0.0
    %v1465 = vmax.f32 %v1401, 0.0
    %v1466 = vmax.f32 %v1402, 0.0
    %v1467 = vmax.f32 %v1403, 0.0
    %v1468 = vmax.f32 %v1404, 0.0
    %v1469 = vmax.f32 %v1405, 0.0
    %v1470 = vmax.f32 %v1406, 0.0
    %v1471 = vmax.f32 %v1407, 0.0
    %v1472 = vmax.f32 %v1408, 0.0
    %v1473 = vmax.f32 %v1409, 0.0
    %v1474 = vmax.f32 %v1410, 0.0
    %v1475 = vmax.f32 %v1411, 0.0
    %v1476 = vmax.f32 %v1412, 0.0
    %v1477 = vmax.f32 %v1413, 0.0
    %v1478 = vpack.c.bf16 %v1416, %v1414
    %v1479 = vpack.c.bf16 %v1417, %v1415
    %v1480 = vpack.c.bf16 %v1420, %v1418
    %v1481 = vpack.c.bf16 %v1421, %v1419
    %v1482 = vpack.c.bf16 %v1424, %v1422
    %v1483 = vpack.c.bf16 %v1425, %v1423
    %v1484 = vpack.c.bf16 %v1428, %v1426
    %v1485 = vpack.c.bf16 %v1429, %v1427
    %v1486 = vpack.c.bf16 %v1432, %v1430
    %v1487 = vpack.c.bf16 %v1433, %v1431
    %v1488 = vpack.c.bf16 %v1436, %v1434
    %v1489 = vpack.c.bf16 %v1437, %v1435
    %v1490 = vpack.c.bf16 %v1440, %v1438
    %v1491 = vpack.c.bf16 %v1441, %v1439
    %v1492 = vpack.c.bf16 %v1444, %v1442
    %v1493 = vpack.c.bf16 %v1445, %v1443
    %v1494 = vpack.c.bf16 %v1448, %v1446
    %v1495 = vpack.c.bf16 %v1449, %v1447
    %v1496 = vpack.c.bf16 %v1452, %v1450
    %v1497 = vpack.c.bf16 %v1453, %v1451
    %v1498 = vpack.c.bf16 %v1456, %v1454
    %v1499 = vpack.c.bf16 %v1457, %v1455
    %v1500 = vpack.c.bf16 %v1460, %v1458
    %v1501 = vpack.c.bf16 %v1461, %v1459
    %v1502 = vpack.c.bf16 %v1464, %v1462
    %v1503 = vpack.c.bf16 %v1465, %v1463
    %v1504 = vpack.c.bf16 %v1468, %v1466
    %v1505 = vpack.c.bf16 %v1469, %v1467
    %v1506 = vpack.c.bf16 %v1472, %v1470
    %v1507 = vpack.c.bf16 %v1473, %v1471
    %v1508 = vpack.c.bf16 %v1476, %v1474
    %v1509 = vpack.c.bf16 %v1477, %v1475
    %v1510 = vld [vmem:[%s2] sm:$0xff]
    %v1511 = vld [vmem:[%s2 + $0x8] sm:$0xff]
    %v1512 = vld [vmem:[%s2 + $0x10] sm:$0xff]
    %v1513 = vld [vmem:[%s2 + $0x18] sm:$0xff]
    %v1514 = vld [vmem:[%s2 + $0x20] sm:$0xff]
    %v1515 = vld [vmem:[%s2 + $0x28] sm:$0xff]
    %v1516 = vld [vmem:[%s2 + $0x30] sm:$0xff]
    %v1517 = vld [vmem:[%s2 + $0x38] sm:$0xff]
    %v1518 = vld [vmem:[%s2 + $0x40] sm:$0xff]
    %v1519 = vld [vmem:[%s2 + $0x48] sm:$0xff]
    %v1520 = vld [vmem:[%s2 + $0x50] sm:$0xff]
    %v1521 = vld [vmem:[%s2 + $0x58] sm:$0xff]
    %v1522 = vld [vmem:[%s2 + $0x60] sm:$0xff]
    %v1523 = vld [vmem:[%s2 + $0x68] sm:$0xff]
    %v1524 = vld [vmem:[%s2 + $0x70] sm:$0xff]
    %v1525 = vld [vmem:[%s2 + $0x78] sm:$0xff]
    %v1526 = vld [vmem:[%s2 + $0x80] sm:$0xff]
    %v1527 = vld [vmem:[%s2 + $0x88] sm:$0xff]
    %v1528 = vld [vmem:[%s2 + $0x90] sm:$0xff]
    %v1529 = vld [vmem:[%s2 + $0x98] sm:$0xff]
    %v1530 = vld [vmem:[%s2 + $0xa0] sm:$0xff]
    %v1531 = vld [vmem:[%s2 + $0xa8] sm:$0xff]
    %v1532 = vld [vmem:[%s2 + $0xb0] sm:$0xff]
    %v1533 = vld [vmem:[%s2 + $0xb8] sm:$0xff]
    %v1534 = vld [vmem:[%s2 + $0xc0] sm:$0xff]
    %v1535 = vld [vmem:[%s2 + $0xc8] sm:$0xff]
    %v1536 = vld [vmem:[%s2 + $0xd0] sm:$0xff]
    %v1537 = vld [vmem:[%s2 + $0xd8] sm:$0xff]
    %v1538 = vld [vmem:[%s2 + $0xe0] sm:$0xff]
    %v1539 = vld [vmem:[%s2 + $0xe8] sm:$0xff]
    %v1540 = vld [vmem:[%s2 + $0xf0] sm:$0xff]
    %v1541 = vld [vmem:[%s2 + $0xf8] sm:$0xff]
    %s1542 = scalar_lea.vmem [#allocation7], 3
    %v1543 = vld [vmem:[%s1542] ss:$8 sm:$0x3]
    %v1545 = vperm.slane %v1543, 0
    %v1546 = vperm.slane %v1543, 1
    %v1581 = vunpack.c.l.b16 %v1510
    %v1582 = vunpack.c.h.b16 %v1510
    %v1583 = vunpack.c.l.b16 %v1511
    %v1584 = vunpack.c.h.b16 %v1511
    %v1585 = vunpack.c.l.b16 %v1512
    %v1586 = vunpack.c.h.b16 %v1512
    %v1587 = vunpack.c.l.b16 %v1513
    %v1588 = vunpack.c.h.b16 %v1513
    %v1589 = vunpack.c.l.b16 %v1514
    %v1590 = vunpack.c.h.b16 %v1514
    %v1591 = vunpack.c.l.b16 %v1515
    %v1592 = vunpack.c.h.b16 %v1515
    %v1593 = vunpack.c.l.b16 %v1516
    %v1594 = vunpack.c.h.b16 %v1516
    %v1595 = vunpack.c.l.b16 %v1517
    %v1596 = vunpack.c.h.b16 %v1517
    %v1597 = vunpack.c.l.b16 %v1518
    %v1598 = vunpack.c.h.b16 %v1518
    %v1599 = vunpack.c.l.b16 %v1519
    %v1600 = vunpack.c.h.b16 %v1519
    %v1601 = vunpack.c.l.b16 %v1520
    %v1602 = vunpack.c.h.b16 %v1520
    %v1603 = vunpack.c.l.b16 %v1521
    %v1604 = vunpack.c.h.b16 %v1521
    %v1605 = vunpack.c.l.b16 %v1522
    %v1606 = vunpack.c.h.b16 %v1522
    %v1607 = vunpack.c.l.b16 %v1523
    %v1608 = vunpack.c.h.b16 %v1523
    %v1609 = vunpack.c.l.b16 %v1524
    %v1610 = vunpack.c.h.b16 %v1524
    %v1611 = vunpack.c.l.b16 %v1525
    %v1612 = vunpack.c.h.b16 %v1525
    %v1613 = vunpack.c.l.b16 %v1526
    %v1614 = vunpack.c.h.b16 %v1526
    %v1615 = vunpack.c.l.b16 %v1527
    %v1616 = vunpack.c.h.b16 %v1527
    %v1617 = vunpack.c.l.b16 %v1528
    %v1618 = vunpack.c.h.b16 %v1528
    %v1619 = vunpack.c.l.b16 %v1529
    %v1620 = vunpack.c.h.b16 %v1529
    %v1621 = vunpack.c.l.b16 %v1530
    %v1622 = vunpack.c.h.b16 %v1530
    %v1623 = vunpack.c.l.b16 %v1531
    %v1624 = vunpack.c.h.b16 %v1531
    %v1625 = vunpack.c.l.b16 %v1532
    %v1626 = vunpack.c.h.b16 %v1532
    %v1627 = vunpack.c.l.b16 %v1533
    %v1628 = vunpack.c.h.b16 %v1533
    %v1629 = vunpack.c.l.b16 %v1534
    %v1630 = vunpack.c.h.b16 %v1534
    %v1631 = vunpack.c.l.b16 %v1535
    %v1632 = vunpack.c.h.b16 %v1535
    %v1633 = vunpack.c.l.b16 %v1536
    %v1634 = vunpack.c.h.b16 %v1536
    %v1635 = vunpack.c.l.b16 %v1537
    %v1636 = vunpack.c.h.b16 %v1537
    %v1637 = vunpack.c.l.b16 %v1538
    %v1638 = vunpack.c.h.b16 %v1538
    %v1639 = vunpack.c.l.b16 %v1539
    %v1640 = vunpack.c.h.b16 %v1539
    %v1641 = vunpack.c.l.b16 %v1540
    %v1642 = vunpack.c.h.b16 %v1540
    %v1643 = vunpack.c.l.b16 %v1541
    %v1644 = vunpack.c.h.b16 %v1541
    %v1645 = vpack.c.b16 %v1583, %v1581
    %v1646 = vpack.c.b16 %v1584, %v1582
    %v1647 = vpack.c.b16 %v1587, %v1585
    %v1648 = vpack.c.b16 %v1588, %v1586
    %v1649 = vpack.c.b16 %v1591, %v1589
    %v1650 = vpack.c.b16 %v1592, %v1590
    %v1651 = vpack.c.b16 %v1595, %v1593
    %v1652 = vpack.c.b16 %v1596, %v1594
    %v1653 = vpack.c.b16 %v1599, %v1597
    %v1654 = vpack.c.b16 %v1600, %v1598
    %v1655 = vpack.c.b16 %v1603, %v1601
    %v1656 = vpack.c.b16 %v1604, %v1602
    %v1657 = vpack.c.b16 %v1607, %v1605
    %v1658 = vpack.c.b16 %v1608, %v1606
    %v1659 = vpack.c.b16 %v1611, %v1609
    %v1660 = vpack.c.b16 %v1612, %v1610
    %v1661 = vpack.c.b16 %v1615, %v1613
    %v1662 = vpack.c.b16 %v1616, %v1614
    %v1663 = vpack.c.b16 %v1619, %v1617
    %v1664 = vpack.c.b16 %v1620, %v1618
    %v1665 = vpack.c.b16 %v1623, %v1621
    %v1666 = vpack.c.b16 %v1624, %v1622
    %v1667 = vpack.c.b16 %v1627, %v1625
    %v1668 = vpack.c.b16 %v1628, %v1626
    %v1669 = vpack.c.b16 %v1631, %v1629
    %v1670 = vpack.c.b16 %v1632, %v1630
    %v1671 = vpack.c.b16 %v1635, %v1633
    %v1672 = vpack.c.b16 %v1636, %v1634
    %v1673 = vpack.c.b16 %v1639, %v1637
    %v1674 = vpack.c.b16 %v1640, %v1638
    %v1675 = vpack.c.b16 %v1643, %v1641
    %v1676 = vpack.c.b16 %v1644, %v1642
    %1709 = vmatpush.bf16.msra.mxu0 %v1659
    %1710 = vmatpush.bf16.msra.mxu0 %v1657
    %1711 = vmatpush.bf16.msra.mxu0 %v1655
    %1712 = vmatpush.bf16.msra.mxu0 %v1653
    %1713 = vmatpush.bf16.msra.mxu0 %v1651
    %1714 = vmatpush.bf16.msra.mxu0 %v1649
    %1715 = vmatpush.bf16.msra.mxu0 %v1647
    %1716 = vmatpush.bf16.msra.mxu0 %v1645
    %1717 = vmatmul.bf16.gmra.mxu0 %v1478
    %v1718 = vpop.f32.mrf.mxu0
    %v1719 = vadd.f32 %v1545, %v1718
    %v1720 = vpop.f32.mrf.mxu0
    %v1721 = vadd.f32 %v1545, %v1720
    %1722 = vmatmul.bf16.gmra.mxu0 %v1480
    %v1723 = vpop.f32.mrf.mxu0
    %v1724 = vadd.f32 %v1545, %v1723
    %v1725 = vpop.f32.mrf.mxu0
    %v1726 = vadd.f32 %v1545, %v1725
    %1727 = vmatmul.bf16.gmra.mxu0 %v1482
    %v1728 = vpop.f32.mrf.mxu0
    %v1729 = vadd.f32 %v1545, %v1728
    %v1730 = vpop.f32.mrf.mxu0
    %v1731 = vadd.f32 %v1545, %v1730
    %1732 = vmatmul.bf16.gmra.mxu0 %v1484
    %v1733 = vpop.f32.mrf.mxu0
    %v1734 = vadd.f32 %v1545, %v1733
    %v1735 = vpop.f32.mrf.mxu0
    %v1736 = vadd.f32 %v1545, %v1735
    %1737 = vmatmul.bf16.gmra.mxu0 %v1486
    %v1738 = vpop.f32.mrf.mxu0
    %v1739 = vadd.f32 %v1545, %v1738
    %v1740 = vpop.f32.mrf.mxu0
    %v1741 = vadd.f32 %v1545, %v1740
    %1742 = vmatmul.bf16.gmra.mxu0 %v1488
    %v1743 = vpop.f32.mrf.mxu0
    %v1744 = vadd.f32 %v1545, %v1743
    %v1745 = vpop.f32.mrf.mxu0
    %v1746 = vadd.f32 %v1545, %v1745
    %1747 = vmatmul.bf16.gmra.mxu0 %v1490
    %v1748 = vpop.f32.mrf.mxu0
    %v1749 = vadd.f32 %v1545, %v1748
    %v1750 = vpop.f32.mrf.mxu0
    %v1751 = vadd.f32 %v1545, %v1750
    %1752 = vmatmul.bf16.gmra.mxu0 %v1492
    %v1753 = vpop.f32.mrf.mxu0
    %v1754 = vadd.f32 %v1545, %v1753
    %v1755 = vpop.f32.mrf.mxu0
    %v1756 = vadd.f32 %v1545, %v1755
    %1757 = vmatmul.bf16.gmra.mxu0 %v1494
    %v1758 = vpop.f32.mrf.mxu0
    %v1759 = vadd.f32 %v1545, %v1758
    %v1760 = vpop.f32.mrf.mxu0
    %v1761 = vadd.f32 %v1545, %v1760
    %1762 = vmatmul.bf16.gmra.mxu0 %v1496
    %v1763 = vpop.f32.mrf.mxu0
    %v1764 = vadd.f32 %v1545, %v1763
    %v1765 = vpop.f32.mrf.mxu0
    %v1766 = vadd.f32 %v1545, %v1765
    %1767 = vmatmul.bf16.gmra.mxu0 %v1498
    %v1768 = vpop.f32.mrf.mxu0
    %v1769 = vadd.f32 %v1545, %v1768
    %v1770 = vpop.f32.mrf.mxu0
    %v1771 = vadd.f32 %v1545, %v1770
    %1772 = vmatmul.bf16.gmra.mxu0 %v1500
    %v1773 = vpop.f32.mrf.mxu0
    %v1774 = vadd.f32 %v1545, %v1773
    %v1775 = vpop.f32.mrf.mxu0
    %v1776 = vadd.f32 %v1545, %v1775
    %1777 = vmatmul.bf16.gmra.mxu0 %v1502
    %v1778 = vpop.f32.mrf.mxu0
    %v1779 = vadd.f32 %v1545, %v1778
    %v1780 = vpop.f32.mrf.mxu0
    %v1781 = vadd.f32 %v1545, %v1780
    %1782 = vmatmul.bf16.gmra.mxu0 %v1504
    %v1783 = vpop.f32.mrf.mxu0
    %v1784 = vadd.f32 %v1545, %v1783
    %v1785 = vpop.f32.mrf.mxu0
    %v1786 = vadd.f32 %v1545, %v1785
    %1787 = vmatmul.bf16.gmra.mxu0 %v1506
    %v1788 = vpop.f32.mrf.mxu0
    %v1789 = vadd.f32 %v1545, %v1788
    %v1790 = vpop.f32.mrf.mxu0
    %v1791 = vadd.f32 %v1545, %v1790
    %1792 = vmatmul.bf16.gmra.mxu0 %v1508
    %v1793 = vpop.f32.mrf.mxu0
    %v1794 = vadd.f32 %v1545, %v1793
    %v1795 = vpop.f32.mrf.mxu0
    %v1796 = vadd.f32 %v1545, %v1795
    %1797 = vdwg.mxu0
    %1798 = vmatpush.bf16.msra.mxu0 %v1675
    %1799 = vmatpush.bf16.msra.mxu0 %v1673
    %1800 = vmatpush.bf16.msra.mxu0 %v1671
    %1801 = vmatpush.bf16.msra.mxu0 %v1669
    %1802 = vmatpush.bf16.msra.mxu0 %v1667
    %1803 = vmatpush.bf16.msra.mxu0 %v1665
    %1804 = vmatpush.bf16.msra.mxu0 %v1663
    %1805 = vmatpush.bf16.msra.mxu0 %v1661
    %1806 = vmatmul.bf16.gmra.mxu0 %v1479
    %v1807 = vpop.f32.mrf.mxu0
    %v1808 = vadd.f32 %v1719, %v1807
    %v1809 = vpop.f32.mrf.mxu0
    %v1810 = vadd.f32 %v1721, %v1809
    %1811 = vmatmul.bf16.gmra.mxu0 %v1481
    %v1812 = vpop.f32.mrf.mxu0
    %v1813 = vadd.f32 %v1724, %v1812
    %v1814 = vpop.f32.mrf.mxu0
    %v1815 = vadd.f32 %v1726, %v1814
    %1816 = vmatmul.bf16.gmra.mxu0 %v1483
    %v1817 = vpop.f32.mrf.mxu0
    %v1818 = vadd.f32 %v1729, %v1817
    %v1819 = vpop.f32.mrf.mxu0
    %v1820 = vadd.f32 %v1731, %v1819
    %1821 = vmatmul.bf16.gmra.mxu0 %v1485
    %v1822 = vpop.f32.mrf.mxu0
    %v1823 = vadd.f32 %v1734, %v1822
    %v1824 = vpop.f32.mrf.mxu0
    %v1825 = vadd.f32 %v1736, %v1824
    %1826 = vmatmul.bf16.gmra.mxu0 %v1487
    %v1827 = vpop.f32.mrf.mxu0
    %v1828 = vadd.f32 %v1739, %v1827
    %v1829 = vpop.f32.mrf.mxu0
    %v1830 = vadd.f32 %v1741, %v1829
    %1831 = vmatmul.bf16.gmra.mxu0 %v1489
    %v1832 = vpop.f32.mrf.mxu0
    %v1833 = vadd.f32 %v1744, %v1832
    %v1834 = vpop.f32.mrf.mxu0
    %v1835 = vadd.f32 %v1746, %v1834
    %1836 = vmatmul.bf16.gmra.mxu0 %v1491
    %v1837 = vpop.f32.mrf.mxu0
    %v1838 = vadd.f32 %v1749, %v1837
    %v1839 = vpop.f32.mrf.mxu0
    %v1840 = vadd.f32 %v1751, %v1839
    %1841 = vmatmul.bf16.gmra.mxu0 %v1493
    %v1842 = vpop.f32.mrf.mxu0
    %v1843 = vadd.f32 %v1754, %v1842
    %v1844 = vpop.f32.mrf.mxu0
    %v1845 = vadd.f32 %v1756, %v1844
    %1846 = vmatmul.bf16.gmra.mxu0 %v1495
    %v1847 = vpop.f32.mrf.mxu0
    %v1848 = vadd.f32 %v1759, %v1847
    %v1849 = vpop.f32.mrf.mxu0
    %v1850 = vadd.f32 %v1761, %v1849
    %1851 = vmatmul.bf16.gmra.mxu0 %v1497
    %v1852 = vpop.f32.mrf.mxu0
    %v1853 = vadd.f32 %v1764, %v1852
    %v1854 = vpop.f32.mrf.mxu0
    %v1855 = vadd.f32 %v1766, %v1854
    %1856 = vmatmul.bf16.gmra.mxu0 %v1499
    %v1857 = vpop.f32.mrf.mxu0
    %v1858 = vadd.f32 %v1769, %v1857
    %v1859 = vpop.f32.mrf.mxu0
    %v1860 = vadd.f32 %v1771, %v1859
    %1861 = vmatmul.bf16.gmra.mxu0 %v1501
    %v1862 = vpop.f32.mrf.mxu0
    %v1863 = vadd.f32 %v1774, %v1862
    %v1864 = vpop.f32.mrf.mxu0
    %v1865 = vadd.f32 %v1776, %v1864
    %1866 = vmatmul.bf16.gmra.mxu0 %v1503
    %v1867 = vpop.f32.mrf.mxu0
    %v1868 = vadd.f32 %v1779, %v1867
    %v1869 = vpop.f32.mrf.mxu0
    %v1870 = vadd.f32 %v1781, %v1869
    %1871 = vmatmul.bf16.gmra.mxu0 %v1505
    %v1872 = vpop.f32.mrf.mxu0
    %v1873 = vadd.f32 %v1784, %v1872
    %v1874 = vpop.f32.mrf.mxu0
    %v1875 = vadd.f32 %v1786, %v1874
    %1876 = vmatmul.bf16.gmra.mxu0 %v1507
    %v1877 = vpop.f32.mrf.mxu0
    %v1878 = vadd.f32 %v1789, %v1877
    %v1879 = vpop.f32.mrf.mxu0
    %v1880 = vadd.f32 %v1791, %v1879
    %1881 = vmatmul.bf16.gmra.mxu0 %v1509
    %v1882 = vpop.f32.mrf.mxu0
    %v1883 = vadd.f32 %v1794, %v1882
    %v1884 = vpop.f32.mrf.mxu0
    %v1885 = vadd.f32 %v1796, %v1884
    %1886 = vdwg.mxu0
    %1887 = vmatpush.bf16.msra.mxu0 %v1660
    %1888 = vmatpush.bf16.msra.mxu0 %v1658
    %1889 = vmatpush.bf16.msra.mxu0 %v1656
    %1890 = vmatpush.bf16.msra.mxu0 %v1654
    %1891 = vmatpush.bf16.msra.mxu0 %v1652
    %1892 = vmatpush.bf16.msra.mxu0 %v1650
    %1893 = vmatpush.bf16.msra.mxu0 %v1648
    %1894 = vmatpush.bf16.msra.mxu0 %v1646
    %1895 = vmatmul.bf16.gmra.mxu0 %v1478
    %v1896 = vpop.f32.mrf.mxu0
    %v1897 = vadd.f32 %v1546, %v1896
    %v1898 = vpop.f32.mrf.mxu0
    %v1899 = vadd.f32 %v1546, %v1898
    %1900 = vmatmul.bf16.gmra.mxu0 %v1480
    %v1901 = vpop.f32.mrf.mxu0
    %v1902 = vadd.f32 %v1546, %v1901
    %v1903 = vpop.f32.mrf.mxu0
    %v1904 = vadd.f32 %v1546, %v1903
    %1905 = vmatmul.bf16.gmra.mxu0 %v1482
    %v1906 = vpop.f32.mrf.mxu0
    %v1907 = vadd.f32 %v1546, %v1906
    %v1908 = vpop.f32.mrf.mxu0
    %v1909 = vadd.f32 %v1546, %v1908
    %1910 = vmatmul.bf16.gmra.mxu0 %v1484
    %v1911 = vpop.f32.mrf.mxu0
    %v1912 = vadd.f32 %v1546, %v1911
    %v1913 = vpop.f32.mrf.mxu0
    %v1914 = vadd.f32 %v1546, %v1913
    %1915 = vmatmul.bf16.gmra.mxu0 %v1486
    %v1916 = vpop.f32.mrf.mxu0
    %v1917 = vadd.f32 %v1546, %v1916
    %v1918 = vpop.f32.mrf.mxu0
    %v1919 = vadd.f32 %v1546, %v1918
    %1920 = vmatmul.bf16.gmra.mxu0 %v1488
    %v1921 = vpop.f32.mrf.mxu0
    %v1922 = vadd.f32 %v1546, %v1921
    %v1923 = vpop.f32.mrf.mxu0
    %v1924 = vadd.f32 %v1546, %v1923
    %1925 = vmatmul.bf16.gmra.mxu0 %v1490
    %v1926 = vpop.f32.mrf.mxu0
    %v1927 = vadd.f32 %v1546, %v1926
    %v1928 = vpop.f32.mrf.mxu0
    %v1929 = vadd.f32 %v1546, %v1928
    %1930 = vmatmul.bf16.gmra.mxu0 %v1492
    %v1931 = vpop.f32.mrf.mxu0
    %v1932 = vadd.f32 %v1546, %v1931
    %v1933 = vpop.f32.mrf.mxu0
    %v1934 = vadd.f32 %v1546, %v1933
    %1935 = vmatmul.bf16.gmra.mxu0 %v1494
    %v1936 = vpop.f32.mrf.mxu0
    %v1937 = vadd.f32 %v1546, %v1936
    %v1938 = vpop.f32.mrf.mxu0
    %v1939 = vadd.f32 %v1546, %v1938
    %1940 = vmatmul.bf16.gmra.mxu0 %v1496
    %v1941 = vpop.f32.mrf.mxu0
    %v1942 = vadd.f32 %v1546, %v1941
    %v1943 = vpop.f32.mrf.mxu0
    %v1944 = vadd.f32 %v1546, %v1943
    %1945 = vmatmul.bf16.gmra.mxu0 %v1498
    %v1946 = vpop.f32.mrf.mxu0
    %v1947 = vadd.f32 %v1546, %v1946
    %v1948 = vpop.f32.mrf.mxu0
    %v1949 = vadd.f32 %v1546, %v1948
    %1950 = vmatmul.bf16.gmra.mxu0 %v1500
    %v1951 = vpop.f32.mrf.mxu0
    %v1952 = vadd.f32 %v1546, %v1951
    %v1953 = vpop.f32.mrf.mxu0
    %v1954 = vadd.f32 %v1546, %v1953
    %1955 = vmatmul.bf16.gmra.mxu0 %v1502
    %v1956 = vpop.f32.mrf.mxu0
    %v1957 = vadd.f32 %v1546, %v1956
    %v1958 = vpop.f32.mrf.mxu0
    %v1959 = vadd.f32 %v1546, %v1958
    %1960 = vmatmul.bf16.gmra.mxu0 %v1504
    %v1961 = vpop.f32.mrf.mxu0
    %v1962 = vadd.f32 %v1546, %v1961
    %v1963 = vpop.f32.mrf.mxu0
    %v1964 = vadd.f32 %v1546, %v1963
    %1965 = vmatmul.bf16.gmra.mxu0 %v1506
    %v1966 = vpop.f32.mrf.mxu0
    %v1967 = vadd.f32 %v1546, %v1966
    %v1968 = vpop.f32.mrf.mxu0
    %v1969 = vadd.f32 %v1546, %v1968
    %1970 = vmatmul.bf16.gmra.mxu0 %v1508
    %v1971 = vpop.f32.mrf.mxu0
    %v1972 = vadd.f32 %v1546, %v1971
    %v1973 = vpop.f32.mrf.mxu0
    %v1974 = vadd.f32 %v1546, %v1973
    %1975 = vdwg.mxu0
    %1976 = vmatpush.bf16.msra.mxu0 %v1676
    %1977 = vmatpush.bf16.msra.mxu0 %v1674
    %1978 = vmatpush.bf16.msra.mxu0 %v1672
    %1979 = vmatpush.bf16.msra.mxu0 %v1670
    %1980 = vmatpush.bf16.msra.mxu0 %v1668
    %1981 = vmatpush.bf16.msra.mxu0 %v1666
    %1982 = vmatpush.bf16.msra.mxu0 %v1664
    %1983 = vmatpush.bf16.msra.mxu0 %v1662
    %1984 = vmatmul.bf16.gmra.mxu0 %v1479
    %v1985 = vpop.f32.mrf.mxu0
    %v1986 = vadd.f32 %v1897, %v1985
    %v1987 = vpop.f32.mrf.mxu0
    %v1988 = vadd.f32 %v1899, %v1987
    %1989 = vmatmul.bf16.gmra.mxu0 %v1481
    %v1990 = vpop.f32.mrf.mxu0
    %v1991 = vadd.f32 %v1902, %v1990
    %v1992 = vpop.f32.mrf.mxu0
    %v1993 = vadd.f32 %v1904, %v1992
    %1994 = vmatmul.bf16.gmra.mxu0 %v1483
    %v1995 = vpop.f32.mrf.mxu0
    %v1996 = vadd.f32 %v1907, %v1995
    %v1997 = vpop.f32.mrf.mxu0
    %v1998 = vadd.f32 %v1909, %v1997
    %1999 = vmatmul.bf16.gmra.mxu0 %v1485
    %v2000 = vpop.f32.mrf.mxu0
    %v2001 = vadd.f32 %v1912, %v2000
    %v2002 = vpop.f32.mrf.mxu0
    %v2003 = vadd.f32 %v1914, %v2002
    %2004 = vmatmul.bf16.gmra.mxu0 %v1487
    %v2005 = vpop.f32.mrf.mxu0
    %v2006 = vadd.f32 %v1917, %v2005
    %v2007 = vpop.f32.mrf.mxu0
    %v2008 = vadd.f32 %v1919, %v2007
    %2009 = vmatmul.bf16.gmra.mxu0 %v1489
    %v2010 = vpop.f32.mrf.mxu0
    %v2011 = vadd.f32 %v1922, %v2010
    %v2012 = vpop.f32.mrf.mxu0
    %v2013 = vadd.f32 %v1924, %v2012
    %2014 = vmatmul.bf16.gmra.mxu0 %v1491
    %v2015 = vpop.f32.mrf.mxu0
    %v2016 = vadd.f32 %v1927, %v2015
    %v2017 = vpop.f32.mrf.mxu0
    %v2018 = vadd.f32 %v1929, %v2017
    %2019 = vmatmul.bf16.gmra.mxu0 %v1493
    %v2020 = vpop.f32.mrf.mxu0
    %v2021 = vadd.f32 %v1932, %v2020
    %v2022 = vpop.f32.mrf.mxu0
    %v2023 = vadd.f32 %v1934, %v2022
    %2024 = vmatmul.bf16.gmra.mxu0 %v1495
    %v2025 = vpop.f32.mrf.mxu0
    %v2026 = vadd.f32 %v1937, %v2025
    %v2027 = vpop.f32.mrf.mxu0
    %v2028 = vadd.f32 %v1939, %v2027
    %2029 = vmatmul.bf16.gmra.mxu0 %v1497
    %v2030 = vpop.f32.mrf.mxu0
    %v2031 = vadd.f32 %v1942, %v2030
    %v2032 = vpop.f32.mrf.mxu0
    %v2033 = vadd.f32 %v1944, %v2032
    %2034 = vmatmul.bf16.gmra.mxu0 %v1499
    %v2035 = vpop.f32.mrf.mxu0
    %v2036 = vadd.f32 %v1947, %v2035
    %v2037 = vpop.f32.mrf.mxu0
    %v2038 = vadd.f32 %v1949, %v2037
    %2039 = vmatmul.bf16.gmra.mxu0 %v1501
    %v2040 = vpop.f32.mrf.mxu0
    %v2041 = vadd.f32 %v1952, %v2040
    %v2042 = vpop.f32.mrf.mxu0
    %v2043 = vadd.f32 %v1954, %v2042
    %2044 = vmatmul.bf16.gmra.mxu0 %v1503
    %v2045 = vpop.f32.mrf.mxu0
    %v2046 = vadd.f32 %v1957, %v2045
    %v2047 = vpop.f32.mrf.mxu0
    %v2048 = vadd.f32 %v1959, %v2047
    %2049 = vmatmul.bf16.gmra.mxu0 %v1505
    %v2050 = vpop.f32.mrf.mxu0
    %v2051 = vadd.f32 %v1962, %v2050
    %v2052 = vpop.f32.mrf.mxu0
    %v2053 = vadd.f32 %v1964, %v2052
    %2054 = vmatmul.bf16.gmra.mxu0 %v1507
    %v2055 = vpop.f32.mrf.mxu0
    %v2056 = vadd.f32 %v1967, %v2055
    %v2057 = vpop.f32.mrf.mxu0
    %v2058 = vadd.f32 %v1969, %v2057
    %2059 = vmatmul.bf16.gmra.mxu0 %v1509
    %v2060 = vpop.f32.mrf.mxu0
    %v2061 = vadd.f32 %v1972, %v2060
    %v2062 = vpop.f32.mrf.mxu0
    %v2063 = vadd.f32 %v1974, %v2062
    %2064 = vdwg.mxu0
    %s2065 = scalar_lea.vmem [#allocation7], 4
    %v2066 = vld [vmem:[%s2065] ss:$8 sm:$0x3]
    %s2067 = scalar_lea.vmem [#allocation7], 5
    %v2068 = vld [vmem:[%s2067] ss:$8 sm:$0x3]
    %v2069 = vadd.f32 %v1808, %v1986
    %2070 = vadd.xlane.f32.xlu0 %v2069
    %v2071 = vpop.xlane.xlu0 %2070
    %v2072 = vadd.f32 %v1810, %v1988
    %2073 = vadd.xlane.f32.xlu0 %v2072
    %v2074 = vpop.xlane.xlu0 %2073
    %v2075 = vadd.f32 %v1813, %v1991
    %2076 = vadd.xlane.f32.xlu0 %v2075
    %v2077 = vpop.xlane.xlu0 %2076
    %v2078 = vadd.f32 %v1815, %v1993
    %2079 = vadd.xlane.f32.xlu0 %v2078
    %v2080 = vpop.xlane.xlu0 %2079
    %v2081 = vadd.f32 %v1818, %v1996
    %2082 = vadd.xlane.f32.xlu0 %v2081
    %v2083 = vpop.xlane.xlu0 %2082
    %v2084 = vadd.f32 %v1820, %v1998
    %2085 = vadd.xlane.f32.xlu0 %v2084
    %v2086 = vpop.xlane.xlu0 %2085
    %v2087 = vadd.f32 %v1823, %v2001
    %2088 = vadd.xlane.f32.xlu0 %v2087
    %v2089 = vpop.xlane.xlu0 %2088
    %v2090 = vadd.f32 %v1825, %v2003
    %2091 = vadd.xlane.f32.xlu0 %v2090
    %v2092 = vpop.xlane.xlu0 %2091
    %v2093 = vadd.f32 %v1828, %v2006
    %2094 = vadd.xlane.f32.xlu0 %v2093
    %v2095 = vpop.xlane.xlu0 %2094
    %v2096 = vadd.f32 %v1830, %v2008
    %2097 = vadd.xlane.f32.xlu0 %v2096
    %v2098 = vpop.xlane.xlu0 %2097
    %v2099 = vadd.f32 %v1833, %v2011
    %2100 = vadd.xlane.f32.xlu0 %v2099
    %v2101 = vpop.xlane.xlu0 %2100
    %v2102 = vadd.f32 %v1835, %v2013
    %2103 = vadd.xlane.f32.xlu0 %v2102
    %v2104 = vpop.xlane.xlu0 %2103
    %v2105 = vadd.f32 %v1838, %v2016
    %2106 = vadd.xlane.f32.xlu0 %v2105
    %v2107 = vpop.xlane.xlu0 %2106
    %v2108 = vadd.f32 %v1840, %v2018
    %2109 = vadd.xlane.f32.xlu0 %v2108
    %v2110 = vpop.xlane.xlu0 %2109
    %v2111 = vadd.f32 %v1843, %v2021
    %2112 = vadd.xlane.f32.xlu0 %v2111
    %v2113 = vpop.xlane.xlu0 %2112
    %v2114 = vadd.f32 %v1845, %v2023
    %2115 = vadd.xlane.f32.xlu0 %v2114
    %v2116 = vpop.xlane.xlu0 %2115
    %v2117 = vadd.f32 %v1848, %v2026
    %2118 = vadd.xlane.f32.xlu0 %v2117
    %v2119 = vpop.xlane.xlu0 %2118
    %v2120 = vadd.f32 %v1850, %v2028
    %2121 = vadd.xlane.f32.xlu0 %v2120
    %v2122 = vpop.xlane.xlu0 %2121
    %v2123 = vadd.f32 %v1853, %v2031
    %2124 = vadd.xlane.f32.xlu0 %v2123
    %v2125 = vpop.xlane.xlu0 %2124
    %v2126 = vadd.f32 %v1855, %v2033
    %2127 = vadd.xlane.f32.xlu0 %v2126
    %v2128 = vpop.xlane.xlu0 %2127
    %v2129 = vadd.f32 %v1858, %v2036
    %2130 = vadd.xlane.f32.xlu0 %v2129
    %v2131 = vpop.xlane.xlu0 %2130
    %v2132 = vadd.f32 %v1860, %v2038
    %2133 = vadd.xlane.f32.xlu0 %v2132
    %v2134 = vpop.xlane.xlu0 %2133
    %v2135 = vadd.f32 %v1863, %v2041
    %2136 = vadd.xlane.f32.xlu0 %v2135
    %v2137 = vpop.xlane.xlu0 %2136
    %v2138 = vadd.f32 %v1865, %v2043
    %2139 = vadd.xlane.f32.xlu0 %v2138
    %v2140 = vpop.xlane.xlu0 %2139
    %v2141 = vadd.f32 %v1868, %v2046
    %2142 = vadd.xlane.f32.xlu0 %v2141
    %v2143 = vpop.xlane.xlu0 %2142
    %v2144 = vadd.f32 %v1870, %v2048
    %2145 = vadd.xlane.f32.xlu0 %v2144
    %v2146 = vpop.xlane.xlu0 %2145
    %v2147 = vadd.f32 %v1873, %v2051
    %2148 = vadd.xlane.f32.xlu0 %v2147
    %v2149 = vpop.xlane.xlu0 %2148
    %v2150 = vadd.f32 %v1875, %v2053
    %2151 = vadd.xlane.f32.xlu0 %v2150
    %v2152 = vpop.xlane.xlu0 %2151
    %v2153 = vadd.f32 %v1878, %v2056
    %2154 = vadd.xlane.f32.xlu0 %v2153
    %v2155 = vpop.xlane.xlu0 %2154
    %v2156 = vadd.f32 %v1880, %v2058
    %2157 = vadd.xlane.f32.xlu0 %v2156
    %v2158 = vpop.xlane.xlu0 %2157
    %v2159 = vadd.f32 %v1883, %v2061
    %2160 = vadd.xlane.f32.xlu0 %v2159
    %v2161 = vpop.xlane.xlu0 %2160
    %v2162 = vadd.f32 %v1885, %v2063
    %2163 = vadd.xlane.f32.xlu0 %v2162
    %v2164 = vpop.xlane.xlu0 %2163
    %v2165 = vmul.f32 %v2071, %v507
    %v2166 = vmul.f32 %v2074, %v507
    %v2167 = vmul.f32 %v2077, %v507
    %v2168 = vmul.f32 %v2080, %v507
    %v2169 = vmul.f32 %v2083, %v507
    %v2170 = vmul.f32 %v2086, %v507
    %v2171 = vmul.f32 %v2089, %v507
    %v2172 = vmul.f32 %v2092, %v507
    %v2173 = vmul.f32 %v2095, %v507
    %v2174 = vmul.f32 %v2098, %v507
    %v2175 = vmul.f32 %v2101, %v507
    %v2176 = vmul.f32 %v2104, %v507
    %v2177 = vmul.f32 %v2107, %v507
    %v2178 = vmul.f32 %v2110, %v507
    %v2179 = vmul.f32 %v2113, %v507
    %v2180 = vmul.f32 %v2116, %v507
    %v2181 = vmul.f32 %v2119, %v507
    %v2182 = vmul.f32 %v2122, %v507
    %v2183 = vmul.f32 %v2125, %v507
    %v2184 = vmul.f32 %v2128, %v507
    %v2185 = vmul.f32 %v2131, %v507
    %v2186 = vmul.f32 %v2134, %v507
    %v2187 = vmul.f32 %v2137, %v507
    %v2188 = vmul.f32 %v2140, %v507
    %v2189 = vmul.f32 %v2143, %v507
    %v2190 = vmul.f32 %v2146, %v507
    %v2191 = vmul.f32 %v2149, %v507
    %v2192 = vmul.f32 %v2152, %v507
    %v2193 = vmul.f32 %v2155, %v507
    %v2194 = vmul.f32 %v2158, %v507
    %v2195 = vmul.f32 %v2161, %v507
    %v2196 = vmul.f32 %v2164, %v507
    %v2197 = vmul.f32 %v1808, %v1808
    %v2198 = vmul.f32 %v1986, %v1986
    %v2199 = vmul.f32 %v1810, %v1810
    %v2200 = vmul.f32 %v1988, %v1988
    %v2201 = vmul.f32 %v1813, %v1813
    %v2202 = vmul.f32 %v1991, %v1991
    %v2203 = vmul.f32 %v1815, %v1815
    %v2204 = vmul.f32 %v1993, %v1993
    %v2205 = vmul.f32 %v1818, %v1818
    %v2206 = vmul.f32 %v1996, %v1996
    %v2207 = vmul.f32 %v1820, %v1820
    %v2208 = vmul.f32 %v1998, %v1998
    %v2209 = vmul.f32 %v1823, %v1823
    %v2210 = vmul.f32 %v2001, %v2001
    %v2211 = vmul.f32 %v1825, %v1825
    %v2212 = vmul.f32 %v2003, %v2003
    %v2213 = vmul.f32 %v1828, %v1828
    %v2214 = vmul.f32 %v2006, %v2006
    %v2215 = vmul.f32 %v1830, %v1830
    %v2216 = vmul.f32 %v2008, %v2008
    %v2217 = vmul.f32 %v1833, %v1833
    %v2218 = vmul.f32 %v2011, %v2011
    %v2219 = vmul.f32 %v1835, %v1835
    %v2220 = vmul.f32 %v2013, %v2013
    %v2221 = vmul.f32 %v1838, %v1838
    %v2222 = vmul.f32 %v2016, %v2016
    %v2223 = vmul.f32 %v1840, %v1840
    %v2224 = vmul.f32 %v2018, %v2018
    %v2225 = vmul.f32 %v1843, %v1843
    %v2226 = vmul.f32 %v2021, %v2021
    %v2227 = vmul.f32 %v1845, %v1845
    %v2228 = vmul.f32 %v2023, %v2023
    %v2229 = vmul.f32 %v1848, %v1848
    %v2230 = vmul.f32 %v2026, %v2026
    %v2231 = vmul.f32 %v1850, %v1850
    %v2232 = vmul.f32 %v2028, %v2028
    %v2233 = vmul.f32 %v1853, %v1853
    %v2234 = vmul.f32 %v2031, %v2031
    %v2235 = vmul.f32 %v1855, %v1855
    %v2236 = vmul.f32 %v2033, %v2033
    %v2237 = vmul.f32 %v1858, %v1858
    %v2238 = vmul.f32 %v2036, %v2036
    %v2239 = vmul.f32 %v1860, %v1860
    %v2240 = vmul.f32 %v2038, %v2038
    %v2241 = vmul.f32 %v1863, %v1863
    %v2242 = vmul.f32 %v2041, %v2041
    %v2243 = vmul.f32 %v1865, %v1865
    %v2244 = vmul.f32 %v2043, %v2043
    %v2245 = vmul.f32 %v1868, %v1868
    %v2246 = vmul.f32 %v2046, %v2046
    %v2247 = vmul.f32 %v1870, %v1870
    %v2248 = vmul.f32 %v2048, %v2048
    %v2249 = vmul.f32 %v1873, %v1873
    %v2250 = vmul.f32 %v2051, %v2051
    %v2251 = vmul.f32 %v1875, %v1875
    %v2252 = vmul.f32 %v2053, %v2053
    %v2253 = vmul.f32 %v1878, %v1878
    %v2254 = vmul.f32 %v2056, %v2056
    %v2255 = vmul.f32 %v1880, %v1880
    %v2256 = vmul.f32 %v2058, %v2058
    %v2257 = vmul.f32 %v1883, %v1883
    %v2258 = vmul.f32 %v2061, %v2061
    %v2259 = vmul.f32 %v1885, %v1885
    %v2260 = vmul.f32 %v2063, %v2063
    %v2261 = vadd.f32 %v2197, %v2198
    %2262 = vadd.xlane.f32.xlu0 %v2261
    %v2263 = vpop.xlane.xlu0 %2262
    %v2264 = vadd.f32 %v2199, %v2200
    %2265 = vadd.xlane.f32.xlu0 %v2264
    %v2266 = vpop.xlane.xlu0 %2265
    %v2267 = vadd.f32 %v2201, %v2202
    %2268 = vadd.xlane.f32.xlu0 %v2267
    %v2269 = vpop.xlane.xlu0 %2268
    %v2270 = vadd.f32 %v2203, %v2204
    %2271 = vadd.xlane.f32.xlu0 %v2270
    %v2272 = vpop.xlane.xlu0 %2271
    %v2273 = vadd.f32 %v2205, %v2206
    %2274 = vadd.xlane.f32.xlu0 %v2273
    %v2275 = vpop.xlane.xlu0 %2274
    %v2276 = vadd.f32 %v2207, %v2208
    %2277 = vadd.xlane.f32.xlu0 %v2276
    %v2278 = vpop.xlane.xlu0 %2277
    %v2279 = vadd.f32 %v2209, %v2210
    %2280 = vadd.xlane.f32.xlu0 %v2279
    %v2281 = vpop.xlane.xlu0 %2280
    %v2282 = vadd.f32 %v2211, %v2212
    %2283 = vadd.xlane.f32.xlu0 %v2282
    %v2284 = vpop.xlane.xlu0 %2283
    %v2285 = vadd.f32 %v2213, %v2214
    %2286 = vadd.xlane.f32.xlu0 %v2285
    %v2287 = vpop.xlane.xlu0 %2286
    %v2288 = vadd.f32 %v2215, %v2216
    %2289 = vadd.xlane.f32.xlu0 %v2288
    %v2290 = vpop.xlane.xlu0 %2289
    %v2291 = vadd.f32 %v2217, %v2218
    %2292 = vadd.xlane.f32.xlu0 %v2291
    %v2293 = vpop.xlane.xlu0 %2292
    %v2294 = vadd.f32 %v2219, %v2220
    %2295 = vadd.xlane.f32.xlu0 %v2294
    %v2296 = vpop.xlane.xlu0 %2295
    %v2297 = vadd.f32 %v2221, %v2222
    %2298 = vadd.xlane.f32.xlu0 %v2297
    %v2299 = vpop.xlane.xlu0 %2298
    %v2300 = vadd.f32 %v2223, %v2224
    %2301 = vadd.xlane.f32.xlu0 %v2300
    %v2302 = vpop.xlane.xlu0 %2301
    %v2303 = vadd.f32 %v2225, %v2226
    %2304 = vadd.xlane.f32.xlu0 %v2303
    %v2305 = vpop.xlane.xlu0 %2304
    %v2306 = vadd.f32 %v2227, %v2228
    %2307 = vadd.xlane.f32.xlu0 %v2306
    %v2308 = vpop.xlane.xlu0 %2307
    %v2309 = vadd.f32 %v2229, %v2230
    %2310 = vadd.xlane.f32.xlu0 %v2309
    %v2311 = vpop.xlane.xlu0 %2310
    %v2312 = vadd.f32 %v2231, %v2232
    %2313 = vadd.xlane.f32.xlu0 %v2312
    %v2314 = vpop.xlane.xlu0 %2313
    %v2315 = vadd.f32 %v2233, %v2234
    %2316 = vadd.xlane.f32.xlu0 %v2315
    %v2317 = vpop.xlane.xlu0 %2316
    %v2318 = vadd.f32 %v2235, %v2236
    %2319 = vadd.xlane.f32.xlu0 %v2318
    %v2320 = vpop.xlane.xlu0 %2319
    %v2321 = vadd.f32 %v2237, %v2238
    %2322 = vadd.xlane.f32.xlu0 %v2321
    %v2323 = vpop.xlane.xlu0 %2322
    %v2324 = vadd.f32 %v2239, %v2240
    %2325 = vadd.xlane.f32.xlu0 %v2324
    %v2326 = vpop.xlane.xlu0 %2325
    %v2327 = vadd.f32 %v2241, %v2242
    %2328 = vadd.xlane.f32.xlu0 %v2327
    %v2329 = vpop.xlane.xlu0 %2328
    %v2330 = vadd.f32 %v2243, %v2244
    %2331 = vadd.xlane.f32.xlu0 %v2330
    %v2332 = vpop.xlane.xlu0 %2331
    %v2333 = vadd.f32 %v2245, %v2246
    %2334 = vadd.xlane.f32.xlu0 %v2333
    %v2335 = vpop.xlane.xlu0 %2334
    %v2336 = vadd.f32 %v2247, %v2248
    %2337 = vadd.xlane.f32.xlu0 %v2336
    %v2338 = vpop.xlane.xlu0 %2337
    %v2339 = vadd.f32 %v2249, %v2250
    %2340 = vadd.xlane.f32.xlu0 %v2339
    %v2341 = vpop.xlane.xlu0 %2340
    %v2342 = vadd.f32 %v2251, %v2252
    %2343 = vadd.xlane.f32.xlu0 %v2342
    %v2344 = vpop.xlane.xlu0 %2343
    %v2345 = vadd.f32 %v2253, %v2254
    %2346 = vadd.xlane.f32.xlu0 %v2345
    %v2347 = vpop.xlane.xlu0 %2346
    %v2348 = vadd.f32 %v2255, %v2256
    %2349 = vadd.xlane.f32.xlu0 %v2348
    %v2350 = vpop.xlane.xlu0 %2349
    %v2351 = vadd.f32 %v2257, %v2258
    %2352 = vadd.xlane.f32.xlu0 %v2351
    %v2353 = vpop.xlane.xlu0 %2352
    %v2354 = vadd.f32 %v2259, %v2260
    %2355 = vadd.xlane.f32.xlu0 %v2354
    %v2356 = vpop.xlane.xlu0 %2355
    %v2357 = vmul.f32 %v2263, %v507
    %v2358 = vmul.f32 %v2266, %v507
    %v2359 = vmul.f32 %v2269, %v507
    %v2360 = vmul.f32 %v2272, %v507
    %v2361 = vmul.f32 %v2275, %v507
    %v2362 = vmul.f32 %v2278, %v507
    %v2363 = vmul.f32 %v2281, %v507
    %v2364 = vmul.f32 %v2284, %v507
    %v2365 = vmul.f32 %v2287, %v507
    %v2366 = vmul.f32 %v2290, %v507
    %v2367 = vmul.f32 %v2293, %v507
    %v2368 = vmul.f32 %v2296, %v507
    %v2369 = vmul.f32 %v2299, %v507
    %v2370 = vmul.f32 %v2302, %v507
    %v2371 = vmul.f32 %v2305, %v507
    %v2372 = vmul.f32 %v2308, %v507
    %v2373 = vmul.f32 %v2311, %v507
    %v2374 = vmul.f32 %v2314, %v507
    %v2375 = vmul.f32 %v2317, %v507
    %v2376 = vmul.f32 %v2320, %v507
    %v2377 = vmul.f32 %v2323, %v507
    %v2378 = vmul.f32 %v2326, %v507
    %v2379 = vmul.f32 %v2329, %v507
    %v2380 = vmul.f32 %v2332, %v507
    %v2381 = vmul.f32 %v2335, %v507
    %v2382 = vmul.f32 %v2338, %v507
    %v2383 = vmul.f32 %v2341, %v507
    %v2384 = vmul.f32 %v2344, %v507
    %v2385 = vmul.f32 %v2347, %v507
    %v2386 = vmul.f32 %v2350, %v507
    %v2387 = vmul.f32 %v2353, %v507
    %v2388 = vmul.f32 %v2356, %v507
    %v2389 = vmul.f32 %v2165, %v2165
    %v2390 = vmul.f32 %v2166, %v2166
    %v2391 = vmul.f32 %v2167, %v2167
    %v2392 = vmul.f32 %v2168, %v2168
    %v2393 = vmul.f32 %v2169, %v2169
    %v2394 = vmul.f32 %v2170, %v2170
    %v2395 = vmul.f32 %v2171, %v2171
    %v2396 = vmul.f32 %v2172, %v2172
    %v2397 = vmul.f32 %v2173, %v2173
    %v2398 = vmul.f32 %v2174, %v2174
    %v2399 = vmul.f32 %v2175, %v2175
    %v2400 = vmul.f32 %v2176, %v2176
    %v2401 = vmul.f32 %v2177, %v2177
    %v2402 = vmul.f32 %v2178, %v2178
    %v2403 = vmul.f32 %v2179, %v2179
    %v2404 = vmul.f32 %v2180, %v2180
    %v2405 = vmul.f32 %v2181, %v2181
    %v2406 = vmul.f32 %v2182, %v2182
    %v2407 = vmul.f32 %v2183, %v2183
    %v2408 = vmul.f32 %v2184, %v2184
    %v2409 = vmul.f32 %v2185, %v2185
    %v2410 = vmul.f32 %v2186, %v2186
    %v2411 = vmul.f32 %v2187, %v2187
    %v2412 = vmul.f32 %v2188, %v2188
    %v2413 = vmul.f32 %v2189, %v2189
    %v2414 = vmul.f32 %v2190, %v2190
    %v2415 = vmul.f32 %v2191, %v2191
    %v2416 = vmul.f32 %v2192, %v2192
    %v2417 = vmul.f32 %v2193, %v2193
    %v2418 = vmul.f32 %v2194, %v2194
    %v2419 = vmul.f32 %v2195, %v2195
    %v2420 = vmul.f32 %v2196, %v2196
    %v2421 = vsub.f32 %v2357, %v2389
    %v2422 = vsub.f32 %v2358, %v2390
    %v2423 = vsub.f32 %v2359, %v2391
    %v2424 = vsub.f32 %v2360, %v2392
    %v2425 = vsub.f32 %v2361, %v2393
    %v2426 = vsub.f32 %v2362, %v2394
    %v2427 = vsub.f32 %v2363, %v2395
    %v2428 = vsub.f32 %v2364, %v2396
    %v2429 = vsub.f32 %v2365, %v2397
    %v2430 = vsub.f32 %v2366, %v2398
    %v2431 = vsub.f32 %v2367, %v2399
    %v2432 = vsub.f32 %v2368, %v2400
    %v2433 = vsub.f32 %v2369, %v2401
    %v2434 = vsub.f32 %v2370, %v2402
    %v2435 = vsub.f32 %v2371, %v2403
    %v2436 = vsub.f32 %v2372, %v2404
    %v2437 = vsub.f32 %v2373, %v2405
    %v2438 = vsub.f32 %v2374, %v2406
    %v2439 = vsub.f32 %v2375, %v2407
    %v2440 = vsub.f32 %v2376, %v2408
    %v2441 = vsub.f32 %v2377, %v2409
    %v2442 = vsub.f32 %v2378, %v2410
    %v2443 = vsub.f32 %v2379, %v2411
    %v2444 = vsub.f32 %v2380, %v2412
    %v2445 = vsub.f32 %v2381, %v2413
    %v2446 = vsub.f32 %v2382, %v2414
    %v2447 = vsub.f32 %v2383, %v2415
    %v2448 = vsub.f32 %v2384, %v2416
    %v2449 = vsub.f32 %v2385, %v2417
    %v2450 = vsub.f32 %v2386, %v2418
    %v2451 = vsub.f32 %v2387, %v2419
    %v2452 = vsub.f32 %v2388, %v2420
    %v2453 = vsub.f32 %v1808, %v2165
    %v2454 = vsub.f32 %v1986, %v2165
    %v2455 = vsub.f32 %v1810, %v2166
    %v2456 = vsub.f32 %v1988, %v2166
    %v2457 = vsub.f32 %v1813, %v2167
    %v2458 = vsub.f32 %v1991, %v2167
    %v2459 = vsub.f32 %v1815, %v2168
    %v2460 = vsub.f32 %v1993, %v2168
    %v2461 = vsub.f32 %v1818, %v2169
    %v2462 = vsub.f32 %v1996, %v2169
    %v2463 = vsub.f32 %v1820, %v2170
    %v2464 = vsub.f32 %v1998, %v2170
    %v2465 = vsub.f32 %v1823, %v2171
    %v2466 = vsub.f32 %v2001, %v2171
    %v2467 = vsub.f32 %v1825, %v2172
    %v2468 = vsub.f32 %v2003, %v2172
    %v2469 = vsub.f32 %v1828, %v2173
    %v2470 = vsub.f32 %v2006, %v2173
    %v2471 = vsub.f32 %v1830, %v2174
    %v2472 = vsub.f32 %v2008, %v2174
    %v2473 = vsub.f32 %v1833, %v2175
    %v2474 = vsub.f32 %v2011, %v2175
    %v2475 = vsub.f32 %v1835, %v2176
    %v2476 = vsub.f32 %v2013, %v2176
    %v2477 = vsub.f32 %v1838, %v2177
    %v2478 = vsub.f32 %v2016, %v2177
    %v2479 = vsub.f32 %v1840, %v2178
    %v2480 = vsub.f32 %v2018, %v2178
    %v2481 = vsub.f32 %v1843, %v2179
    %v2482 = vsub.f32 %v2021, %v2179
    %v2483 = vsub.f32 %v1845, %v2180
    %v2484 = vsub.f32 %v2023, %v2180
    %v2485 = vsub.f32 %v1848, %v2181
    %v2486 = vsub.f32 %v2026, %v2181
    %v2487 = vsub.f32 %v1850, %v2182
    %v2488 = vsub.f32 %v2028, %v2182
    %v2489 = vsub.f32 %v1853, %v2183
    %v2490 = vsub.f32 %v2031, %v2183
    %v2491 = vsub.f32 %v1855, %v2184
    %v2492 = vsub.f32 %v2033, %v2184
    %v2493 = vsub.f32 %v1858, %v2185
    %v2494 = vsub.f32 %v2036, %v2185
    %v2495 = vsub.f32 %v1860, %v2186
    %v2496 = vsub.f32 %v2038, %v2186
    %v2497 = vsub.f32 %v1863, %v2187
    %v2498 = vsub.f32 %v2041, %v2187
    %v2499 = vsub.f32 %v1865, %v2188
    %v2500 = vsub.f32 %v2043, %v2188
    %v2501 = vsub.f32 %v1868, %v2189
    %v2502 = vsub.f32 %v2046, %v2189
    %v2503 = vsub.f32 %v1870, %v2190
    %v2504 = vsub.f32 %v2048, %v2190
    %v2505 = vsub.f32 %v1873, %v2191
    %v2506 = vsub.f32 %v2051, %v2191
    %v2507 = vsub.f32 %v1875, %v2192
    %v2508 = vsub.f32 %v2053, %v2192
    %v2509 = vsub.f32 %v1878, %v2193
    %v2510 = vsub.f32 %v2056, %v2193
    %v2511 = vsub.f32 %v1880, %v2194
    %v2512 = vsub.f32 %v2058, %v2194
    %v2513 = vsub.f32 %v1883, %v2195
    %v2514 = vsub.f32 %v2061, %v2195
    %v2515 = vsub.f32 %v1885, %v2196
    %v2516 = vsub.f32 %v2063, %v2196
    %v2517 = vadd.f32 %v2421, 1e-05
    %v2518 = vadd.f32 %v2422, 1e-05
    %v2519 = vadd.f32 %v2423, 1e-05
    %v2520 = vadd.f32 %v2424, 1e-05
    %v2521 = vadd.f32 %v2425, 1e-05
    %v2522 = vadd.f32 %v2426, 1e-05
    %v2523 = vadd.f32 %v2427, 1e-05
    %v2524 = vadd.f32 %v2428, 1e-05
    %v2525 = vadd.f32 %v2429, 1e-05
    %v2526 = vadd.f32 %v2430, 1e-05
    %v2527 = vadd.f32 %v2431, 1e-05
    %v2528 = vadd.f32 %v2432, 1e-05
    %v2529 = vadd.f32 %v2433, 1e-05
    %v2530 = vadd.f32 %v2434, 1e-05
    %v2531 = vadd.f32 %v2435, 1e-05
    %v2532 = vadd.f32 %v2436, 1e-05
    %v2533 = vadd.f32 %v2437, 1e-05
    %v2534 = vadd.f32 %v2438, 1e-05
    %v2535 = vadd.f32 %v2439, 1e-05
    %v2536 = vadd.f32 %v2440, 1e-05
    %v2537 = vadd.f32 %v2441, 1e-05
    %v2538 = vadd.f32 %v2442, 1e-05
    %v2539 = vadd.f32 %v2443, 1e-05
    %v2540 = vadd.f32 %v2444, 1e-05
    %v2541 = vadd.f32 %v2445, 1e-05
    %v2542 = vadd.f32 %v2446, 1e-05
    %v2543 = vadd.f32 %v2447, 1e-05
    %v2544 = vadd.f32 %v2448, 1e-05
    %v2545 = vadd.f32 %v2449, 1e-05
    %v2546 = vadd.f32 %v2450, 1e-05
    %v2547 = vadd.f32 %v2451, 1e-05
    %v2548 = vadd.f32 %v2452, 1e-05
    %v2549 = vrsqrt.pop %v2517
    %v2550 = vmul.f32 %v2549, %v2517
    %v2551 = vmul.f32 %v2550, %v2549
    %v2552 = vmul.f32 0.5, %v2551
    %v2553 = vsub.f32 1.5, %v2552
    %v2554 = vmul.f32 %v2549, %v2553
    %vm2555 = vweird.f32 %v2517
    %vm2556 = vweird.f32 %v2549
    %vm2557 = vmor %vm2555, %vm2556
    %v2558 = vsel %vm2557, %v2549, %v2554
    %v2559 = vrsqrt.pop %v2518
    %v2560 = vmul.f32 %v2559, %v2518
    %v2561 = vmul.f32 %v2560, %v2559
    %v2562 = vmul.f32 0.5, %v2561
    %v2563 = vsub.f32 1.5, %v2562
    %v2564 = vmul.f32 %v2559, %v2563
    %vm2565 = vweird.f32 %v2518
    %vm2566 = vweird.f32 %v2559
    %vm2567 = vmor %vm2565, %vm2566
    %v2568 = vsel %vm2567, %v2559, %v2564
    %v2569 = vrsqrt.pop %v2519
    %v2570 = vmul.f32 %v2569, %v2519
    %v2571 = vmul.f32 %v2570, %v2569
    %v2572 = vmul.f32 0.5, %v2571
    %v2573 = vsub.f32 1.5, %v2572
    %v2574 = vmul.f32 %v2569, %v2573
    %vm2575 = vweird.f32 %v2519
    %vm2576 = vweird.f32 %v2569
    %vm2577 = vmor %vm2575, %vm2576
    %v2578 = vsel %vm2577, %v2569, %v2574
    %v2579 = vrsqrt.pop %v2520
    %v2580 = vmul.f32 %v2579, %v2520
    %v2581 = vmul.f32 %v2580, %v2579
    %v2582 = vmul.f32 0.5, %v2581
    %v2583 = vsub.f32 1.5, %v2582
    %v2584 = vmul.f32 %v2579, %v2583
    %vm2585 = vweird.f32 %v2520
    %vm2586 = vweird.f32 %v2579
    %vm2587 = vmor %vm2585, %vm2586
    %v2588 = vsel %vm2587, %v2579, %v2584
    %v2589 = vrsqrt.pop %v2521
    %v2590 = vmul.f32 %v2589, %v2521
    %v2591 = vmul.f32 %v2590, %v2589
    %v2592 = vmul.f32 0.5, %v2591
    %v2593 = vsub.f32 1.5, %v2592
    %v2594 = vmul.f32 %v2589, %v2593
    %vm2595 = vweird.f32 %v2521
    %vm2596 = vweird.f32 %v2589
    %vm2597 = vmor %vm2595, %vm2596
    %v2598 = vsel %vm2597, %v2589, %v2594
    %v2599 = vrsqrt.pop %v2522
    %v2600 = vmul.f32 %v2599, %v2522
    %v2601 = vmul.f32 %v2600, %v2599
    %v2602 = vmul.f32 0.5, %v2601
    %v2603 = vsub.f32 1.5, %v2602
    %v2604 = vmul.f32 %v2599, %v2603
    %vm2605 = vweird.f32 %v2522
    %vm2606 = vweird.f32 %v2599
    %vm2607 = vmor %vm2605, %vm2606
    %v2608 = vsel %vm2607, %v2599, %v2604
    %v2609 = vrsqrt.pop %v2523
    %v2610 = vmul.f32 %v2609, %v2523
    %v2611 = vmul.f32 %v2610, %v2609
    %v2612 = vmul.f32 0.5, %v2611
    %v2613 = vsub.f32 1.5, %v2612
    %v2614 = vmul.f32 %v2609, %v2613
    %vm2615 = vweird.f32 %v2523
    %vm2616 = vweird.f32 %v2609
    %vm2617 = vmor %vm2615, %vm2616
    %v2618 = vsel %vm2617, %v2609, %v2614
    %v2619 = vrsqrt.pop %v2524
    %v2620 = vmul.f32 %v2619, %v2524
    %v2621 = vmul.f32 %v2620, %v2619
    %v2622 = vmul.f32 0.5, %v2621
    %v2623 = vsub.f32 1.5, %v2622
    %v2624 = vmul.f32 %v2619, %v2623
    %vm2625 = vweird.f32 %v2524
    %vm2626 = vweird.f32 %v2619
    %vm2627 = vmor %vm2625, %vm2626
    %v2628 = vsel %vm2627, %v2619, %v2624
    %v2629 = vrsqrt.pop %v2525
    %v2630 = vmul.f32 %v2629, %v2525
    %v2631 = vmul.f32 %v2630, %v2629
    %v2632 = vmul.f32 0.5, %v2631
    %v2633 = vsub.f32 1.5, %v2632
    %v2634 = vmul.f32 %v2629, %v2633
    %vm2635 = vweird.f32 %v2525
    %vm2636 = vweird.f32 %v2629
    %vm2637 = vmor %vm2635, %vm2636
    %v2638 = vsel %vm2637, %v2629, %v2634
    %v2639 = vrsqrt.pop %v2526
    %v2640 = vmul.f32 %v2639, %v2526
    %v2641 = vmul.f32 %v2640, %v2639
    %v2642 = vmul.f32 0.5, %v2641
    %v2643 = vsub.f32 1.5, %v2642
    %v2644 = vmul.f32 %v2639, %v2643
    %vm2645 = vweird.f32 %v2526
    %vm2646 = vweird.f32 %v2639
    %vm2647 = vmor %vm2645, %vm2646
    %v2648 = vsel %vm2647, %v2639, %v2644
    %v2649 = vrsqrt.pop %v2527
    %v2650 = vmul.f32 %v2649, %v2527
    %v2651 = vmul.f32 %v2650, %v2649
    %v2652 = vmul.f32 0.5, %v2651
    %v2653 = vsub.f32 1.5, %v2652
    %v2654 = vmul.f32 %v2649, %v2653
    %vm2655 = vweird.f32 %v2527
    %vm2656 = vweird.f32 %v2649
    %vm2657 = vmor %vm2655, %vm2656
    %v2658 = vsel %vm2657, %v2649, %v2654
    %v2659 = vrsqrt.pop %v2528
    %v2660 = vmul.f32 %v2659, %v2528
    %v2661 = vmul.f32 %v2660, %v2659
    %v2662 = vmul.f32 0.5, %v2661
    %v2663 = vsub.f32 1.5, %v2662
    %v2664 = vmul.f32 %v2659, %v2663
    %vm2665 = vweird.f32 %v2528
    %vm2666 = vweird.f32 %v2659
    %vm2667 = vmor %vm2665, %vm2666
    %v2668 = vsel %vm2667, %v2659, %v2664
    %v2669 = vrsqrt.pop %v2529
    %v2670 = vmul.f32 %v2669, %v2529
    %v2671 = vmul.f32 %v2670, %v2669
    %v2672 = vmul.f32 0.5, %v2671
    %v2673 = vsub.f32 1.5, %v2672
    %v2674 = vmul.f32 %v2669, %v2673
    %vm2675 = vweird.f32 %v2529
    %vm2676 = vweird.f32 %v2669
    %vm2677 = vmor %vm2675, %vm2676
    %v2678 = vsel %vm2677, %v2669, %v2674
    %v2679 = vrsqrt.pop %v2530
    %v2680 = vmul.f32 %v2679, %v2530
    %v2681 = vmul.f32 %v2680, %v2679
    %v2682 = vmul.f32 0.5, %v2681
    %v2683 = vsub.f32 1.5, %v2682
    %v2684 = vmul.f32 %v2679, %v2683
    %vm2685 = vweird.f32 %v2530
    %vm2686 = vweird.f32 %v2679
    %vm2687 = vmor %vm2685, %vm2686
    %v2688 = vsel %vm2687, %v2679, %v2684
    %v2689 = vrsqrt.pop %v2531
    %v2690 = vmul.f32 %v2689, %v2531
    %v2691 = vmul.f32 %v2690, %v2689
    %v2692 = vmul.f32 0.5, %v2691
    %v2693 = vsub.f32 1.5, %v2692
    %v2694 = vmul.f32 %v2689, %v2693
    %vm2695 = vweird.f32 %v2531
    %vm2696 = vweird.f32 %v2689
    %vm2697 = vmor %vm2695, %vm2696
    %v2698 = vsel %vm2697, %v2689, %v2694
    %v2699 = vrsqrt.pop %v2532
    %v2700 = vmul.f32 %v2699, %v2532
    %v2701 = vmul.f32 %v2700, %v2699
    %v2702 = vmul.f32 0.5, %v2701
    %v2703 = vsub.f32 1.5, %v2702
    %v2704 = vmul.f32 %v2699, %v2703
    %vm2705 = vweird.f32 %v2532
    %vm2706 = vweird.f32 %v2699
    %vm2707 = vmor %vm2705, %vm2706
    %v2708 = vsel %vm2707, %v2699, %v2704
    %v2709 = vrsqrt.pop %v2533
    %v2710 = vmul.f32 %v2709, %v2533
    %v2711 = vmul.f32 %v2710, %v2709
    %v2712 = vmul.f32 0.5, %v2711
    %v2713 = vsub.f32 1.5, %v2712
    %v2714 = vmul.f32 %v2709, %v2713
    %vm2715 = vweird.f32 %v2533
    %vm2716 = vweird.f32 %v2709
    %vm2717 = vmor %vm2715, %vm2716
    %v2718 = vsel %vm2717, %v2709, %v2714
    %v2719 = vrsqrt.pop %v2534
    %v2720 = vmul.f32 %v2719, %v2534
    %v2721 = vmul.f32 %v2720, %v2719
    %v2722 = vmul.f32 0.5, %v2721
    %v2723 = vsub.f32 1.5, %v2722
    %v2724 = vmul.f32 %v2719, %v2723
    %vm2725 = vweird.f32 %v2534
    %vm2726 = vweird.f32 %v2719
    %vm2727 = vmor %vm2725, %vm2726
    %v2728 = vsel %vm2727, %v2719, %v2724
    %v2729 = vrsqrt.pop %v2535
    %v2730 = vmul.f32 %v2729, %v2535
    %v2731 = vmul.f32 %v2730, %v2729
    %v2732 = vmul.f32 0.5, %v2731
    %v2733 = vsub.f32 1.5, %v2732
    %v2734 = vmul.f32 %v2729, %v2733
    %vm2735 = vweird.f32 %v2535
    %vm2736 = vweird.f32 %v2729
    %vm2737 = vmor %vm2735, %vm2736
    %v2738 = vsel %vm2737, %v2729, %v2734
    %v2739 = vrsqrt.pop %v2536
    %v2740 = vmul.f32 %v2739, %v2536
    %v2741 = vmul.f32 %v2740, %v2739
    %v2742 = vmul.f32 0.5, %v2741
    %v2743 = vsub.f32 1.5, %v2742
    %v2744 = vmul.f32 %v2739, %v2743
    %vm2745 = vweird.f32 %v2536
    %vm2746 = vweird.f32 %v2739
    %vm2747 = vmor %vm2745, %vm2746
    %v2748 = vsel %vm2747, %v2739, %v2744
    %v2749 = vrsqrt.pop %v2537
    %v2750 = vmul.f32 %v2749, %v2537
    %v2751 = vmul.f32 %v2750, %v2749
    %v2752 = vmul.f32 0.5, %v2751
    %v2753 = vsub.f32 1.5, %v2752
    %v2754 = vmul.f32 %v2749, %v2753
    %vm2755 = vweird.f32 %v2537
    %vm2756 = vweird.f32 %v2749
    %vm2757 = vmor %vm2755, %vm2756
    %v2758 = vsel %vm2757, %v2749, %v2754
    %v2759 = vrsqrt.pop %v2538
    %v2760 = vmul.f32 %v2759, %v2538
    %v2761 = vmul.f32 %v2760, %v2759
    %v2762 = vmul.f32 0.5, %v2761
    %v2763 = vsub.f32 1.5, %v2762
    %v2764 = vmul.f32 %v2759, %v2763
    %vm2765 = vweird.f32 %v2538
    %vm2766 = vweird.f32 %v2759
    %vm2767 = vmor %vm2765, %vm2766
    %v2768 = vsel %vm2767, %v2759, %v2764
    %v2769 = vrsqrt.pop %v2539
    %v2770 = vmul.f32 %v2769, %v2539
    %v2771 = vmul.f32 %v2770, %v2769
    %v2772 = vmul.f32 0.5, %v2771
    %v2773 = vsub.f32 1.5, %v2772
    %v2774 = vmul.f32 %v2769, %v2773
    %vm2775 = vweird.f32 %v2539
    %vm2776 = vweird.f32 %v2769
    %vm2777 = vmor %vm2775, %vm2776
    %v2778 = vsel %vm2777, %v2769, %v2774
    %v2779 = vrsqrt.pop %v2540
    %v2780 = vmul.f32 %v2779, %v2540
    %v2781 = vmul.f32 %v2780, %v2779
    %v2782 = vmul.f32 0.5, %v2781
    %v2783 = vsub.f32 1.5, %v2782
    %v2784 = vmul.f32 %v2779, %v2783
    %vm2785 = vweird.f32 %v2540
    %vm2786 = vweird.f32 %v2779
    %vm2787 = vmor %vm2785, %vm2786
    %v2788 = vsel %vm2787, %v2779, %v2784
    %v2789 = vrsqrt.pop %v2541
    %v2790 = vmul.f32 %v2789, %v2541
    %v2791 = vmul.f32 %v2790, %v2789
    %v2792 = vmul.f32 0.5, %v2791
    %v2793 = vsub.f32 1.5, %v2792
    %v2794 = vmul.f32 %v2789, %v2793
    %vm2795 = vweird.f32 %v2541
    %vm2796 = vweird.f32 %v2789
    %vm2797 = vmor %vm2795, %vm2796
    %v2798 = vsel %vm2797, %v2789, %v2794
    %v2799 = vrsqrt.pop %v2542
    %v2800 = vmul.f32 %v2799, %v2542
    %v2801 = vmul.f32 %v2800, %v2799
    %v2802 = vmul.f32 0.5, %v2801
    %v2803 = vsub.f32 1.5, %v2802
    %v2804 = vmul.f32 %v2799, %v2803
    %vm2805 = vweird.f32 %v2542
    %vm2806 = vweird.f32 %v2799
    %vm2807 = vmor %vm2805, %vm2806
    %v2808 = vsel %vm2807, %v2799, %v2804
    %v2809 = vrsqrt.pop %v2543
    %v2810 = vmul.f32 %v2809, %v2543
    %v2811 = vmul.f32 %v2810, %v2809
    %v2812 = vmul.f32 0.5, %v2811
    %v2813 = vsub.f32 1.5, %v2812
    %v2814 = vmul.f32 %v2809, %v2813
    %vm2815 = vweird.f32 %v2543
    %vm2816 = vweird.f32 %v2809
    %vm2817 = vmor %vm2815, %vm2816
    %v2818 = vsel %vm2817, %v2809, %v2814
    %v2819 = vrsqrt.pop %v2544
    %v2820 = vmul.f32 %v2819, %v2544
    %v2821 = vmul.f32 %v2820, %v2819
    %v2822 = vmul.f32 0.5, %v2821
    %v2823 = vsub.f32 1.5, %v2822
    %v2824 = vmul.f32 %v2819, %v2823
    %vm2825 = vweird.f32 %v2544
    %vm2826 = vweird.f32 %v2819
    %vm2827 = vmor %vm2825, %vm2826
    %v2828 = vsel %vm2827, %v2819, %v2824
    %v2829 = vrsqrt.pop %v2545
    %v2830 = vmul.f32 %v2829, %v2545
    %v2831 = vmul.f32 %v2830, %v2829
    %v2832 = vmul.f32 0.5, %v2831
    %v2833 = vsub.f32 1.5, %v2832
    %v2834 = vmul.f32 %v2829, %v2833
    %vm2835 = vweird.f32 %v2545
    %vm2836 = vweird.f32 %v2829
    %vm2837 = vmor %vm2835, %vm2836
    %v2838 = vsel %vm2837, %v2829, %v2834
    %v2839 = vrsqrt.pop %v2546
    %v2840 = vmul.f32 %v2839, %v2546
    %v2841 = vmul.f32 %v2840, %v2839
    %v2842 = vmul.f32 0.5, %v2841
    %v2843 = vsub.f32 1.5, %v2842
    %v2844 = vmul.f32 %v2839, %v2843
    %vm2845 = vweird.f32 %v2546
    %vm2846 = vweird.f32 %v2839
    %vm2847 = vmor %vm2845, %vm2846
    %v2848 = vsel %vm2847, %v2839, %v2844
    %v2849 = vrsqrt.pop %v2547
    %v2850 = vmul.f32 %v2849, %v2547
    %v2851 = vmul.f32 %v2850, %v2849
    %v2852 = vmul.f32 0.5, %v2851
    %v2853 = vsub.f32 1.5, %v2852
    %v2854 = vmul.f32 %v2849, %v2853
    %vm2855 = vweird.f32 %v2547
    %vm2856 = vweird.f32 %v2849
    %vm2857 = vmor %vm2855, %vm2856
    %v2858 = vsel %vm2857, %v2849, %v2854
    %v2859 = vrsqrt.pop %v2548
    %v2860 = vmul.f32 %v2859, %v2548
    %v2861 = vmul.f32 %v2860, %v2859
    %v2862 = vmul.f32 0.5, %v2861
    %v2863 = vsub.f32 1.5, %v2862
    %v2864 = vmul.f32 %v2859, %v2863
    %vm2865 = vweird.f32 %v2548
    %vm2866 = vweird.f32 %v2859
    %vm2867 = vmor %vm2865, %vm2866
    %v2868 = vsel %vm2867, %v2859, %v2864
    %v2869 = vmul.f32 %v2453, %v2558
    %v2870 = vmul.f32 %v2454, %v2558
    %v2871 = vmul.f32 %v2455, %v2568
    %v2872 = vmul.f32 %v2456, %v2568
    %v2873 = vmul.f32 %v2457, %v2578
    %v2874 = vmul.f32 %v2458, %v2578
    %v2875 = vmul.f32 %v2459, %v2588
    %v2876 = vmul.f32 %v2460, %v2588
    %v2877 = vmul.f32 %v2461, %v2598
    %v2878 = vmul.f32 %v2462, %v2598
    %v2879 = vmul.f32 %v2463, %v2608
    %v2880 = vmul.f32 %v2464, %v2608
    %v2881 = vmul.f32 %v2465, %v2618
    %v2882 = vmul.f32 %v2466, %v2618
    %v2883 = vmul.f32 %v2467, %v2628
    %v2884 = vmul.f32 %v2468, %v2628
    %v2885 = vmul.f32 %v2469, %v2638
    %v2886 = vmul.f32 %v2470, %v2638
    %v2887 = vmul.f32 %v2471, %v2648
    %v2888 = vmul.f32 %v2472, %v2648
    %v2889 = vmul.f32 %v2473, %v2658
    %v2890 = vmul.f32 %v2474, %v2658
    %v2891 = vmul.f32 %v2475, %v2668
    %v2892 = vmul.f32 %v2476, %v2668
    %v2893 = vmul.f32 %v2477, %v2678
    %v2894 = vmul.f32 %v2478, %v2678
    %v2895 = vmul.f32 %v2479, %v2688
    %v2896 = vmul.f32 %v2480, %v2688
    %v2897 = vmul.f32 %v2481, %v2698
    %v2898 = vmul.f32 %v2482, %v2698
    %v2899 = vmul.f32 %v2483, %v2708
    %v2900 = vmul.f32 %v2484, %v2708
    %v2901 = vmul.f32 %v2485, %v2718
    %v2902 = vmul.f32 %v2486, %v2718
    %v2903 = vmul.f32 %v2487, %v2728
    %v2904 = vmul.f32 %v2488, %v2728
    %v2905 = vmul.f32 %v2489, %v2738
    %v2906 = vmul.f32 %v2490, %v2738
    %v2907 = vmul.f32 %v2491, %v2748
    %v2908 = vmul.f32 %v2492, %v2748
    %v2909 = vmul.f32 %v2493, %v2758
    %v2910 = vmul.f32 %v2494, %v2758
    %v2911 = vmul.f32 %v2495, %v2768
    %v2912 = vmul.f32 %v2496, %v2768
    %v2913 = vmul.f32 %v2497, %v2778
    %v2914 = vmul.f32 %v2498, %v2778
    %v2915 = vmul.f32 %v2499, %v2788
    %v2916 = vmul.f32 %v2500, %v2788
    %v2917 = vmul.f32 %v2501, %v2798
    %v2918 = vmul.f32 %v2502, %v2798
    %v2919 = vmul.f32 %v2503, %v2808
    %v2920 = vmul.f32 %v2504, %v2808
    %v2921 = vmul.f32 %v2505, %v2818
    %v2922 = vmul.f32 %v2506, %v2818
    %v2923 = vmul.f32 %v2507, %v2828
    %v2924 = vmul.f32 %v2508, %v2828
    %v2925 = vmul.f32 %v2509, %v2838
    %v2926 = vmul.f32 %v2510, %v2838
    %v2927 = vmul.f32 %v2511, %v2848
    %v2928 = vmul.f32 %v2512, %v2848
    %v2929 = vmul.f32 %v2513, %v2858
    %v2930 = vmul.f32 %v2514, %v2858
    %v2931 = vmul.f32 %v2515, %v2868
    %v2932 = vmul.f32 %v2516, %v2868
    %v2934 = vperm.slane %v2066, 0
    %v2935 = vperm.slane %v2066, 1
    %v2938 = vmul.f32 %v2869, %v2934
    %v2939 = vmul.f32 %v2870, %v2935
    %v2940 = vmul.f32 %v2871, %v2934
    %v2941 = vmul.f32 %v2872, %v2935
    %v2942 = vmul.f32 %v2873, %v2934
    %v2943 = vmul.f32 %v2874, %v2935
    %v2944 = vmul.f32 %v2875, %v2934
    %v2945 = vmul.f32 %v2876, %v2935
    %v2946 = vmul.f32 %v2877, %v2934
    %v2947 = vmul.f32 %v2878, %v2935
    %v2948 = vmul.f32 %v2879, %v2934
    %v2949 = vmul.f32 %v2880, %v2935
    %v2950 = vmul.f32 %v2881, %v2934
    %v2951 = vmul.f32 %v2882, %v2935
    %v2952 = vmul.f32 %v2883, %v2934
    %v2953 = vmul.f32 %v2884, %v2935
    %v2954 = vmul.f32 %v2885, %v2934
    %v2955 = vmul.f32 %v2886, %v2935
    %v2956 = vmul.f32 %v2887, %v2934
    %v2957 = vmul.f32 %v2888, %v2935
    %v2958 = vmul.f32 %v2889, %v2934
    %v2959 = vmul.f32 %v2890, %v2935
    %v2960 = vmul.f32 %v2891, %v2934
    %v2961 = vmul.f32 %v2892, %v2935
    %v2962 = vmul.f32 %v2893, %v2934
    %v2963 = vmul.f32 %v2894, %v2935
    %v2964 = vmul.f32 %v2895, %v2934
    %v2965 = vmul.f32 %v2896, %v2935
    %v2966 = vmul.f32 %v2897, %v2934
    %v2967 = vmul.f32 %v2898, %v2935
    %v2968 = vmul.f32 %v2899, %v2934
    %v2969 = vmul.f32 %v2900, %v2935
    %v2970 = vmul.f32 %v2901, %v2934
    %v2971 = vmul.f32 %v2902, %v2935
    %v2972 = vmul.f32 %v2903, %v2934
    %v2973 = vmul.f32 %v2904, %v2935
    %v2974 = vmul.f32 %v2905, %v2934
    %v2975 = vmul.f32 %v2906, %v2935
    %v2976 = vmul.f32 %v2907, %v2934
    %v2977 = vmul.f32 %v2908, %v2935
    %v2978 = vmul.f32 %v2909, %v2934
    %v2979 = vmul.f32 %v2910, %v2935
    %v2980 = vmul.f32 %v2911, %v2934
    %v2981 = vmul.f32 %v2912, %v2935
    %v2982 = vmul.f32 %v2913, %v2934
    %v2983 = vmul.f32 %v2914, %v2935
    %v2984 = vmul.f32 %v2915, %v2934
    %v2985 = vmul.f32 %v2916, %v2935
    %v2986 = vmul.f32 %v2917, %v2934
    %v2987 = vmul.f32 %v2918, %v2935
    %v2988 = vmul.f32 %v2919, %v2934
    %v2989 = vmul.f32 %v2920, %v2935
    %v2990 = vmul.f32 %v2921, %v2934
    %v2991 = vmul.f32 %v2922, %v2935
    %v2992 = vmul.f32 %v2923, %v2934
    %v2993 = vmul.f32 %v2924, %v2935
    %v2994 = vmul.f32 %v2925, %v2934
    %v2995 = vmul.f32 %v2926, %v2935
    %v2996 = vmul.f32 %v2927, %v2934
    %v2997 = vmul.f32 %v2928, %v2935
    %v2998 = vmul.f32 %v2929, %v2934
    %v2999 = vmul.f32 %v2930, %v2935
    %v3000 = vmul.f32 %v2931, %v2934
    %v3001 = vmul.f32 %v2932, %v2935
    %v3003 = vperm.slane %v2068, 0
    %v3004 = vperm.slane %v2068, 1
    %v3007 = vadd.f32 %v2938, %v3003
    %v3008 = vadd.f32 %v2939, %v3004
    %v3009 = vadd.f32 %v2940, %v3003
    %v3010 = vadd.f32 %v2941, %v3004
    %v3011 = vadd.f32 %v2942, %v3003
    %v3012 = vadd.f32 %v2943, %v3004
    %v3013 = vadd.f32 %v2944, %v3003
    %v3014 = vadd.f32 %v2945, %v3004
    %v3015 = vadd.f32 %v2946, %v3003
    %v3016 = vadd.f32 %v2947, %v3004
    %v3017 = vadd.f32 %v2948, %v3003
    %v3018 = vadd.f32 %v2949, %v3004
    %v3019 = vadd.f32 %v2950, %v3003
    %v3020 = vadd.f32 %v2951, %v3004
    %v3021 = vadd.f32 %v2952, %v3003
    %v3022 = vadd.f32 %v2953, %v3004
    %v3023 = vadd.f32 %v2954, %v3003
    %v3024 = vadd.f32 %v2955, %v3004
    %v3025 = vadd.f32 %v2956, %v3003
    %v3026 = vadd.f32 %v2957, %v3004
    %v3027 = vadd.f32 %v2958, %v3003
    %v3028 = vadd.f32 %v2959, %v3004
    %v3029 = vadd.f32 %v2960, %v3003
    %v3030 = vadd.f32 %v2961, %v3004
    %v3031 = vadd.f32 %v2962, %v3003
    %v3032 = vadd.f32 %v2963, %v3004
    %v3033 = vadd.f32 %v2964, %v3003
    %v3034 = vadd.f32 %v2965, %v3004
    %v3035 = vadd.f32 %v2966, %v3003
    %v3036 = vadd.f32 %v2967, %v3004
    %v3037 = vadd.f32 %v2968, %v3003
    %v3038 = vadd.f32 %v2969, %v3004
    %v3039 = vadd.f32 %v2970, %v3003
    %v3040 = vadd.f32 %v2971, %v3004
    %v3041 = vadd.f32 %v2972, %v3003
    %v3042 = vadd.f32 %v2973, %v3004
    %v3043 = vadd.f32 %v2974, %v3003
    %v3044 = vadd.f32 %v2975, %v3004
    %v3045 = vadd.f32 %v2976, %v3003
    %v3046 = vadd.f32 %v2977, %v3004
    %v3047 = vadd.f32 %v2978, %v3003
    %v3048 = vadd.f32 %v2979, %v3004
    %v3049 = vadd.f32 %v2980, %v3003
    %v3050 = vadd.f32 %v2981, %v3004
    %v3051 = vadd.f32 %v2982, %v3003
    %v3052 = vadd.f32 %v2983, %v3004
    %v3053 = vadd.f32 %v2984, %v3003
    %v3054 = vadd.f32 %v2985, %v3004
    %v3055 = vadd.f32 %v2986, %v3003
    %v3056 = vadd.f32 %v2987, %v3004
    %v3057 = vadd.f32 %v2988, %v3003
    %v3058 = vadd.f32 %v2989, %v3004
    %v3059 = vadd.f32 %v2990, %v3003
    %v3060 = vadd.f32 %v2991, %v3004
    %v3061 = vadd.f32 %v2992, %v3003
    %v3062 = vadd.f32 %v2993, %v3004
    %v3063 = vadd.f32 %v2994, %v3003
    %v3064 = vadd.f32 %v2995, %v3004
    %v3065 = vadd.f32 %v2996, %v3003
    %v3066 = vadd.f32 %v2997, %v3004
    %v3067 = vadd.f32 %v2998, %v3003
    %v3068 = vadd.f32 %v2999, %v3004
    %v3069 = vadd.f32 %v3000, %v3003
    %v3070 = vadd.f32 %v3001, %v3004
    %v3071 = vmax.f32 %v3007, 0.0
    %v3072 = vmax.f32 %v3008, 0.0
    %v3073 = vmax.f32 %v3009, 0.0
    %v3074 = vmax.f32 %v3010, 0.0
    %v3075 = vmax.f32 %v3011, 0.0
    %v3076 = vmax.f32 %v3012, 0.0
    %v3077 = vmax.f32 %v3013, 0.0
    %v3078 = vmax.f32 %v3014, 0.0
    %v3079 = vmax.f32 %v3015, 0.0
    %v3080 = vmax.f32 %v3016, 0.0
    %v3081 = vmax.f32 %v3017, 0.0
    %v3082 = vmax.f32 %v3018, 0.0
    %v3083 = vmax.f32 %v3019, 0.0
    %v3084 = vmax.f32 %v3020, 0.0
    %v3085 = vmax.f32 %v3021, 0.0
    %v3086 = vmax.f32 %v3022, 0.0
    %v3087 = vmax.f32 %v3023, 0.0
    %v3088 = vmax.f32 %v3024, 0.0
    %v3089 = vmax.f32 %v3025, 0.0
    %v3090 = vmax.f32 %v3026, 0.0
    %v3091 = vmax.f32 %v3027, 0.0
    %v3092 = vmax.f32 %v3028, 0.0
    %v3093 = vmax.f32 %v3029, 0.0
    %v3094 = vmax.f32 %v3030, 0.0
    %v3095 = vmax.f32 %v3031, 0.0
    %v3096 = vmax.f32 %v3032, 0.0
    %v3097 = vmax.f32 %v3033, 0.0
    %v3098 = vmax.f32 %v3034, 0.0
    %v3099 = vmax.f32 %v3035, 0.0
    %v3100 = vmax.f32 %v3036, 0.0
    %v3101 = vmax.f32 %v3037, 0.0
    %v3102 = vmax.f32 %v3038, 0.0
    %v3103 = vmax.f32 %v3039, 0.0
    %v3104 = vmax.f32 %v3040, 0.0
    %v3105 = vmax.f32 %v3041, 0.0
    %v3106 = vmax.f32 %v3042, 0.0
    %v3107 = vmax.f32 %v3043, 0.0
    %v3108 = vmax.f32 %v3044, 0.0
    %v3109 = vmax.f32 %v3045, 0.0
    %v3110 = vmax.f32 %v3046, 0.0
    %v3111 = vmax.f32 %v3047, 0.0
    %v3112 = vmax.f32 %v3048, 0.0
    %v3113 = vmax.f32 %v3049, 0.0
    %v3114 = vmax.f32 %v3050, 0.0
    %v3115 = vmax.f32 %v3051, 0.0
    %v3116 = vmax.f32 %v3052, 0.0
    %v3117 = vmax.f32 %v3053, 0.0
    %v3118 = vmax.f32 %v3054, 0.0
    %v3119 = vmax.f32 %v3055, 0.0
    %v3120 = vmax.f32 %v3056, 0.0
    %v3121 = vmax.f32 %v3057, 0.0
    %v3122 = vmax.f32 %v3058, 0.0
    %v3123 = vmax.f32 %v3059, 0.0
    %v3124 = vmax.f32 %v3060, 0.0
    %v3125 = vmax.f32 %v3061, 0.0
    %v3126 = vmax.f32 %v3062, 0.0
    %v3127 = vmax.f32 %v3063, 0.0
    %v3128 = vmax.f32 %v3064, 0.0
    %v3129 = vmax.f32 %v3065, 0.0
    %v3130 = vmax.f32 %v3066, 0.0
    %v3131 = vmax.f32 %v3067, 0.0
    %v3132 = vmax.f32 %v3068, 0.0
    %v3133 = vmax.f32 %v3069, 0.0
    %v3134 = vmax.f32 %v3070, 0.0
    %v3135 = vpack.c.bf16 %v3073, %v3071
    %v3136 = vpack.c.bf16 %v3074, %v3072
    %v3137 = vpack.c.bf16 %v3077, %v3075
    %v3138 = vpack.c.bf16 %v3078, %v3076
    %v3139 = vpack.c.bf16 %v3081, %v3079
    %v3140 = vpack.c.bf16 %v3082, %v3080
    %v3141 = vpack.c.bf16 %v3085, %v3083
    %v3142 = vpack.c.bf16 %v3086, %v3084
    %v3143 = vpack.c.bf16 %v3089, %v3087
    %v3144 = vpack.c.bf16 %v3090, %v3088
    %v3145 = vpack.c.bf16 %v3093, %v3091
    %v3146 = vpack.c.bf16 %v3094, %v3092
    %v3147 = vpack.c.bf16 %v3097, %v3095
    %v3148 = vpack.c.bf16 %v3098, %v3096
    %v3149 = vpack.c.bf16 %v3101, %v3099
    %v3150 = vpack.c.bf16 %v3102, %v3100
    %v3151 = vpack.c.bf16 %v3105, %v3103
    %v3152 = vpack.c.bf16 %v3106, %v3104
    %v3153 = vpack.c.bf16 %v3109, %v3107
    %v3154 = vpack.c.bf16 %v3110, %v3108
    %v3155 = vpack.c.bf16 %v3113, %v3111
    %v3156 = vpack.c.bf16 %v3114, %v3112
    %v3157 = vpack.c.bf16 %v3117, %v3115
    %v3158 = vpack.c.bf16 %v3118, %v3116
    %v3159 = vpack.c.bf16 %v3121, %v3119
    %v3160 = vpack.c.bf16 %v3122, %v3120
    %v3161 = vpack.c.bf16 %v3125, %v3123
    %v3162 = vpack.c.bf16 %v3126, %v3124
    %v3163 = vpack.c.bf16 %v3129, %v3127
    %v3164 = vpack.c.bf16 %v3130, %v3128
    %v3165 = vpack.c.bf16 %v3133, %v3131
    %v3166 = vpack.c.bf16 %v3134, %v3132
    %v3167 = vld [vmem:[%s3] sm:$0xf]
    %v3168 = vld [vmem:[%s3 + $0x4] sm:$0xf]
    %v3169 = vld [vmem:[%s3 + $0x8] sm:$0xf]
    %v3170 = vld [vmem:[%s3 + $0xc] sm:$0xf]
    %v3171 = vld [vmem:[%s3 + $0x10] sm:$0xf]
    %v3172 = vld [vmem:[%s3 + $0x14] sm:$0xf]
    %v3173 = vld [vmem:[%s3 + $0x18] sm:$0xf]
    %v3174 = vld [vmem:[%s3 + $0x1c] sm:$0xf]
    %v3175 = vld [vmem:[%s3 + $0x20] sm:$0xf]
    %v3176 = vld [vmem:[%s3 + $0x24] sm:$0xf]
    %v3177 = vld [vmem:[%s3 + $0x28] sm:$0xf]
    %v3178 = vld [vmem:[%s3 + $0x2c] sm:$0xf]
    %v3179 = vld [vmem:[%s3 + $0x30] sm:$0xf]
    %v3180 = vld [vmem:[%s3 + $0x34] sm:$0xf]
    %v3181 = vld [vmem:[%s3 + $0x38] sm:$0xf]
    %v3182 = vld [vmem:[%s3 + $0x3c] sm:$0xf]
    %v3183 = vld [vmem:[%s3 + $0x40] sm:$0xf]
    %v3184 = vld [vmem:[%s3 + $0x44] sm:$0xf]
    %v3185 = vld [vmem:[%s3 + $0x48] sm:$0xf]
    %v3186 = vld [vmem:[%s3 + $0x4c] sm:$0xf]
    %v3187 = vld [vmem:[%s3 + $0x50] sm:$0xf]
    %v3188 = vld [vmem:[%s3 + $0x54] sm:$0xf]
    %v3189 = vld [vmem:[%s3 + $0x58] sm:$0xf]
    %v3190 = vld [vmem:[%s3 + $0x5c] sm:$0xf]
    %v3191 = vld [vmem:[%s3 + $0x60] sm:$0xf]
    %v3192 = vld [vmem:[%s3 + $0x64] sm:$0xf]
    %v3193 = vld [vmem:[%s3 + $0x68] sm:$0xf]
    %v3194 = vld [vmem:[%s3 + $0x6c] sm:$0xf]
    %v3195 = vld [vmem:[%s3 + $0x70] sm:$0xf]
    %v3196 = vld [vmem:[%s3 + $0x74] sm:$0xf]
    %v3197 = vld [vmem:[%s3 + $0x78] sm:$0xf]
    %v3198 = vld [vmem:[%s3 + $0x7c] sm:$0xf]
    %v3199 = vld [vmem:[#allocation7 + $0x6] ss:$0 sm:$0xff]
    %v3232 = vunpack.c.l.b16 %v3167
    %v3233 = vunpack.c.l.b16 %v3168
    %v3234 = vunpack.c.l.b16 %v3169
    %v3235 = vunpack.c.l.b16 %v3170
    %v3236 = vunpack.c.l.b16 %v3171
    %v3237 = vunpack.c.l.b16 %v3172
    %v3238 = vunpack.c.l.b16 %v3173
    %v3239 = vunpack.c.l.b16 %v3174
    %v3240 = vunpack.c.l.b16 %v3175
    %v3241 = vunpack.c.l.b16 %v3176
    %v3242 = vunpack.c.l.b16 %v3177
    %v3243 = vunpack.c.l.b16 %v3178
    %v3244 = vunpack.c.l.b16 %v3179
    %v3245 = vunpack.c.l.b16 %v3180
    %v3246 = vunpack.c.l.b16 %v3181
    %v3247 = vunpack.c.l.b16 %v3182
    %v3248 = vunpack.c.l.b16 %v3183
    %v3249 = vunpack.c.l.b16 %v3184
    %v3250 = vunpack.c.l.b16 %v3185
    %v3251 = vunpack.c.l.b16 %v3186
    %v3252 = vunpack.c.l.b16 %v3187
    %v3253 = vunpack.c.l.b16 %v3188
    %v3254 = vunpack.c.l.b16 %v3189
    %v3255 = vunpack.c.l.b16 %v3190
    %v3256 = vunpack.c.l.b16 %v3191
    %v3257 = vunpack.c.l.b16 %v3192
    %v3258 = vunpack.c.l.b16 %v3193
    %v3259 = vunpack.c.l.b16 %v3194
    %v3260 = vunpack.c.l.b16 %v3195
    %v3261 = vunpack.c.l.b16 %v3196
    %v3262 = vunpack.c.l.b16 %v3197
    %v3263 = vunpack.c.l.b16 %v3198
    %v3264 = vpack.c.b16 %v3233, %v3232
    %v3265 = vpack.c.b16 %v3235, %v3234
    %v3266 = vpack.c.b16 %v3237, %v3236
    %v3267 = vpack.c.b16 %v3239, %v3238
    %v3268 = vpack.c.b16 %v3241, %v3240
    %v3269 = vpack.c.b16 %v3243, %v3242
    %v3270 = vpack.c.b16 %v3245, %v3244
    %v3271 = vpack.c.b16 %v3247, %v3246
    %v3272 = vpack.c.b16 %v3249, %v3248
    %v3273 = vpack.c.b16 %v3251, %v3250
    %v3274 = vpack.c.b16 %v3253, %v3252
    %v3275 = vpack.c.b16 %v3255, %v3254
    %v3276 = vpack.c.b16 %v3257, %v3256
    %v3277 = vpack.c.b16 %v3259, %v3258
    %v3278 = vpack.c.b16 %v3261, %v3260
    %v3279 = vpack.c.b16 %v3263, %v3262
    %3296 = vmatpush.bf16.msra.mxu0 %v3271
    %3297 = vmatpush.bf16.msra.mxu0 %v3270
    %3298 = vmatpush.bf16.msra.mxu0 %v3269
    %3299 = vmatpush.bf16.msra.mxu0 %v3268
    %3300 = vmatpush.bf16.msra.mxu0 %v3267
    %3301 = vmatpush.bf16.msra.mxu0 %v3266
    %3302 = vmatpush.bf16.msra.mxu0 %v3265
    %3303 = vmatpush.bf16.msra.mxu0 %v3264
    %3304 = vmatmul.bf16.gmra.mxu0 %v3135
    %v3305 = vpop.f32.mrf.mxu0
    %v3306 = vadd.f32 %v3199, %v3305
    %v3307 = vpop.f32.mrf.mxu0
    %v3308 = vadd.f32 %v3199, %v3307
    %3309 = vmatmul.bf16.gmra.mxu0 %v3137
    %v3310 = vpop.f32.mrf.mxu0
    %v3311 = vadd.f32 %v3199, %v3310
    %v3312 = vpop.f32.mrf.mxu0
    %v3313 = vadd.f32 %v3199, %v3312
    %3314 = vmatmul.bf16.gmra.mxu0 %v3139
    %v3315 = vpop.f32.mrf.mxu0
    %v3316 = vadd.f32 %v3199, %v3315
    %v3317 = vpop.f32.mrf.mxu0
    %v3318 = vadd.f32 %v3199, %v3317
    %3319 = vmatmul.bf16.gmra.mxu0 %v3141
    %v3320 = vpop.f32.mrf.mxu0
    %v3321 = vadd.f32 %v3199, %v3320
    %v3322 = vpop.f32.mrf.mxu0
    %v3323 = vadd.f32 %v3199, %v3322
    %3324 = vmatmul.bf16.gmra.mxu0 %v3143
    %v3325 = vpop.f32.mrf.mxu0
    %v3326 = vadd.f32 %v3199, %v3325
    %v3327 = vpop.f32.mrf.mxu0
    %v3328 = vadd.f32 %v3199, %v3327
    %3329 = vmatmul.bf16.gmra.mxu0 %v3145
    %v3330 = vpop.f32.mrf.mxu0
    %v3331 = vadd.f32 %v3199, %v3330
    %v3332 = vpop.f32.mrf.mxu0
    %v3333 = vadd.f32 %v3199, %v3332
    %3334 = vmatmul.bf16.gmra.mxu0 %v3147
    %v3335 = vpop.f32.mrf.mxu0
    %v3336 = vadd.f32 %v3199, %v3335
    %v3337 = vpop.f32.mrf.mxu0
    %v3338 = vadd.f32 %v3199, %v3337
    %3339 = vmatmul.bf16.gmra.mxu0 %v3149
    %v3340 = vpop.f32.mrf.mxu0
    %v3341 = vadd.f32 %v3199, %v3340
    %v3342 = vpop.f32.mrf.mxu0
    %v3343 = vadd.f32 %v3199, %v3342
    %3344 = vmatmul.bf16.gmra.mxu0 %v3151
    %v3345 = vpop.f32.mrf.mxu0
    %v3346 = vadd.f32 %v3199, %v3345
    %v3347 = vpop.f32.mrf.mxu0
    %v3348 = vadd.f32 %v3199, %v3347
    %3349 = vmatmul.bf16.gmra.mxu0 %v3153
    %v3350 = vpop.f32.mrf.mxu0
    %v3351 = vadd.f32 %v3199, %v3350
    %v3352 = vpop.f32.mrf.mxu0
    %v3353 = vadd.f32 %v3199, %v3352
    %3354 = vmatmul.bf16.gmra.mxu0 %v3155
    %v3355 = vpop.f32.mrf.mxu0
    %v3356 = vadd.f32 %v3199, %v3355
    %v3357 = vpop.f32.mrf.mxu0
    %v3358 = vadd.f32 %v3199, %v3357
    %3359 = vmatmul.bf16.gmra.mxu0 %v3157
    %v3360 = vpop.f32.mrf.mxu0
    %v3361 = vadd.f32 %v3199, %v3360
    %v3362 = vpop.f32.mrf.mxu0
    %v3363 = vadd.f32 %v3199, %v3362
    %3364 = vmatmul.bf16.gmra.mxu0 %v3159
    %v3365 = vpop.f32.mrf.mxu0
    %v3366 = vadd.f32 %v3199, %v3365
    %v3367 = vpop.f32.mrf.mxu0
    %v3368 = vadd.f32 %v3199, %v3367
    %3369 = vmatmul.bf16.gmra.mxu0 %v3161
    %v3370 = vpop.f32.mrf.mxu0
    %v3371 = vadd.f32 %v3199, %v3370
    %v3372 = vpop.f32.mrf.mxu0
    %v3373 = vadd.f32 %v3199, %v3372
    %3374 = vmatmul.bf16.gmra.mxu0 %v3163
    %v3375 = vpop.f32.mrf.mxu0
    %v3376 = vadd.f32 %v3199, %v3375
    %v3377 = vpop.f32.mrf.mxu0
    %v3378 = vadd.f32 %v3199, %v3377
    %3379 = vmatmul.bf16.gmra.mxu0 %v3165
    %v3380 = vpop.f32.mrf.mxu0
    %v3381 = vadd.f32 %v3199, %v3380
    %v3382 = vpop.f32.mrf.mxu0
    %v3383 = vadd.f32 %v3199, %v3382
    %3384 = vdwg.mxu0
    %3385 = vmatpush.bf16.msra.mxu0 %v3279
    %3386 = vmatpush.bf16.msra.mxu0 %v3278
    %3387 = vmatpush.bf16.msra.mxu0 %v3277
    %3388 = vmatpush.bf16.msra.mxu0 %v3276
    %3389 = vmatpush.bf16.msra.mxu0 %v3275
    %3390 = vmatpush.bf16.msra.mxu0 %v3274
    %3391 = vmatpush.bf16.msra.mxu0 %v3273
    %3392 = vmatpush.bf16.msra.mxu0 %v3272
    %3393 = vmatmul.bf16.gmra.mxu0 %v3136
    %v3394 = vpop.f32.mrf.mxu0
    %v3395 = vadd.f32 %v3306, %v3394
    %v3396 = vpop.f32.mrf.mxu0
    %v3397 = vadd.f32 %v3308, %v3396
    %3398 = vmatmul.bf16.gmra.mxu0 %v3138
    %v3399 = vpop.f32.mrf.mxu0
    %v3400 = vadd.f32 %v3311, %v3399
    %v3401 = vpop.f32.mrf.mxu0
    %v3402 = vadd.f32 %v3313, %v3401
    %3403 = vmatmul.bf16.gmra.mxu0 %v3140
    %v3404 = vpop.f32.mrf.mxu0
    %v3405 = vadd.f32 %v3316, %v3404
    %v3406 = vpop.f32.mrf.mxu0
    %v3407 = vadd.f32 %v3318, %v3406
    %3408 = vmatmul.bf16.gmra.mxu0 %v3142
    %v3409 = vpop.f32.mrf.mxu0
    %v3410 = vadd.f32 %v3321, %v3409
    %v3411 = vpop.f32.mrf.mxu0
    %v3412 = vadd.f32 %v3323, %v3411
    %3413 = vmatmul.bf16.gmra.mxu0 %v3144
    %v3414 = vpop.f32.mrf.mxu0
    %v3415 = vadd.f32 %v3326, %v3414
    %v3416 = vpop.f32.mrf.mxu0
    %v3417 = vadd.f32 %v3328, %v3416
    %3418 = vmatmul.bf16.gmra.mxu0 %v3146
    %v3419 = vpop.f32.mrf.mxu0
    %v3420 = vadd.f32 %v3331, %v3419
    %v3421 = vpop.f32.mrf.mxu0
    %v3422 = vadd.f32 %v3333, %v3421
    %3423 = vmatmul.bf16.gmra.mxu0 %v3148
    %v3424 = vpop.f32.mrf.mxu0
    %v3425 = vadd.f32 %v3336, %v3424
    %v3426 = vpop.f32.mrf.mxu0
    %v3427 = vadd.f32 %v3338, %v3426
    %3428 = vmatmul.bf16.gmra.mxu0 %v3150
    %v3429 = vpop.f32.mrf.mxu0
    %v3430 = vadd.f32 %v3341, %v3429
    %v3431 = vpop.f32.mrf.mxu0
    %v3432 = vadd.f32 %v3343, %v3431
    %3433 = vmatmul.bf16.gmra.mxu0 %v3152
    %v3434 = vpop.f32.mrf.mxu0
    %v3435 = vadd.f32 %v3346, %v3434
    %v3436 = vpop.f32.mrf.mxu0
    %v3437 = vadd.f32 %v3348, %v3436
    %3438 = vmatmul.bf16.gmra.mxu0 %v3154
    %v3439 = vpop.f32.mrf.mxu0
    %v3440 = vadd.f32 %v3351, %v3439
    %v3441 = vpop.f32.mrf.mxu0
    %v3442 = vadd.f32 %v3353, %v3441
    %3443 = vmatmul.bf16.gmra.mxu0 %v3156
    %v3444 = vpop.f32.mrf.mxu0
    %v3445 = vadd.f32 %v3356, %v3444
    %v3446 = vpop.f32.mrf.mxu0
    %v3447 = vadd.f32 %v3358, %v3446
    %3448 = vmatmul.bf16.gmra.mxu0 %v3158
    %v3449 = vpop.f32.mrf.mxu0
    %v3450 = vadd.f32 %v3361, %v3449
    %v3451 = vpop.f32.mrf.mxu0
    %v3452 = vadd.f32 %v3363, %v3451
    %3453 = vmatmul.bf16.gmra.mxu0 %v3160
    %v3454 = vpop.f32.mrf.mxu0
    %v3455 = vadd.f32 %v3366, %v3454
    %v3456 = vpop.f32.mrf.mxu0
    %v3457 = vadd.f32 %v3368, %v3456
    %3458 = vmatmul.bf16.gmra.mxu0 %v3162
    %v3459 = vpop.f32.mrf.mxu0
    %v3460 = vadd.f32 %v3371, %v3459
    %v3461 = vpop.f32.mrf.mxu0
    %v3462 = vadd.f32 %v3373, %v3461
    %3463 = vmatmul.bf16.gmra.mxu0 %v3164
    %v3464 = vpop.f32.mrf.mxu0
    %v3465 = vadd.f32 %v3376, %v3464
    %v3466 = vpop.f32.mrf.mxu0
    %v3467 = vadd.f32 %v3378, %v3466
    %3468 = vmatmul.bf16.gmra.mxu0 %v3166
    %v3469 = vpop.f32.mrf.mxu0
    %v3470 = vadd.f32 %v3381, %v3469
    %v3471 = vpop.f32.mrf.mxu0
    %v3472 = vadd.f32 %v3383, %v3471
    %3473 = vdwg.mxu0
    %v3474 = vld [vmem:[#allocation7 + $0x7] ss:$0 sm:$0xff]
    %v3475 = vld [vmem:[#allocation7 + $0x10] ss:$0 sm:$0xff]
    %3476 = vadd.xlane.f32.xlu0 %v3395
    %v3477 = vpop.xlane.xlu0 %3476
    %3478 = vadd.xlane.f32.xlu0 %v3397
    %v3479 = vpop.xlane.xlu0 %3478
    %3480 = vadd.xlane.f32.xlu0 %v3400
    %v3481 = vpop.xlane.xlu0 %3480
    %3482 = vadd.xlane.f32.xlu0 %v3402
    %v3483 = vpop.xlane.xlu0 %3482
    %3484 = vadd.xlane.f32.xlu0 %v3405
    %v3485 = vpop.xlane.xlu0 %3484
    %3486 = vadd.xlane.f32.xlu0 %v3407
    %v3487 = vpop.xlane.xlu0 %3486
    %3488 = vadd.xlane.f32.xlu0 %v3410
    %v3489 = vpop.xlane.xlu0 %3488
    %3490 = vadd.xlane.f32.xlu0 %v3412
    %v3491 = vpop.xlane.xlu0 %3490
    %3492 = vadd.xlane.f32.xlu0 %v3415
    %v3493 = vpop.xlane.xlu0 %3492
    %3494 = vadd.xlane.f32.xlu0 %v3417
    %v3495 = vpop.xlane.xlu0 %3494
    %3496 = vadd.xlane.f32.xlu0 %v3420
    %v3497 = vpop.xlane.xlu0 %3496
    %3498 = vadd.xlane.f32.xlu0 %v3422
    %v3499 = vpop.xlane.xlu0 %3498
    %3500 = vadd.xlane.f32.xlu0 %v3425
    %v3501 = vpop.xlane.xlu0 %3500
    %3502 = vadd.xlane.f32.xlu0 %v3427
    %v3503 = vpop.xlane.xlu0 %3502
    %3504 = vadd.xlane.f32.xlu0 %v3430
    %v3505 = vpop.xlane.xlu0 %3504
    %3506 = vadd.xlane.f32.xlu0 %v3432
    %v3507 = vpop.xlane.xlu0 %3506
    %3508 = vadd.xlane.f32.xlu0 %v3435
    %v3509 = vpop.xlane.xlu0 %3508
    %3510 = vadd.xlane.f32.xlu0 %v3437
    %v3511 = vpop.xlane.xlu0 %3510
    %3512 = vadd.xlane.f32.xlu0 %v3440
    %v3513 = vpop.xlane.xlu0 %3512
    %3514 = vadd.xlane.f32.xlu0 %v3442
    %v3515 = vpop.xlane.xlu0 %3514
    %3516 = vadd.xlane.f32.xlu0 %v3445
    %v3517 = vpop.xlane.xlu0 %3516
    %3518 = vadd.xlane.f32.xlu0 %v3447
    %v3519 = vpop.xlane.xlu0 %3518
    %3520 = vadd.xlane.f32.xlu0 %v3450
    %v3521 = vpop.xlane.xlu0 %3520
    %3522 = vadd.xlane.f32.xlu0 %v3452
    %v3523 = vpop.xlane.xlu0 %3522
    %3524 = vadd.xlane.f32.xlu0 %v3455
    %v3525 = vpop.xlane.xlu0 %3524
    %3526 = vadd.xlane.f32.xlu0 %v3457
    %v3527 = vpop.xlane.xlu0 %3526
    %3528 = vadd.xlane.f32.xlu0 %v3460
    %v3529 = vpop.xlane.xlu0 %3528
    %3530 = vadd.xlane.f32.xlu0 %v3462
    %v3531 = vpop.xlane.xlu0 %3530
    %3532 = vadd.xlane.f32.xlu0 %v3465
    %v3533 = vpop.xlane.xlu0 %3532
    %3534 = vadd.xlane.f32.xlu0 %v3467
    %v3535 = vpop.xlane.xlu0 %3534
    %3536 = vadd.xlane.f32.xlu0 %v3470
    %v3537 = vpop.xlane.xlu0 %3536
    %3538 = vadd.xlane.f32.xlu0 %v3472
    %v3539 = vpop.xlane.xlu0 %3538
    %v3540 = vrcp.pop 128.0
    %v3541 = vmul.f32 128.0, %v3540
    %v3542 = vsub.f32 1.0, %v3541
    %v3543 = vmul.f32 %v3540, %v3542
    %v3544 = vadd.f32 %v3540, %v3543
    %vm3545 = vweird.f32 %v3540
    %v3546 = vsel %vm3545, %v3540, %v3544
    %v3547 = vmul.f32 %v3477, %v3546
    %v3548 = vmul.f32 %v3479, %v3546
    %v3549 = vmul.f32 %v3481, %v3546
    %v3550 = vmul.f32 %v3483, %v3546
    %v3551 = vmul.f32 %v3485, %v3546
    %v3552 = vmul.f32 %v3487, %v3546
    %v3553 = vmul.f32 %v3489, %v3546
    %v3554 = vmul.f32 %v3491, %v3546
    %v3555 = vmul.f32 %v3493, %v3546
    %v3556 = vmul.f32 %v3495, %v3546
    %v3557 = vmul.f32 %v3497, %v3546
    %v3558 = vmul.f32 %v3499, %v3546
    %v3559 = vmul.f32 %v3501, %v3546
    %v3560 = vmul.f32 %v3503, %v3546
    %v3561 = vmul.f32 %v3505, %v3546
    %v3562 = vmul.f32 %v3507, %v3546
    %v3563 = vmul.f32 %v3509, %v3546
    %v3564 = vmul.f32 %v3511, %v3546
    %v3565 = vmul.f32 %v3513, %v3546
    %v3566 = vmul.f32 %v3515, %v3546
    %v3567 = vmul.f32 %v3517, %v3546
    %v3568 = vmul.f32 %v3519, %v3546
    %v3569 = vmul.f32 %v3521, %v3546
    %v3570 = vmul.f32 %v3523, %v3546
    %v3571 = vmul.f32 %v3525, %v3546
    %v3572 = vmul.f32 %v3527, %v3546
    %v3573 = vmul.f32 %v3529, %v3546
    %v3574 = vmul.f32 %v3531, %v3546
    %v3575 = vmul.f32 %v3533, %v3546
    %v3576 = vmul.f32 %v3535, %v3546
    %v3577 = vmul.f32 %v3537, %v3546
    %v3578 = vmul.f32 %v3539, %v3546
    %v3579 = vmul.f32 %v3395, %v3395
    %v3580 = vmul.f32 %v3397, %v3397
    %v3581 = vmul.f32 %v3400, %v3400
    %v3582 = vmul.f32 %v3402, %v3402
    %v3583 = vmul.f32 %v3405, %v3405
    %v3584 = vmul.f32 %v3407, %v3407
    %v3585 = vmul.f32 %v3410, %v3410
    %v3586 = vmul.f32 %v3412, %v3412
    %v3587 = vmul.f32 %v3415, %v3415
    %v3588 = vmul.f32 %v3417, %v3417
    %v3589 = vmul.f32 %v3420, %v3420
    %v3590 = vmul.f32 %v3422, %v3422
    %v3591 = vmul.f32 %v3425, %v3425
    %v3592 = vmul.f32 %v3427, %v3427
    %v3593 = vmul.f32 %v3430, %v3430
    %v3594 = vmul.f32 %v3432, %v3432
    %v3595 = vmul.f32 %v3435, %v3435
    %v3596 = vmul.f32 %v3437, %v3437
    %v3597 = vmul.f32 %v3440, %v3440
    %v3598 = vmul.f32 %v3442, %v3442
    %v3599 = vmul.f32 %v3445, %v3445
    %v3600 = vmul.f32 %v3447, %v3447
    %v3601 = vmul.f32 %v3450, %v3450
    %v3602 = vmul.f32 %v3452, %v3452
    %v3603 = vmul.f32 %v3455, %v3455
    %v3604 = vmul.f32 %v3457, %v3457
    %v3605 = vmul.f32 %v3460, %v3460
    %v3606 = vmul.f32 %v3462, %v3462
    %v3607 = vmul.f32 %v3465, %v3465
    %v3608 = vmul.f32 %v3467, %v3467
    %v3609 = vmul.f32 %v3470, %v3470
    %v3610 = vmul.f32 %v3472, %v3472
    %3611 = vadd.xlane.f32.xlu0 %v3579
    %v3612 = vpop.xlane.xlu0 %3611
    %3613 = vadd.xlane.f32.xlu0 %v3580
    %v3614 = vpop.xlane.xlu0 %3613
    %3615 = vadd.xlane.f32.xlu0 %v3581
    %v3616 = vpop.xlane.xlu0 %3615
    %3617 = vadd.xlane.f32.xlu0 %v3582
    %v3618 = vpop.xlane.xlu0 %3617
    %3619 = vadd.xlane.f32.xlu0 %v3583
    %v3620 = vpop.xlane.xlu0 %3619
    %3621 = vadd.xlane.f32.xlu0 %v3584
    %v3622 = vpop.xlane.xlu0 %3621
    %3623 = vadd.xlane.f32.xlu0 %v3585
    %v3624 = vpop.xlane.xlu0 %3623
    %3625 = vadd.xlane.f32.xlu0 %v3586
    %v3626 = vpop.xlane.xlu0 %3625
    %3627 = vadd.xlane.f32.xlu0 %v3587
    %v3628 = vpop.xlane.xlu0 %3627
    %3629 = vadd.xlane.f32.xlu0 %v3588
    %v3630 = vpop.xlane.xlu0 %3629
    %3631 = vadd.xlane.f32.xlu0 %v3589
    %v3632 = vpop.xlane.xlu0 %3631
    %3633 = vadd.xlane.f32.xlu0 %v3590
    %v3634 = vpop.xlane.xlu0 %3633
    %3635 = vadd.xlane.f32.xlu0 %v3591
    %v3636 = vpop.xlane.xlu0 %3635
    %3637 = vadd.xlane.f32.xlu0 %v3592
    %v3638 = vpop.xlane.xlu0 %3637
    %3639 = vadd.xlane.f32.xlu0 %v3593
    %v3640 = vpop.xlane.xlu0 %3639
    %3641 = vadd.xlane.f32.xlu0 %v3594
    %v3642 = vpop.xlane.xlu0 %3641
    %3643 = vadd.xlane.f32.xlu0 %v3595
    %v3644 = vpop.xlane.xlu0 %3643
    %3645 = vadd.xlane.f32.xlu0 %v3596
    %v3646 = vpop.xlane.xlu0 %3645
    %3647 = vadd.xlane.f32.xlu0 %v3597
    %v3648 = vpop.xlane.xlu0 %3647
    %3649 = vadd.xlane.f32.xlu0 %v3598
    %v3650 = vpop.xlane.xlu0 %3649
    %3651 = vadd.xlane.f32.xlu0 %v3599
    %v3652 = vpop.xlane.xlu0 %3651
    %3653 = vadd.xlane.f32.xlu0 %v3600
    %v3654 = vpop.xlane.xlu0 %3653
    %3655 = vadd.xlane.f32.xlu0 %v3601
    %v3656 = vpop.xlane.xlu0 %3655
    %3657 = vadd.xlane.f32.xlu0 %v3602
    %v3658 = vpop.xlane.xlu0 %3657
    %3659 = vadd.xlane.f32.xlu0 %v3603
    %v3660 = vpop.xlane.xlu0 %3659
    %3661 = vadd.xlane.f32.xlu0 %v3604
    %v3662 = vpop.xlane.xlu0 %3661
    %3663 = vadd.xlane.f32.xlu0 %v3605
    %v3664 = vpop.xlane.xlu0 %3663
    %3665 = vadd.xlane.f32.xlu0 %v3606
    %v3666 = vpop.xlane.xlu0 %3665
    %3667 = vadd.xlane.f32.xlu0 %v3607
    %v3668 = vpop.xlane.xlu0 %3667
    %3669 = vadd.xlane.f32.xlu0 %v3608
    %v3670 = vpop.xlane.xlu0 %3669
    %3671 = vadd.xlane.f32.xlu0 %v3609
    %v3672 = vpop.xlane.xlu0 %3671
    %3673 = vadd.xlane.f32.xlu0 %v3610
    %v3674 = vpop.xlane.xlu0 %3673
    %v3675 = vmul.f32 %v3612, %v3546
    %v3676 = vmul.f32 %v3614, %v3546
    %v3677 = vmul.f32 %v3616, %v3546
    %v3678 = vmul.f32 %v3618, %v3546
    %v3679 = vmul.f32 %v3620, %v3546
    %v3680 = vmul.f32 %v3622, %v3546
    %v3681 = vmul.f32 %v3624, %v3546
    %v3682 = vmul.f32 %v3626, %v3546
    %v3683 = vmul.f32 %v3628, %v3546
    %v3684 = vmul.f32 %v3630, %v3546
    %v3685 = vmul.f32 %v3632, %v3546
    %v3686 = vmul.f32 %v3634, %v3546
    %v3687 = vmul.f32 %v3636, %v3546
    %v3688 = vmul.f32 %v3638, %v3546
    %v3689 = vmul.f32 %v3640, %v3546
    %v3690 = vmul.f32 %v3642, %v3546
    %v3691 = vmul.f32 %v3644, %v3546
    %v3692 = vmul.f32 %v3646, %v3546
    %v3693 = vmul.f32 %v3648, %v3546
    %v3694 = vmul.f32 %v3650, %v3546
    %v3695 = vmul.f32 %v3652, %v3546
    %v3696 = vmul.f32 %v3654, %v3546
    %v3697 = vmul.f32 %v3656, %v3546
    %v3698 = vmul.f32 %v3658, %v3546
    %v3699 = vmul.f32 %v3660, %v3546
    %v3700 = vmul.f32 %v3662, %v3546
    %v3701 = vmul.f32 %v3664, %v3546
    %v3702 = vmul.f32 %v3666, %v3546
    %v3703 = vmul.f32 %v3668, %v3546
    %v3704 = vmul.f32 %v3670, %v3546
    %v3705 = vmul.f32 %v3672, %v3546
    %v3706 = vmul.f32 %v3674, %v3546
    %v3707 = vmul.f32 %v3547, %v3547
    %v3708 = vmul.f32 %v3548, %v3548
    %v3709 = vmul.f32 %v3549, %v3549
    %v3710 = vmul.f32 %v3550, %v3550
    %v3711 = vmul.f32 %v3551, %v3551
    %v3712 = vmul.f32 %v3552, %v3552
    %v3713 = vmul.f32 %v3553, %v3553
    %v3714 = vmul.f32 %v3554, %v3554
    %v3715 = vmul.f32 %v3555, %v3555
    %v3716 = vmul.f32 %v3556, %v3556
    %v3717 = vmul.f32 %v3557, %v3557
    %v3718 = vmul.f32 %v3558, %v3558
    %v3719 = vmul.f32 %v3559, %v3559
    %v3720 = vmul.f32 %v3560, %v3560
    %v3721 = vmul.f32 %v3561, %v3561
    %v3722 = vmul.f32 %v3562, %v3562
    %v3723 = vmul.f32 %v3563, %v3563
    %v3724 = vmul.f32 %v3564, %v3564
    %v3725 = vmul.f32 %v3565, %v3565
    %v3726 = vmul.f32 %v3566, %v3566
    %v3727 = vmul.f32 %v3567, %v3567
    %v3728 = vmul.f32 %v3568, %v3568
    %v3729 = vmul.f32 %v3569, %v3569
    %v3730 = vmul.f32 %v3570, %v3570
    %v3731 = vmul.f32 %v3571, %v3571
    %v3732 = vmul.f32 %v3572, %v3572
    %v3733 = vmul.f32 %v3573, %v3573
    %v3734 = vmul.f32 %v3574, %v3574
    %v3735 = vmul.f32 %v3575, %v3575
    %v3736 = vmul.f32 %v3576, %v3576
    %v3737 = vmul.f32 %v3577, %v3577
    %v3738 = vmul.f32 %v3578, %v3578
    %v3739 = vsub.f32 %v3675, %v3707
    %v3740 = vsub.f32 %v3676, %v3708
    %v3741 = vsub.f32 %v3677, %v3709
    %v3742 = vsub.f32 %v3678, %v3710
    %v3743 = vsub.f32 %v3679, %v3711
    %v3744 = vsub.f32 %v3680, %v3712
    %v3745 = vsub.f32 %v3681, %v3713
    %v3746 = vsub.f32 %v3682, %v3714
    %v3747 = vsub.f32 %v3683, %v3715
    %v3748 = vsub.f32 %v3684, %v3716
    %v3749 = vsub.f32 %v3685, %v3717
    %v3750 = vsub.f32 %v3686, %v3718
    %v3751 = vsub.f32 %v3687, %v3719
    %v3752 = vsub.f32 %v3688, %v3720
    %v3753 = vsub.f32 %v3689, %v3721
    %v3754 = vsub.f32 %v3690, %v3722
    %v3755 = vsub.f32 %v3691, %v3723
    %v3756 = vsub.f32 %v3692, %v3724
    %v3757 = vsub.f32 %v3693, %v3725
    %v3758 = vsub.f32 %v3694, %v3726
    %v3759 = vsub.f32 %v3695, %v3727
    %v3760 = vsub.f32 %v3696, %v3728
    %v3761 = vsub.f32 %v3697, %v3729
    %v3762 = vsub.f32 %v3698, %v3730
    %v3763 = vsub.f32 %v3699, %v3731
    %v3764 = vsub.f32 %v3700, %v3732
    %v3765 = vsub.f32 %v3701, %v3733
    %v3766 = vsub.f32 %v3702, %v3734
    %v3767 = vsub.f32 %v3703, %v3735
    %v3768 = vsub.f32 %v3704, %v3736
    %v3769 = vsub.f32 %v3705, %v3737
    %v3770 = vsub.f32 %v3706, %v3738
    %v3771 = vsub.f32 %v3395, %v3547
    %v3772 = vsub.f32 %v3397, %v3548
    %v3773 = vsub.f32 %v3400, %v3549
    %v3774 = vsub.f32 %v3402, %v3550
    %v3775 = vsub.f32 %v3405, %v3551
    %v3776 = vsub.f32 %v3407, %v3552
    %v3777 = vsub.f32 %v3410, %v3553
    %v3778 = vsub.f32 %v3412, %v3554
    %v3779 = vsub.f32 %v3415, %v3555
    %v3780 = vsub.f32 %v3417, %v3556
    %v3781 = vsub.f32 %v3420, %v3557
    %v3782 = vsub.f32 %v3422, %v3558
    %v3783 = vsub.f32 %v3425, %v3559
    %v3784 = vsub.f32 %v3427, %v3560
    %v3785 = vsub.f32 %v3430, %v3561
    %v3786 = vsub.f32 %v3432, %v3562
    %v3787 = vsub.f32 %v3435, %v3563
    %v3788 = vsub.f32 %v3437, %v3564
    %v3789 = vsub.f32 %v3440, %v3565
    %v3790 = vsub.f32 %v3442, %v3566
    %v3791 = vsub.f32 %v3445, %v3567
    %v3792 = vsub.f32 %v3447, %v3568
    %v3793 = vsub.f32 %v3450, %v3569
    %v3794 = vsub.f32 %v3452, %v3570
    %v3795 = vsub.f32 %v3455, %v3571
    %v3796 = vsub.f32 %v3457, %v3572
    %v3797 = vsub.f32 %v3460, %v3573
    %v3798 = vsub.f32 %v3462, %v3574
    %v3799 = vsub.f32 %v3465, %v3575
    %v3800 = vsub.f32 %v3467, %v3576
    %v3801 = vsub.f32 %v3470, %v3577
    %v3802 = vsub.f32 %v3472, %v3578
    %v3803 = vadd.f32 %v3739, 1e-05
    %v3804 = vadd.f32 %v3740, 1e-05
    %v3805 = vadd.f32 %v3741, 1e-05
    %v3806 = vadd.f32 %v3742, 1e-05
    %v3807 = vadd.f32 %v3743, 1e-05
    %v3808 = vadd.f32 %v3744, 1e-05
    %v3809 = vadd.f32 %v3745, 1e-05
    %v3810 = vadd.f32 %v3746, 1e-05
    %v3811 = vadd.f32 %v3747, 1e-05
    %v3812 = vadd.f32 %v3748, 1e-05
    %v3813 = vadd.f32 %v3749, 1e-05
    %v3814 = vadd.f32 %v3750, 1e-05
    %v3815 = vadd.f32 %v3751, 1e-05
    %v3816 = vadd.f32 %v3752, 1e-05
    %v3817 = vadd.f32 %v3753, 1e-05
    %v3818 = vadd.f32 %v3754, 1e-05
    %v3819 = vadd.f32 %v3755, 1e-05
    %v3820 = vadd.f32 %v3756, 1e-05
    %v3821 = vadd.f32 %v3757, 1e-05
    %v3822 = vadd.f32 %v3758, 1e-05
    %v3823 = vadd.f32 %v3759, 1e-05
    %v3824 = vadd.f32 %v3760, 1e-05
    %v3825 = vadd.f32 %v3761, 1e-05
    %v3826 = vadd.f32 %v3762, 1e-05
    %v3827 = vadd.f32 %v3763, 1e-05
    %v3828 = vadd.f32 %v3764, 1e-05
    %v3829 = vadd.f32 %v3765, 1e-05
    %v3830 = vadd.f32 %v3766, 1e-05
    %v3831 = vadd.f32 %v3767, 1e-05
    %v3832 = vadd.f32 %v3768, 1e-05
    %v3833 = vadd.f32 %v3769, 1e-05
    %v3834 = vadd.f32 %v3770, 1e-05
    %v3835 = vrsqrt.pop %v3803
    %v3836 = vmul.f32 %v3835, %v3803
    %v3837 = vmul.f32 %v3836, %v3835
    %v3838 = vmul.f32 0.5, %v3837
    %v3839 = vsub.f32 1.5, %v3838
    %v3840 = vmul.f32 %v3835, %v3839
    %vm3841 = vweird.f32 %v3803
    %vm3842 = vweird.f32 %v3835
    %vm3843 = vmor %vm3841, %vm3842
    %v3844 = vsel %vm3843, %v3835, %v3840
    %v3845 = vrsqrt.pop %v3804
    %v3846 = vmul.f32 %v3845, %v3804
    %v3847 = vmul.f32 %v3846, %v3845
    %v3848 = vmul.f32 0.5, %v3847
    %v3849 = vsub.f32 1.5, %v3848
    %v3850 = vmul.f32 %v3845, %v3849
    %vm3851 = vweird.f32 %v3804
    %vm3852 = vweird.f32 %v3845
    %vm3853 = vmor %vm3851, %vm3852
    %v3854 = vsel %vm3853, %v3845, %v3850
    %v3855 = vrsqrt.pop %v3805
    %v3856 = vmul.f32 %v3855, %v3805
    %v3857 = vmul.f32 %v3856, %v3855
    %v3858 = vmul.f32 0.5, %v3857
    %v3859 = vsub.f32 1.5, %v3858
    %v3860 = vmul.f32 %v3855, %v3859
    %vm3861 = vweird.f32 %v3805
    %vm3862 = vweird.f32 %v3855
    %vm3863 = vmor %vm3861, %vm3862
    %v3864 = vsel %vm3863, %v3855, %v3860
    %v3865 = vrsqrt.pop %v3806
    %v3866 = vmul.f32 %v3865, %v3806
    %v3867 = vmul.f32 %v3866, %v3865
    %v3868 = vmul.f32 0.5, %v3867
    %v3869 = vsub.f32 1.5, %v3868
    %v3870 = vmul.f32 %v3865, %v3869
    %vm3871 = vweird.f32 %v3806
    %vm3872 = vweird.f32 %v3865
    %vm3873 = vmor %vm3871, %vm3872
    %v3874 = vsel %vm3873, %v3865, %v3870
    %v3875 = vrsqrt.pop %v3807
    %v3876 = vmul.f32 %v3875, %v3807
    %v3877 = vmul.f32 %v3876, %v3875
    %v3878 = vmul.f32 0.5, %v3877
    %v3879 = vsub.f32 1.5, %v3878
    %v3880 = vmul.f32 %v3875, %v3879
    %vm3881 = vweird.f32 %v3807
    %vm3882 = vweird.f32 %v3875
    %vm3883 = vmor %vm3881, %vm3882
    %v3884 = vsel %vm3883, %v3875, %v3880
    %v3885 = vrsqrt.pop %v3808
    %v3886 = vmul.f32 %v3885, %v3808
    %v3887 = vmul.f32 %v3886, %v3885
    %v3888 = vmul.f32 0.5, %v3887
    %v3889 = vsub.f32 1.5, %v3888
    %v3890 = vmul.f32 %v3885, %v3889
    %vm3891 = vweird.f32 %v3808
    %vm3892 = vweird.f32 %v3885
    %vm3893 = vmor %vm3891, %vm3892
    %v3894 = vsel %vm3893, %v3885, %v3890
    %v3895 = vrsqrt.pop %v3809
    %v3896 = vmul.f32 %v3895, %v3809
    %v3897 = vmul.f32 %v3896, %v3895
    %v3898 = vmul.f32 0.5, %v3897
    %v3899 = vsub.f32 1.5, %v3898
    %v3900 = vmul.f32 %v3895, %v3899
    %vm3901 = vweird.f32 %v3809
    %vm3902 = vweird.f32 %v3895
    %vm3903 = vmor %vm3901, %vm3902
    %v3904 = vsel %vm3903, %v3895, %v3900
    %v3905 = vrsqrt.pop %v3810
    %v3906 = vmul.f32 %v3905, %v3810
    %v3907 = vmul.f32 %v3906, %v3905
    %v3908 = vmul.f32 0.5, %v3907
    %v3909 = vsub.f32 1.5, %v3908
    %v3910 = vmul.f32 %v3905, %v3909
    %vm3911 = vweird.f32 %v3810
    %vm3912 = vweird.f32 %v3905
    %vm3913 = vmor %vm3911, %vm3912
    %v3914 = vsel %vm3913, %v3905, %v3910
    %v3915 = vrsqrt.pop %v3811
    %v3916 = vmul.f32 %v3915, %v3811
    %v3917 = vmul.f32 %v3916, %v3915
    %v3918 = vmul.f32 0.5, %v3917
    %v3919 = vsub.f32 1.5, %v3918
    %v3920 = vmul.f32 %v3915, %v3919
    %vm3921 = vweird.f32 %v3811
    %vm3922 = vweird.f32 %v3915
    %vm3923 = vmor %vm3921, %vm3922
    %v3924 = vsel %vm3923, %v3915, %v3920
    %v3925 = vrsqrt.pop %v3812
    %v3926 = vmul.f32 %v3925, %v3812
    %v3927 = vmul.f32 %v3926, %v3925
    %v3928 = vmul.f32 0.5, %v3927
    %v3929 = vsub.f32 1.5, %v3928
    %v3930 = vmul.f32 %v3925, %v3929
    %vm3931 = vweird.f32 %v3812
    %vm3932 = vweird.f32 %v3925
    %vm3933 = vmor %vm3931, %vm3932
    %v3934 = vsel %vm3933, %v3925, %v3930
    %v3935 = vrsqrt.pop %v3813
    %v3936 = vmul.f32 %v3935, %v3813
    %v3937 = vmul.f32 %v3936, %v3935
    %v3938 = vmul.f32 0.5, %v3937
    %v3939 = vsub.f32 1.5, %v3938
    %v3940 = vmul.f32 %v3935, %v3939
    %vm3941 = vweird.f32 %v3813
    %vm3942 = vweird.f32 %v3935
    %vm3943 = vmor %vm3941, %vm3942
    %v3944 = vsel %vm3943, %v3935, %v3940
    %v3945 = vrsqrt.pop %v3814
    %v3946 = vmul.f32 %v3945, %v3814
    %v3947 = vmul.f32 %v3946, %v3945
    %v3948 = vmul.f32 0.5, %v3947
    %v3949 = vsub.f32 1.5, %v3948
    %v3950 = vmul.f32 %v3945, %v3949
    %vm3951 = vweird.f32 %v3814
    %vm3952 = vweird.f32 %v3945
    %vm3953 = vmor %vm3951, %vm3952
    %v3954 = vsel %vm3953, %v3945, %v3950
    %v3955 = vrsqrt.pop %v3815
    %v3956 = vmul.f32 %v3955, %v3815
    %v3957 = vmul.f32 %v3956, %v3955
    %v3958 = vmul.f32 0.5, %v3957
    %v3959 = vsub.f32 1.5, %v3958
    %v3960 = vmul.f32 %v3955, %v3959
    %vm3961 = vweird.f32 %v3815
    %vm3962 = vweird.f32 %v3955
    %vm3963 = vmor %vm3961, %vm3962
    %v3964 = vsel %vm3963, %v3955, %v3960
    %v3965 = vrsqrt.pop %v3816
    %v3966 = vmul.f32 %v3965, %v3816
    %v3967 = vmul.f32 %v3966, %v3965
    %v3968 = vmul.f32 0.5, %v3967
    %v3969 = vsub.f32 1.5, %v3968
    %v3970 = vmul.f32 %v3965, %v3969
    %vm3971 = vweird.f32 %v3816
    %vm3972 = vweird.f32 %v3965
    %vm3973 = vmor %vm3971, %vm3972
    %v3974 = vsel %vm3973, %v3965, %v3970
    %v3975 = vrsqrt.pop %v3817
    %v3976 = vmul.f32 %v3975, %v3817
    %v3977 = vmul.f32 %v3976, %v3975
    %v3978 = vmul.f32 0.5, %v3977
    %v3979 = vsub.f32 1.5, %v3978
    %v3980 = vmul.f32 %v3975, %v3979
    %vm3981 = vweird.f32 %v3817
    %vm3982 = vweird.f32 %v3975
    %vm3983 = vmor %vm3981, %vm3982
    %v3984 = vsel %vm3983, %v3975, %v3980
    %v3985 = vrsqrt.pop %v3818
    %v3986 = vmul.f32 %v3985, %v3818
    %v3987 = vmul.f32 %v3986, %v3985
    %v3988 = vmul.f32 0.5, %v3987
    %v3989 = vsub.f32 1.5, %v3988
    %v3990 = vmul.f32 %v3985, %v3989
    %vm3991 = vweird.f32 %v3818
    %vm3992 = vweird.f32 %v3985
    %vm3993 = vmor %vm3991, %vm3992
    %v3994 = vsel %vm3993, %v3985, %v3990
    %v3995 = vrsqrt.pop %v3819
    %v3996 = vmul.f32 %v3995, %v3819
    %v3997 = vmul.f32 %v3996, %v3995
    %v3998 = vmul.f32 0.5, %v3997
    %v3999 = vsub.f32 1.5, %v3998
    %v4000 = vmul.f32 %v3995, %v3999
    %vm4001 = vweird.f32 %v3819
    %vm4002 = vweird.f32 %v3995
    %vm4003 = vmor %vm4001, %vm4002
    %v4004 = vsel %vm4003, %v3995, %v4000
    %v4005 = vrsqrt.pop %v3820
    %v4006 = vmul.f32 %v4005, %v3820
    %v4007 = vmul.f32 %v4006, %v4005
    %v4008 = vmul.f32 0.5, %v4007
    %v4009 = vsub.f32 1.5, %v4008
    %v4010 = vmul.f32 %v4005, %v4009
    %vm4011 = vweird.f32 %v3820
    %vm4012 = vweird.f32 %v4005
    %vm4013 = vmor %vm4011, %vm4012
    %v4014 = vsel %vm4013, %v4005, %v4010
    %v4015 = vrsqrt.pop %v3821
    %v4016 = vmul.f32 %v4015, %v3821
    %v4017 = vmul.f32 %v4016, %v4015
    %v4018 = vmul.f32 0.5, %v4017
    %v4019 = vsub.f32 1.5, %v4018
    %v4020 = vmul.f32 %v4015, %v4019
    %vm4021 = vweird.f32 %v3821
    %vm4022 = vweird.f32 %v4015
    %vm4023 = vmor %vm4021, %vm4022
    %v4024 = vsel %vm4023, %v4015, %v4020
    %v4025 = vrsqrt.pop %v3822
    %v4026 = vmul.f32 %v4025, %v3822
    %v4027 = vmul.f32 %v4026, %v4025
    %v4028 = vmul.f32 0.5, %v4027
    %v4029 = vsub.f32 1.5, %v4028
    %v4030 = vmul.f32 %v4025, %v4029
    %vm4031 = vweird.f32 %v3822
    %vm4032 = vweird.f32 %v4025
    %vm4033 = vmor %vm4031, %vm4032
    %v4034 = vsel %vm4033, %v4025, %v4030
    %v4035 = vrsqrt.pop %v3823
    %v4036 = vmul.f32 %v4035, %v3823
    %v4037 = vmul.f32 %v4036, %v4035
    %v4038 = vmul.f32 0.5, %v4037
    %v4039 = vsub.f32 1.5, %v4038
    %v4040 = vmul.f32 %v4035, %v4039
    %vm4041 = vweird.f32 %v3823
    %vm4042 = vweird.f32 %v4035
    %vm4043 = vmor %vm4041, %vm4042
    %v4044 = vsel %vm4043, %v4035, %v4040
    %v4045 = vrsqrt.pop %v3824
    %v4046 = vmul.f32 %v4045, %v3824
    %v4047 = vmul.f32 %v4046, %v4045
    %v4048 = vmul.f32 0.5, %v4047
    %v4049 = vsub.f32 1.5, %v4048
    %v4050 = vmul.f32 %v4045, %v4049
    %vm4051 = vweird.f32 %v3824
    %vm4052 = vweird.f32 %v4045
    %vm4053 = vmor %vm4051, %vm4052
    %v4054 = vsel %vm4053, %v4045, %v4050
    %v4055 = vrsqrt.pop %v3825
    %v4056 = vmul.f32 %v4055, %v3825
    %v4057 = vmul.f32 %v4056, %v4055
    %v4058 = vmul.f32 0.5, %v4057
    %v4059 = vsub.f32 1.5, %v4058
    %v4060 = vmul.f32 %v4055, %v4059
    %vm4061 = vweird.f32 %v3825
    %vm4062 = vweird.f32 %v4055
    %vm4063 = vmor %vm4061, %vm4062
    %v4064 = vsel %vm4063, %v4055, %v4060
    %v4065 = vrsqrt.pop %v3826
    %v4066 = vmul.f32 %v4065, %v3826
    %v4067 = vmul.f32 %v4066, %v4065
    %v4068 = vmul.f32 0.5, %v4067
    %v4069 = vsub.f32 1.5, %v4068
    %v4070 = vmul.f32 %v4065, %v4069
    %vm4071 = vweird.f32 %v3826
    %vm4072 = vweird.f32 %v4065
    %vm4073 = vmor %vm4071, %vm4072
    %v4074 = vsel %vm4073, %v4065, %v4070
    %v4075 = vrsqrt.pop %v3827
    %v4076 = vmul.f32 %v4075, %v3827
    %v4077 = vmul.f32 %v4076, %v4075
    %v4078 = vmul.f32 0.5, %v4077
    %v4079 = vsub.f32 1.5, %v4078
    %v4080 = vmul.f32 %v4075, %v4079
    %vm4081 = vweird.f32 %v3827
    %vm4082 = vweird.f32 %v4075
    %vm4083 = vmor %vm4081, %vm4082
    %v4084 = vsel %vm4083, %v4075, %v4080
    %v4085 = vrsqrt.pop %v3828
    %v4086 = vmul.f32 %v4085, %v3828
    %v4087 = vmul.f32 %v4086, %v4085
    %v4088 = vmul.f32 0.5, %v4087
    %v4089 = vsub.f32 1.5, %v4088
    %v4090 = vmul.f32 %v4085, %v4089
    %vm4091 = vweird.f32 %v3828
    %vm4092 = vweird.f32 %v4085
    %vm4093 = vmor %vm4091, %vm4092
    %v4094 = vsel %vm4093, %v4085, %v4090
    %v4095 = vrsqrt.pop %v3829
    %v4096 = vmul.f32 %v4095, %v3829
    %v4097 = vmul.f32 %v4096, %v4095
    %v4098 = vmul.f32 0.5, %v4097
    %v4099 = vsub.f32 1.5, %v4098
    %v4100 = vmul.f32 %v4095, %v4099
    %vm4101 = vweird.f32 %v3829
    %vm4102 = vweird.f32 %v4095
    %vm4103 = vmor %vm4101, %vm4102
    %v4104 = vsel %vm4103, %v4095, %v4100
    %v4105 = vrsqrt.pop %v3830
    %v4106 = vmul.f32 %v4105, %v3830
    %v4107 = vmul.f32 %v4106, %v4105
    %v4108 = vmul.f32 0.5, %v4107
    %v4109 = vsub.f32 1.5, %v4108
    %v4110 = vmul.f32 %v4105, %v4109
    %vm4111 = vweird.f32 %v3830
    %vm4112 = vweird.f32 %v4105
    %vm4113 = vmor %vm4111, %vm4112
    %v4114 = vsel %vm4113, %v4105, %v4110
    %v4115 = vrsqrt.pop %v3831
    %v4116 = vmul.f32 %v4115, %v3831
    %v4117 = vmul.f32 %v4116, %v4115
    %v4118 = vmul.f32 0.5, %v4117
    %v4119 = vsub.f32 1.5, %v4118
    %v4120 = vmul.f32 %v4115, %v4119
    %vm4121 = vweird.f32 %v3831
    %vm4122 = vweird.f32 %v4115
    %vm4123 = vmor %vm4121, %vm4122
    %v4124 = vsel %vm4123, %v4115, %v4120
    %v4125 = vrsqrt.pop %v3832
    %v4126 = vmul.f32 %v4125, %v3832
    %v4127 = vmul.f32 %v4126, %v4125
    %v4128 = vmul.f32 0.5, %v4127
    %v4129 = vsub.f32 1.5, %v4128
    %v4130 = vmul.f32 %v4125, %v4129
    %vm4131 = vweird.f32 %v3832
    %vm4132 = vweird.f32 %v4125
    %vm4133 = vmor %vm4131, %vm4132
    %v4134 = vsel %vm4133, %v4125, %v4130
    %v4135 = vrsqrt.pop %v3833
    %v4136 = vmul.f32 %v4135, %v3833
    %v4137 = vmul.f32 %v4136, %v4135
    %v4138 = vmul.f32 0.5, %v4137
    %v4139 = vsub.f32 1.5, %v4138
    %v4140 = vmul.f32 %v4135, %v4139
    %vm4141 = vweird.f32 %v3833
    %vm4142 = vweird.f32 %v4135
    %vm4143 = vmor %vm4141, %vm4142
    %v4144 = vsel %vm4143, %v4135, %v4140
    %v4145 = vrsqrt.pop %v3834
    %v4146 = vmul.f32 %v4145, %v3834
    %v4147 = vmul.f32 %v4146, %v4145
    %v4148 = vmul.f32 0.5, %v4147
    %v4149 = vsub.f32 1.5, %v4148
    %v4150 = vmul.f32 %v4145, %v4149
    %vm4151 = vweird.f32 %v3834
    %vm4152 = vweird.f32 %v4145
    %vm4153 = vmor %vm4151, %vm4152
    %v4154 = vsel %vm4153, %v4145, %v4150
    %v4155 = vmul.f32 %v3771, %v3844
    %v4156 = vmul.f32 %v3772, %v3854
    %v4157 = vmul.f32 %v3773, %v3864
    %v4158 = vmul.f32 %v3774, %v3874
    %v4159 = vmul.f32 %v3775, %v3884
    %v4160 = vmul.f32 %v3776, %v3894
    %v4161 = vmul.f32 %v3777, %v3904
    %v4162 = vmul.f32 %v3778, %v3914
    %v4163 = vmul.f32 %v3779, %v3924
    %v4164 = vmul.f32 %v3780, %v3934
    %v4165 = vmul.f32 %v3781, %v3944
    %v4166 = vmul.f32 %v3782, %v3954
    %v4167 = vmul.f32 %v3783, %v3964
    %v4168 = vmul.f32 %v3784, %v3974
    %v4169 = vmul.f32 %v3785, %v3984
    %v4170 = vmul.f32 %v3786, %v3994
    %v4171 = vmul.f32 %v3787, %v4004
    %v4172 = vmul.f32 %v3788, %v4014
    %v4173 = vmul.f32 %v3789, %v4024
    %v4174 = vmul.f32 %v3790, %v4034
    %v4175 = vmul.f32 %v3791, %v4044
    %v4176 = vmul.f32 %v3792, %v4054
    %v4177 = vmul.f32 %v3793, %v4064
    %v4178 = vmul.f32 %v3794, %v4074
    %v4179 = vmul.f32 %v3795, %v4084
    %v4180 = vmul.f32 %v3796, %v4094
    %v4181 = vmul.f32 %v3797, %v4104
    %v4182 = vmul.f32 %v3798, %v4114
    %v4183 = vmul.f32 %v3799, %v4124
    %v4184 = vmul.f32 %v3800, %v4134
    %v4185 = vmul.f32 %v3801, %v4144
    %v4186 = vmul.f32 %v3802, %v4154
    %v4187 = vmul.f32 %v4155, %v3474
    %v4188 = vmul.f32 %v4156, %v3474
    %v4189 = vmul.f32 %v4157, %v3474
    %v4190 = vmul.f32 %v4158, %v3474
    %v4191 = vmul.f32 %v4159, %v3474
    %v4192 = vmul.f32 %v4160, %v3474
    %v4193 = vmul.f32 %v4161, %v3474
    %v4194 = vmul.f32 %v4162, %v3474
    %v4195 = vmul.f32 %v4163, %v3474
    %v4196 = vmul.f32 %v4164, %v3474
    %v4197 = vmul.f32 %v4165, %v3474
    %v4198 = vmul.f32 %v4166, %v3474
    %v4199 = vmul.f32 %v4167, %v3474
    %v4200 = vmul.f32 %v4168, %v3474
    %v4201 = vmul.f32 %v4169, %v3474
    %v4202 = vmul.f32 %v4170, %v3474
    %v4203 = vmul.f32 %v4171, %v3474
    %v4204 = vmul.f32 %v4172, %v3474
    %v4205 = vmul.f32 %v4173, %v3474
    %v4206 = vmul.f32 %v4174, %v3474
    %v4207 = vmul.f32 %v4175, %v3474
    %v4208 = vmul.f32 %v4176, %v3474
    %v4209 = vmul.f32 %v4177, %v3474
    %v4210 = vmul.f32 %v4178, %v3474
    %v4211 = vmul.f32 %v4179, %v3474
    %v4212 = vmul.f32 %v4180, %v3474
    %v4213 = vmul.f32 %v4181, %v3474
    %v4214 = vmul.f32 %v4182, %v3474
    %v4215 = vmul.f32 %v4183, %v3474
    %v4216 = vmul.f32 %v4184, %v3474
    %v4217 = vmul.f32 %v4185, %v3474
    %v4218 = vmul.f32 %v4186, %v3474
    %v4219 = vadd.f32 %v4187, %v3475
    %v4220 = vadd.f32 %v4188, %v3475
    %v4221 = vadd.f32 %v4189, %v3475
    %v4222 = vadd.f32 %v4190, %v3475
    %v4223 = vadd.f32 %v4191, %v3475
    %v4224 = vadd.f32 %v4192, %v3475
    %v4225 = vadd.f32 %v4193, %v3475
    %v4226 = vadd.f32 %v4194, %v3475
    %v4227 = vadd.f32 %v4195, %v3475
    %v4228 = vadd.f32 %v4196, %v3475
    %v4229 = vadd.f32 %v4197, %v3475
    %v4230 = vadd.f32 %v4198, %v3475
    %v4231 = vadd.f32 %v4199, %v3475
    %v4232 = vadd.f32 %v4200, %v3475
    %v4233 = vadd.f32 %v4201, %v3475
    %v4234 = vadd.f32 %v4202, %v3475
    %v4235 = vadd.f32 %v4203, %v3475
    %v4236 = vadd.f32 %v4204, %v3475
    %v4237 = vadd.f32 %v4205, %v3475
    %v4238 = vadd.f32 %v4206, %v3475
    %v4239 = vadd.f32 %v4207, %v3475
    %v4240 = vadd.f32 %v4208, %v3475
    %v4241 = vadd.f32 %v4209, %v3475
    %v4242 = vadd.f32 %v4210, %v3475
    %v4243 = vadd.f32 %v4211, %v3475
    %v4244 = vadd.f32 %v4212, %v3475
    %v4245 = vadd.f32 %v4213, %v3475
    %v4246 = vadd.f32 %v4214, %v3475
    %v4247 = vadd.f32 %v4215, %v3475
    %v4248 = vadd.f32 %v4216, %v3475
    %v4249 = vadd.f32 %v4217, %v3475
    %v4250 = vadd.f32 %v4218, %v3475
    %v4251 = vmax.f32 %v4219, 0.0
    %v4252 = vmax.f32 %v4220, 0.0
    %v4253 = vmax.f32 %v4221, 0.0
    %v4254 = vmax.f32 %v4222, 0.0
    %v4255 = vmax.f32 %v4223, 0.0
    %v4256 = vmax.f32 %v4224, 0.0
    %v4257 = vmax.f32 %v4225, 0.0
    %v4258 = vmax.f32 %v4226, 0.0
    %v4259 = vmax.f32 %v4227, 0.0
    %v4260 = vmax.f32 %v4228, 0.0
    %v4261 = vmax.f32 %v4229, 0.0
    %v4262 = vmax.f32 %v4230, 0.0
    %v4263 = vmax.f32 %v4231, 0.0
    %v4264 = vmax.f32 %v4232, 0.0
    %v4265 = vmax.f32 %v4233, 0.0
    %v4266 = vmax.f32 %v4234, 0.0
    %v4267 = vmax.f32 %v4235, 0.0
    %v4268 = vmax.f32 %v4236, 0.0
    %v4269 = vmax.f32 %v4237, 0.0
    %v4270 = vmax.f32 %v4238, 0.0
    %v4271 = vmax.f32 %v4239, 0.0
    %v4272 = vmax.f32 %v4240, 0.0
    %v4273 = vmax.f32 %v4241, 0.0
    %v4274 = vmax.f32 %v4242, 0.0
    %v4275 = vmax.f32 %v4243, 0.0
    %v4276 = vmax.f32 %v4244, 0.0
    %v4277 = vmax.f32 %v4245, 0.0
    %v4278 = vmax.f32 %v4246, 0.0
    %v4279 = vmax.f32 %v4247, 0.0
    %v4280 = vmax.f32 %v4248, 0.0
    %v4281 = vmax.f32 %v4249, 0.0
    %v4282 = vmax.f32 %v4250, 0.0
    %v4283 = vld [vmem:[#allocation5] sm:$0xff]
    %v4284 = vld [vmem:[#allocation5 + $0x8] sm:$0xff]
    %v4285 = vld [vmem:[#allocation5 + $0x10] sm:$0xff]
    %v4286 = vld [vmem:[#allocation5 + $0x18] sm:$0xff]
    %v4287 = vld [vmem:[#allocation5 + $0x20] sm:$0xff]
    %v4288 = vld [vmem:[#allocation5 + $0x28] sm:$0xff]
    %v4289 = vld [vmem:[#allocation5 + $0x30] sm:$0xff]
    %v4290 = vld [vmem:[#allocation5 + $0x38] sm:$0xff]
    %v4291 = vld [vmem:[#allocation5 + $0x40] sm:$0xff]
    %v4292 = vld [vmem:[#allocation5 + $0x48] sm:$0xff]
    %v4293 = vld [vmem:[#allocation5 + $0x50] sm:$0xff]
    %v4294 = vld [vmem:[#allocation5 + $0x58] sm:$0xff]
    %v4295 = vld [vmem:[#allocation5 + $0x60] sm:$0xff]
    %v4296 = vld [vmem:[#allocation5 + $0x68] sm:$0xff]
    %v4297 = vld [vmem:[#allocation5 + $0x70] sm:$0xff]
    %v4298 = vld [vmem:[#allocation5 + $0x78] sm:$0xff]
    %v4299 = vld [vmem:[#allocation7 + $0x11] ss:$0 sm:$0xff]
    %4300 = vmatpush.msra.mxu0 %v4298
    %4301 = vmatpush.msra.mxu0 %v4297
    %4302 = vmatpush.msra.mxu0 %v4296
    %4303 = vmatpush.msra.mxu0 %v4295
    %4304 = vmatpush.msra.mxu0 %v4294
    %4305 = vmatpush.msra.mxu0 %v4293
    %4306 = vmatpush.msra.mxu0 %v4292
    %4307 = vmatpush.msra.mxu0 %v4291
    %4308 = vmatpush.msra.mxu0 %v4290
    %4309 = vmatpush.msra.mxu0 %v4289
    %4310 = vmatpush.msra.mxu0 %v4288
    %4311 = vmatpush.msra.mxu0 %v4287
    %4312 = vmatpush.msra.mxu0 %v4286
    %4313 = vmatpush.msra.mxu0 %v4285
    %4314 = vmatpush.msra.mxu0 %v4284
    %4315 = vmatpush.msra.mxu0 %v4283
    %4316 = vmatmul.f32.gmra.mxu0 %v4251
    %v4317 = vpop.f32.mrf.mxu0
    %v4318 = vadd.f32 %v4299, %v4317
    %4319 = vmatmul.f32.gmra.mxu0 %v4252
    %v4320 = vpop.f32.mrf.mxu0
    %v4321 = vadd.f32 %v4299, %v4320
    %4322 = vmatmul.f32.gmra.mxu0 %v4253
    %v4323 = vpop.f32.mrf.mxu0
    %v4324 = vadd.f32 %v4299, %v4323
    %4325 = vmatmul.f32.gmra.mxu0 %v4254
    %v4326 = vpop.f32.mrf.mxu0
    %v4327 = vadd.f32 %v4299, %v4326
    %4328 = vmatmul.f32.gmra.mxu0 %v4255
    %v4329 = vpop.f32.mrf.mxu0
    %v4330 = vadd.f32 %v4299, %v4329
    %4331 = vmatmul.f32.gmra.mxu0 %v4256
    %v4332 = vpop.f32.mrf.mxu0
    %v4333 = vadd.f32 %v4299, %v4332
    %4334 = vmatmul.f32.gmra.mxu0 %v4257
    %v4335 = vpop.f32.mrf.mxu0
    %v4336 = vadd.f32 %v4299, %v4335
    %4337 = vmatmul.f32.gmra.mxu0 %v4258
    %v4338 = vpop.f32.mrf.mxu0
    %v4339 = vadd.f32 %v4299, %v4338
    %4340 = vmatmul.f32.gmra.mxu0 %v4259
    %v4341 = vpop.f32.mrf.mxu0
    %v4342 = vadd.f32 %v4299, %v4341
    %4343 = vmatmul.f32.gmra.mxu0 %v4260
    %v4344 = vpop.f32.mrf.mxu0
    %v4345 = vadd.f32 %v4299, %v4344
    %4346 = vmatmul.f32.gmra.mxu0 %v4261
    %v4347 = vpop.f32.mrf.mxu0
    %v4348 = vadd.f32 %v4299, %v4347
    %4349 = vmatmul.f32.gmra.mxu0 %v4262
    %v4350 = vpop.f32.mrf.mxu0
    %v4351 = vadd.f32 %v4299, %v4350
    %4352 = vmatmul.f32.gmra.mxu0 %v4263
    %v4353 = vpop.f32.mrf.mxu0
    %v4354 = vadd.f32 %v4299, %v4353
    %4355 = vmatmul.f32.gmra.mxu0 %v4264
    %v4356 = vpop.f32.mrf.mxu0
    %v4357 = vadd.f32 %v4299, %v4356
    %4358 = vmatmul.f32.gmra.mxu0 %v4265
    %v4359 = vpop.f32.mrf.mxu0
    %v4360 = vadd.f32 %v4299, %v4359
    %4361 = vmatmul.f32.gmra.mxu0 %v4266
    %v4362 = vpop.f32.mrf.mxu0
    %v4363 = vadd.f32 %v4299, %v4362
    %4364 = vmatmul.f32.gmra.mxu0 %v4267
    %v4365 = vpop.f32.mrf.mxu0
    %v4366 = vadd.f32 %v4299, %v4365
    %4367 = vmatmul.f32.gmra.mxu0 %v4268
    %v4368 = vpop.f32.mrf.mxu0
    %v4369 = vadd.f32 %v4299, %v4368
    %4370 = vmatmul.f32.gmra.mxu0 %v4269
    %v4371 = vpop.f32.mrf.mxu0
    %v4372 = vadd.f32 %v4299, %v4371
    %4373 = vmatmul.f32.gmra.mxu0 %v4270
    %v4374 = vpop.f32.mrf.mxu0
    %v4375 = vadd.f32 %v4299, %v4374
    %4376 = vmatmul.f32.gmra.mxu0 %v4271
    %v4377 = vpop.f32.mrf.mxu0
    %v4378 = vadd.f32 %v4299, %v4377
    %4379 = vmatmul.f32.gmra.mxu0 %v4272
    %v4380 = vpop.f32.mrf.mxu0
    %v4381 = vadd.f32 %v4299, %v4380
    %4382 = vmatmul.f32.gmra.mxu0 %v4273
    %v4383 = vpop.f32.mrf.mxu0
    %v4384 = vadd.f32 %v4299, %v4383
    %4385 = vmatmul.f32.gmra.mxu0 %v4274
    %v4386 = vpop.f32.mrf.mxu0
    %v4387 = vadd.f32 %v4299, %v4386
    %4388 = vmatmul.f32.gmra.mxu0 %v4275
    %v4389 = vpop.f32.mrf.mxu0
    %v4390 = vadd.f32 %v4299, %v4389
    %4391 = vmatmul.f32.gmra.mxu0 %v4276
    %v4392 = vpop.f32.mrf.mxu0
    %v4393 = vadd.f32 %v4299, %v4392
    %4394 = vmatmul.f32.gmra.mxu0 %v4277
    %v4395 = vpop.f32.mrf.mxu0
    %v4396 = vadd.f32 %v4299, %v4395
    %4397 = vmatmul.f32.gmra.mxu0 %v4278
    %v4398 = vpop.f32.mrf.mxu0
    %v4399 = vadd.f32 %v4299, %v4398
    %4400 = vmatmul.f32.gmra.mxu0 %v4279
    %v4401 = vpop.f32.mrf.mxu0
    %v4402 = vadd.f32 %v4299, %v4401
    %4403 = vmatmul.f32.gmra.mxu0 %v4280
    %v4404 = vpop.f32.mrf.mxu0
    %v4405 = vadd.f32 %v4299, %v4404
    %4406 = vmatmul.f32.gmra.mxu0 %v4281
    %v4407 = vpop.f32.mrf.mxu0
    %v4408 = vadd.f32 %v4299, %v4407
    %4409 = vmatmul.f32.gmra.mxu0 %v4282
    %v4410 = vpop.f32.mrf.mxu0
    %v4411 = vadd.f32 %v4299, %v4410
    %4412 = vdwg.mxu0
    %4413 = vst [vmem:[#allocation8] sm:$0xff] %v4318
    %4414 = vst [vmem:[#allocation8 + $0x8] sm:$0xff] %v4321
    %4415 = vst [vmem:[#allocation8 + $0x10] sm:$0xff] %v4324
    %4416 = vst [vmem:[#allocation8 + $0x18] sm:$0xff] %v4327
    %4417 = vst [vmem:[#allocation8 + $0x20] sm:$0xff] %v4330
    %4418 = vst [vmem:[#allocation8 + $0x28] sm:$0xff] %v4333
    %4419 = vst [vmem:[#allocation8 + $0x30] sm:$0xff] %v4336
    %4420 = vst [vmem:[#allocation8 + $0x38] sm:$0xff] %v4339
    %4421 = vst [vmem:[#allocation8 + $0x40] sm:$0xff] %v4342
    %4422 = vst [vmem:[#allocation8 + $0x48] sm:$0xff] %v4345
    %4423 = vst [vmem:[#allocation8 + $0x50] sm:$0xff] %v4348
    %4424 = vst [vmem:[#allocation8 + $0x58] sm:$0xff] %v4351
    %4425 = vst [vmem:[#allocation8 + $0x60] sm:$0xff] %v4354
    %4426 = vst [vmem:[#allocation8 + $0x68] sm:$0xff] %v4357
    %4427 = vst [vmem:[#allocation8 + $0x70] sm:$0xff] %v4360
    %4428 = vst [vmem:[#allocation8 + $0x78] sm:$0xff] %v4363
    %4429 = vst [vmem:[#allocation8 + $0x80] sm:$0xff] %v4366
    %4430 = vst [vmem:[#allocation8 + $0x88] sm:$0xff] %v4369
    %4431 = vst [vmem:[#allocation8 + $0x90] sm:$0xff] %v4372
    %4432 = vst [vmem:[#allocation8 + $0x98] sm:$0xff] %v4375
    %4433 = vst [vmem:[#allocation8 + $0xa0] sm:$0xff] %v4378
    %4434 = vst [vmem:[#allocation8 + $0xa8] sm:$0xff] %v4381
    %4435 = vst [vmem:[#allocation8 + $0xb0] sm:$0xff] %v4384
    %4436 = vst [vmem:[#allocation8 + $0xb8] sm:$0xff] %v4387
    %4437 = vst [vmem:[#allocation8 + $0xc0] sm:$0xff] %v4390
    %4438 = vst [vmem:[#allocation8 + $0xc8] sm:$0xff] %v4393
    %4439 = vst [vmem:[#allocation8 + $0xd0] sm:$0xff] %v4396
    %4440 = vst [vmem:[#allocation8 + $0xd8] sm:$0xff] %v4399
    %4441 = vst [vmem:[#allocation8 + $0xe0] sm:$0xff] %v4402
    %4442 = vst [vmem:[#allocation8 + $0xe8] sm:$0xff] %v4405
    %4443 = vst [vmem:[#allocation8 + $0xf0] sm:$0xff] %v4408
    %4444 = vst [vmem:[#allocation8 + $0xf8] sm:$0xff] %v4411
    // Predicated region
    $region38: #{tpu_custom_call.1} parent=1 // pred_check
      _
    $region39: #{tpu_custom_call.1} parent=1 // pred_check_branch
      %4446 = sbr.rel (0) target = $region41
    $region40: #{tpu_custom_call.1} parent=1 // pred_region
      %4448 = vsyncadd [#allocation4], 0
      %s4449 = sshll.u32 [#allocation8], 4
      %s4450 = int_to_ptr.vmem [resolvable:$true] %s4449
      %s4451 = sshll.u32 %s6, 4
      %s4452 = int_to_ptr.hbm [resolvable:$true] %s4451
      %4457 = dma.vmem_to_hbm [thread:$0]  %s4450, 4096, %s4452, [#allocation4], 128, 128, 8
    $region41: #{tpu_custom_call.1} parent=1 // pred_fallthru
      _
    // Predicated region
    $region42: #{tpu_custom_call.1} parent=1 // pred_check
      _
    $region43: #{tpu_custom_call.1} parent=1 // pred_check_branch
      %4459 = sbr.rel (0) target = $region45
    $region44: #{tpu_custom_call.1} parent=1 // pred_region
      %4461 = dma.done [#allocation4], 4096
    $region45: #{tpu_custom_call.1} parent=1 // pred_fallthru
      _
    %4462 = vsyncpa [#allocation3], 1
    %4463 = vsyncpa [#allocation6], 1
    %4464 = vsyncpa [#allocation4], 1

</llo_original>
